<compile_context>
chip_gen: v6e
topology: v6e:2x2x1
jax: 0.10.0
libtpu: 0.0.40
codegen_flags: <defaults>
</compile_context>

<pallas_src>
import functools

import numpy as np

import jax
import jax.numpy as jnp
from jax.experimental import pallas as pl
from jax.experimental.pallas import tpu as pltpu

LANE = 128      # hidden dim padded to a multiple of this (lane-dense intermediates)
ROW_ALIGN = 16  # row tiles rounded to this (bf16 packs 16 sublanes per vreg)


def _round_up(n, m):
    return (n + m - 1) // m * m


def _choose_row_tile(N, tn):
    """Row tile: multiple of 16, no larger than the (rounded) batch, and kept
    small enough that the 'parallel' grid has >= 2 steps when possible so both
    v7x TensorCores get work (a no-op on single-core v5e/v6e)."""
    tn = max(ROW_ALIGN, _round_up(tn, ROW_ALIGN))
    tn = min(tn, _round_up(N, ROW_ALIGN))
    while tn > ROW_ALIGN and pl.cdiv(N, tn) < 2:
        tn = max(ROW_ALIGN, _round_up(tn // 2, ROW_ALIGN))
    return tn


# --------------------------------- kernel ---------------------------------

def lpmlp_kernel(x_ref, lbl_ref,
                 w0, t0, w1, t1, w2, wres,
                 lw0, lt0, lw1, lt1, lw2,
                 b_out,
                 o_ref):
    """One (tn, *) row tile of the fused eval-mode LPMLP forward.

    BN + bias are pre-folded into (w*, t*); b_out = b2 + label_b2.
    Activations arrive f32 and are cast to the MXU operand dtype here
    (cheap VPU work hidden under the MXU); accumulation is f32.
    """
    f32 = jnp.float32
    cdt = w0.dtype                       # MXU operand dtype (bf16 by default)

    x = x_ref[...].astype(cdt)           # (tn, in_feats)
    l = lbl_ref[...].astype(cdt)         # (tn, out_feats)

    # ---- main branch: (Linear+BN folded -> ReLU -> Dropout=id) x2, Linear ----
    h = jnp.dot(x, w0[...], preferred_element_type=f32) + t0[...]
    h = jnp.maximum(h, 0.0)
    h = jnp.dot(h.astype(cdt), w1[...], preferred_element_type=f32) + t1[...]
    h = jnp.maximum(h, 0.0)
    out = jnp.dot(h.astype(cdt), w2[...], preferred_element_type=f32)

    # ---- residual projection: x @ Wres (no bias) ----
    out = out + jnp.dot(x, wres[...], preferred_element_type=f32)

    # ---- label-MLP branch on label_emb ----
    lh = jnp.dot(l, lw0[...], preferred_element_type=f32) + lt0[...]
    lh = jnp.maximum(lh, 0.0)
    lh = jnp.dot(lh.astype(cdt), lw1[...], preferred_element_type=f32) + lt1[...]
    lh = jnp.maximum(lh, 0.0)
    out = out + jnp.dot(lh.astype(cdt), lw2[...], preferred_element_type=f32)

    o_ref[...] = (out + b_out[...]).astype(o_ref.dtype)   # narrow (tn, out_feats) store


PARAM_ORDER = ("w0", "t0", "w1", "t1", "w2", "wres",
               "lw0", "lt0", "lw1", "lt1", "lw2", "b_out")


@functools.partial(jax.jit, static_argnames=("tn", "out_dtype",
                                             "single_buffer_weights",
                                             "vmem_limit_bytes"))
def lpmlp_forward(x, label_emb, kparams, *, tn=512, out_dtype=jnp.bfloat16,
                  single_buffer_weights=True, vmem_limit_bytes=None):
    """Run the fused kernel.  `kparams` comes from fold_and_pad_params."""
    N, in_feats = x.shape
    lbl_feats = label_emb.shape[1]
    out_feats = kparams["w2"].shape[1]   # true (unpadded) out_feats
    hid_p = kparams["w1"].shape[1]       # lane-padded hidden

    tn_eff = _choose_row_tile(N, tn)
    grid = (pl.cdiv(N, tn_eff),)         # partial last block handled by Pallas

    weight_args = [kparams[k] for k in PARAM_ORDER]

    def resident_spec(a):
        # Whole array in VMEM; grid-invariant index_map -> DMA'd once.
        zero = (0,) * a.ndim
        if single_buffer_weights:
            # Double-buffering a grid-invariant block is pure VMEM waste.
            return pl.BlockSpec(a.shape, lambda i, _z=zero: _z,
                                pipeline_mode=pl.Buffered(1))
        return pl.BlockSpec(a.shape, lambda i, _z=zero: _z)

    in_specs = ([pl.BlockSpec((tn_eff, in_feats), lambda i: (i, 0)),
                 pl.BlockSpec((tn_eff, lbl_feats), lambda i: (i, 0))]
                + [resident_spec(a) for a in weight_args])

    # Auto-raise the scoped VMEM limit if the estimated footprint exceeds
    # v5e's 16 MiB default (v6e/v7x default is 32 MiB).
    if vmem_limit_bytes is None:
        wbuf = 1 if single_buffer_weights else 2
        est = wbuf * sum(a.size * a.dtype.itemsize for a in weight_args)
        est += 2 * tn_eff * (in_feats + lbl_feats) * 4                    # dbl-buffered f32 acts
        est += 2 * tn_eff * out_feats * np.dtype(out_dtype).itemsize      # dbl-buffered out
        est += 4 * tn_eff * hid_p * 4                                     # f32 intermediates (rough)
        est = int(est * 1.5)
        if est > 12 * 1024 * 1024:
            vmem_limit_bytes = min(est, 96 * 1024 * 1024)

    out = pl.pallas_call(
        lpmlp_kernel,
        out_shape=jax.ShapeDtypeStruct((N, out_feats), out_dtype),
        grid_spec=pltpu.PrefetchScalarGridSpec(
            num_scalar_prefetch=0,
            grid=grid,
            in_specs=in_specs,
            out_specs=pl.BlockSpec((tn_eff, out_feats), lambda i: (i, 0)),
        ),
        compiler_params=pltpu.CompilerParams(
            dimension_semantics=("parallel",),          # megacore-shardable
            vmem_limit_bytes=vmem_limit_bytes),
    )(x, label_emb, *weight_args)

    return out


# ------------------------- parameter construction -------------------------

def xavier_uniform(key, fan_in, fan_out, gain):
    bound = gain * (6.0 / (fan_in + fan_out)) ** 0.5
    # stored directly in (in, out) layout (distribution is symmetric)
    return jax.random.uniform(key, (fan_in, fan_out), jnp.float32, -bound, bound)


def xavier_normal(key, fan_in, fan_out, gain):
    std = gain * (2.0 / (fan_in + fan_out)) ** 0.5
    return std * jax.random.normal(key, (fan_in, fan_out), jnp.float32)


def bn_init(hidden):
    # BatchNorm1d.reset_parameters(): gamma=1, beta=0, running_mean=0, var=1
    return dict(gamma=jnp.ones((hidden,), jnp.float32),
                beta=jnp.zeros((hidden,), jnp.float32),
                mean=jnp.zeros((hidden,), jnp.float32),
                var=jnp.ones((hidden,), jnp.float32))


def make_params(key, in_feats, hidden, out_feats):
    """Logical (PyTorch-equivalent) parameters of LPMLP(n_layers=3,
    residual=True, use_labels=True)."""
    gain = 2.0 ** 0.5                    # nn.init.calculate_gain('relu')
    ks = jax.random.split(key, 7)
    p = {}
    # main MLP
    p["w0"] = xavier_uniform(ks[0], in_feats, hidden, gain)
    p["b0"] = jnp.zeros((hidden,), jnp.float32)
    p["bn0"] = bn_init(hidden)
    p["w1"] = xavier_uniform(ks[1], hidden, hidden, gain)
    p["b1"] = jnp.zeros((hidden,), jnp.float32)
    p["bn1"] = bn_init(hidden)
    p["w2"] = xavier_uniform(ks[2], hidden, out_feats, gain)
    p["b2"] = jnp.zeros((out_feats,), jnp.float32)
    # residual projection
    p["wres"] = xavier_normal(ks[3], in_feats, out_feats, gain)
    # label MLP: MLP(out_feats, hidden, out_feats, 3)
    p["lw0"] = xavier_uniform(ks[4], out_feats, hidden, gain)
    p["lb0"] = jnp.zeros((hidden,), jnp.float32)
    p["lbn0"] = bn_init(hidden)
    p["lw1"] = xavier_uniform(ks[5], hidden, hidden, gain)
    p["lb1"] = jnp.zeros((hidden,), jnp.float32)
    p["lbn1"] = bn_init(hidden)
    p["lw2"] = xavier_uniform(ks[6], hidden, out_feats, gain)
    p["lb2"] = jnp.zeros((out_feats,), jnp.float32)
    return p


def fold_and_pad_params(p, *, compute_dtype=jnp.bfloat16, eps=1e-5):
    """Host-side preprocessing: fold eval-mode BN + Linear bias into
    (weight, shift) pairs, zero-pad the HIDDEN dim to a 128-lane multiple
    (lane-dense intermediates), keep the true out_feats column count so the
    output store is narrow, and cast MXU operands to bf16."""
    in_feats, hidden = p["w0"].shape
    out_feats = p["w2"].shape[1]
    hid_p = _round_up(hidden, LANE)

    def fold(w, b, bn):
        scale = bn["gamma"] * jax.lax.rsqrt(bn["var"] + eps)        # (h,)
        return w * scale[None, :], (b - bn["mean"]) * scale + bn["beta"]

    def pad2(a, rows, cols):
        return jnp.pad(a, ((0, rows - a.shape[0]), (0, cols - a.shape[1])))

    def pad_row(v, cols):                 # (d,) -> (1, cols), zero-padded
        return jnp.pad(v, (0, cols - v.shape[0]))[None, :]

    w0, t0 = fold(p["w0"], p["b0"], p["bn0"])
    w1, t1 = fold(p["w1"], p["b1"], p["bn1"])
    lw0, lt0 = fold(p["lw0"], p["lb0"], p["lbn0"])
    lw1, lt1 = fold(p["lw1"], p["lb1"], p["lbn1"])

    cdt = compute_dtype
    return {
        "w0":   pad2(w0, in_feats, hid_p).astype(cdt),
        "t0":   pad_row(t0, hid_p),                       # f32
        "w1":   pad2(w1, hid_p, hid_p).astype(cdt),
        "t1":   pad_row(t1, hid_p),                       # f32
        "w2":   pad2(p["w2"], hid_p, out_feats).astype(cdt),
        "wres": p["wres"].astype(cdt),                    # (in_feats, out_feats)
        "lw0":  pad2(lw0, out_feats, hid_p).astype(cdt),
        "lt0":  pad_row(lt0, hid_p),                      # f32
        "lw1":  pad2(lw1, hid_p, hid_p).astype(cdt),
        "lt1":  pad_row(lt1, hid_p),                      # f32
        "lw2":  pad2(p["lw2"], hid_p, out_feats).astype(cdt),
        "b_out": pad_row(p["b2"] + p["lb2"], out_feats),  # f32
    }


# ------------------------------ references --------------------------------

def lpmlp_reference_f32(x, label_emb, p, eps=1e-5):
    """Pure-JAX f32 reference of the eval-mode PyTorch forward."""
    def bn(z, s):
        scale = s["gamma"] * jax.lax.rsqrt(s["var"] + eps)
        return (z - s["mean"]) * scale + s["beta"]

    def mlp3(z, w0, b0, bn0, w1, b1, bn1, w2, b2):
        h = jnp.maximum(bn(z @ w0 + b0, bn0), 0.0)
        h = jnp.maximum(bn(h @ w1 + b1, bn1), 0.0)
        return h @ w2 + b2

    out = mlp3(x, p["w0"], p["b0"], p["bn0"],
               p["w1"], p["b1"], p["bn1"], p["w2"], p["b2"])
    out = out + x @ p["wres"]
    out = out + mlp3(label_emb, p["lw0"], p["lb0"], p["lbn0"],
                     p["lw1"], p["lb1"], p["lbn1"], p["lw2"], p["lb2"])
    return out


def lpmlp_reference_folded(x, label_emb, kp):
    """Pure-JAX reference doing exactly the kernel's folded bf16/f32 math
    (before the final output-dtype cast)."""
    f32 = jnp.float32
    cdt = kp["w0"].dtype
    xc = x.astype(cdt)
    lc = label_emb.astype(cdt)
    h = jnp.maximum(jnp.dot(xc, kp["w0"], preferred_element_type=f32) + kp["t0"], 0.0)
    h = jnp.maximum(jnp.dot(h.astype(cdt), kp["w1"], preferred_element_type=f32) + kp["t1"], 0.0)
    out = jnp.dot(h.astype(cdt), kp["w2"], preferred_element_type=f32)
    out = out + jnp.dot(xc, kp["wres"], preferred_element_type=f32)
    lh = jnp.maximum(jnp.dot(lc, kp["lw0"], preferred_element_type=f32) + kp["lt0"], 0.0)
    lh = jnp.maximum(jnp.dot(lh.astype(cdt), kp["lw1"], preferred_element_type=f32) + kp["lt1"], 0.0)
    out = out + jnp.dot(lh.astype(cdt), kp["lw2"], preferred_element_type=f32)
    return out + kp["b_out"]


if __name__ == "__main__":
    # Ragged N (300) exercises the partial-last-block path; hidden=32 exercises
    # the 128-lane hidden padding; out_feats=8 exercises the narrow output store.
    N, IN_FEATS, HIDDEN, OUT_FEATS = 300, 16, 32, 8

    key = jax.random.PRNGKey(0)
    kx, kl, kp = jax.random.split(key, 3)
    x = jax.random.normal(kx, (N, IN_FEATS), jnp.float32)
    label_emb = jax.random.normal(kl, (N, OUT_FEATS), jnp.float32)

    params = make_params(kp, IN_FEATS, HIDDEN, OUT_FEATS)
    kparams = fold_and_pad_params(params, compute_dtype=jnp.bfloat16)

    try:
        out = lpmlp_forward(x, label_emb, kparams, tn=512,
                            single_buffer_weights=True)
    except Exception:
        # pl.Buffered(1) not supported on this jax/libtpu -> default buffering.
        out = lpmlp_forward(x, label_emb, kparams, tn=512,
                            single_buffer_weights=False)
    out = jax.block_until_ready(out)
    assert out.shape == (N, OUT_FEATS)
    out_f32 = out.astype(jnp.float32)

    # Check vs. a pure-JAX reference doing the identical folded bf16 math
    # (only difference: one bf16 rounding of the final store).
    ref_folded = lpmlp_reference_folded(x, label_emb, kparams)
    assert jnp.allclose(out_f32, ref_folded, atol=5e-2, rtol=2e-2), \
        "mismatch vs folded/bf16 JAX reference"

    # Semantic check vs. the f32 eval-mode PyTorch forward; differences are
    # bf16 rounding of MXU operands and of the stored output.
    ref_f32 = lpmlp_reference_f32(x, label_emb, params)
    rel = jnp.linalg.norm(out_f32 - ref_f32) / jnp.linalg.norm(ref_f32)
    assert rel < 2e-2, f"relative error vs f32 reference too large: {rel}"

    print("KERNEL_OK")
</pallas_src>

<mosaic_0001>
module attributes {stable_mosaic.version = 11 : i64} {
  func.func @lpmlp_kernel(%arg0: i32, %arg1: memref<160x16xf32, #tpu.memory_space<vmem>>, %arg2: memref<160x8xf32, #tpu.memory_space<vmem>>, %arg3: memref<16x128xbf16, #tpu.memory_space<vmem>>, %arg4: memref<1x128xf32, #tpu.memory_space<vmem>>, %arg5: memref<128x128xbf16, #tpu.memory_space<vmem>>, %arg6: memref<1x128xf32, #tpu.memory_space<vmem>>, %arg7: memref<128x8xbf16, #tpu.memory_space<vmem>>, %arg8: memref<16x8xbf16, #tpu.memory_space<vmem>>, %arg9: memref<8x128xbf16, #tpu.memory_space<vmem>>, %arg10: memref<1x128xf32, #tpu.memory_space<vmem>>, %arg11: memref<128x128xbf16, #tpu.memory_space<vmem>>, %arg12: memref<1x128xf32, #tpu.memory_space<vmem>>, %arg13: memref<128x8xbf16, #tpu.memory_space<vmem>>, %arg14: memref<1x8xf32, #tpu.memory_space<vmem>>, %arg15: memref<160x8xbf16, #tpu.memory_space<vmem>>) attributes {dimension_semantics = [#tpu.dimension_semantics<parallel>], iteration_bounds = array<i64: 2>, scalar_prefetch = 0 : i64, scratch_operands = 0 : i64, tpu.core_type = #tpu.core_type<tc>, window_params = [{transform_indices = @transform_0, window_bounds = array<i64: 160, 16>}, {transform_indices = @transform_1, window_bounds = array<i64: 160, 8>}, {pipeline_mode = #tpu.pipeline_mode<synchronous>, transform_indices = @transform_2, window_bounds = array<i64: 16, 128>}, {pipeline_mode = #tpu.pipeline_mode<synchronous>, transform_indices = @transform_3, window_bounds = array<i64: 1, 128>}, {pipeline_mode = #tpu.pipeline_mode<synchronous>, transform_indices = @transform_4, window_bounds = array<i64: 128, 128>}, {pipeline_mode = #tpu.pipeline_mode<synchronous>, transform_indices = @transform_5, window_bounds = array<i64: 1, 128>}, {pipeline_mode = #tpu.pipeline_mode<synchronous>, transform_indices = @transform_6, window_bounds = array<i64: 128, 8>}, {pipeline_mode = #tpu.pipeline_mode<synchronous>, transform_indices = @transform_7, window_bounds = array<i64: 16, 8>}, {pipeline_mode = #tpu.pipeline_mode<synchronous>, transform_indices = @transform_8, window_bounds = array<i64: 8, 128>}, {pipeline_mode = #tpu.pipeline_mode<synchronous>, transform_indices = @transform_9, window_bounds = array<i64: 1, 128>}, {pipeline_mode = #tpu.pipeline_mode<synchronous>, transform_indices = @transform_10, window_bounds = array<i64: 128, 128>}, {pipeline_mode = #tpu.pipeline_mode<synchronous>, transform_indices = @transform_11, window_bounds = array<i64: 1, 128>}, {pipeline_mode = #tpu.pipeline_mode<synchronous>, transform_indices = @transform_12, window_bounds = array<i64: 128, 8>}, {pipeline_mode = #tpu.pipeline_mode<synchronous>, transform_indices = @transform_13, window_bounds = array<i64: 1, 8>}, {transform_indices = @transform_14, window_bounds = array<i64: 160, 8>}]} {
    %c0 = arith.constant 0 : index
    %c0_0 = arith.constant 0 : index
    %0 = vector.load %arg1[%c0, %c0_0] : memref<160x16xf32, #tpu.memory_space<vmem>>, vector<160x16xf32>
    %1 = arith.truncf %0 : vector<160x16xf32> to vector<160x16xbf16>
    %c0_1 = arith.constant 0 : index
    %c0_2 = arith.constant 0 : index
    %2 = vector.load %arg2[%c0_1, %c0_2] : memref<160x8xf32, #tpu.memory_space<vmem>>, vector<160x8xf32>
    %3 = arith.truncf %2 : vector<160x8xf32> to vector<160x8xbf16>
    %c0_3 = arith.constant 0 : index
    %c0_4 = arith.constant 0 : index
    %4 = vector.load %arg3[%c0_3, %c0_4] : memref<16x128xbf16, #tpu.memory_space<vmem>>, vector<16x128xbf16>
    %cst = arith.constant dense<0.000000e+00> : vector<160x128xf32>
    %5 = tpu.matmul %1, %4, %cst {dimension_numbers = #tpu.dot_dimension_numbers<[1], [0], [0], [1], [0, 0, 1, 1], [], []>} : vector<160x16xbf16>, vector<16x128xbf16>, vector<160x128xf32> -> vector<160x128xf32>
    %c0_5 = arith.constant 0 : index
    %c0_6 = arith.constant 0 : index
    %6 = vector.load %arg4[%c0_5, %c0_6] : memref<1x128xf32, #tpu.memory_space<vmem>>, vector<1x128xf32>
    %7 = vector.broadcast %6 : vector<1x128xf32> to vector<160x128xf32>
    %8 = arith.addf %5, %7 : vector<160x128xf32>
    %cst_7 = arith.constant 0.000000e+00 : f32
    %9 = vector.broadcast %cst_7 : f32 to vector<160x128xf32>
    %10 = arith.maximumf %8, %9 : vector<160x128xf32>
    %11 = arith.truncf %10 : vector<160x128xf32> to vector<160x128xbf16>
    %c0_8 = arith.constant 0 : index
    %c0_9 = arith.constant 0 : index
    %12 = vector.load %arg5[%c0_8, %c0_9] : memref<128x128xbf16, #tpu.memory_space<vmem>>, vector<128x128xbf16>
    %cst_10 = arith.constant dense<0.000000e+00> : vector<160x128xf32>
    %13 = tpu.matmul %11, %12, %cst_10 {dimension_numbers = #tpu.dot_dimension_numbers<[1], [0], [0], [1], [0, 0, 1, 1], [], []>} : vector<160x128xbf16>, vector<128x128xbf16>, vector<160x128xf32> -> vector<160x128xf32>
    %c0_11 = arith.constant 0 : index
    %c0_12 = arith.constant 0 : index
    %14 = vector.load %arg6[%c0_11, %c0_12] : memref<1x128xf32, #tpu.memory_space<vmem>>, vector<1x128xf32>
    %15 = vector.broadcast %14 : vector<1x128xf32> to vector<160x128xf32>
    %16 = arith.addf %13, %15 : vector<160x128xf32>
    %cst_13 = arith.constant 0.000000e+00 : f32
    %17 = vector.broadcast %cst_13 : f32 to vector<160x128xf32>
    %18 = arith.maximumf %16, %17 : vector<160x128xf32>
    %19 = arith.truncf %18 : vector<160x128xf32> to vector<160x128xbf16>
    %c0_14 = arith.constant 0 : index
    %c0_15 = arith.constant 0 : index
    %20 = vector.load %arg7[%c0_14, %c0_15] : memref<128x8xbf16, #tpu.memory_space<vmem>>, vector<128x8xbf16>
    %cst_16 = arith.constant dense<0.000000e+00> : vector<160x8xf32>
    %21 = tpu.matmul %19, %20, %cst_16 {dimension_numbers = #tpu.dot_dimension_numbers<[1], [0], [0], [1], [0, 0, 1, 1], [], []>} : vector<160x128xbf16>, vector<128x8xbf16>, vector<160x8xf32> -> vector<160x8xf32>
    %c0_17 = arith.constant 0 : index
    %c0_18 = arith.constant 0 : index
    %22 = vector.load %arg8[%c0_17, %c0_18] : memref<16x8xbf16, #tpu.memory_space<vmem>>, vector<16x8xbf16>
    %cst_19 = arith.constant dense<0.000000e+00> : vector<160x8xf32>
    %23 = tpu.matmul %1, %22, %cst_19 {dimension_numbers = #tpu.dot_dimension_numbers<[1], [0], [0], [1], [0, 0, 1, 1], [], []>} : vector<160x16xbf16>, vector<16x8xbf16>, vector<160x8xf32> -> vector<160x8xf32>
    %24 = arith.addf %21, %23 : vector<160x8xf32>
    %c0_20 = arith.constant 0 : index
    %c0_21 = arith.constant 0 : index
    %25 = vector.load %arg9[%c0_20, %c0_21] : memref<8x128xbf16, #tpu.memory_space<vmem>>, vector<8x128xbf16>
    %cst_22 = arith.constant dense<0.000000e+00> : vector<160x128xf32>
    %26 = tpu.matmul %3, %25, %cst_22 {dimension_numbers = #tpu.dot_dimension_numbers<[1], [0], [0], [1], [0, 0, 1, 1], [], []>} : vector<160x8xbf16>, vector<8x128xbf16>, vector<160x128xf32> -> vector<160x128xf32>
    %c0_23 = arith.constant 0 : index
    %c0_24 = arith.constant 0 : index
    %27 = vector.load %arg10[%c0_23, %c0_24] : memref<1x128xf32, #tpu.memory_space<vmem>>, vector<1x128xf32>
    %28 = vector.broadcast %27 : vector<1x128xf32> to vector<160x128xf32>
    %29 = arith.addf %26, %28 : vector<160x128xf32>
    %cst_25 = arith.constant 0.000000e+00 : f32
    %30 = vector.broadcast %cst_25 : f32 to vector<160x128xf32>
    %31 = arith.maximumf %29, %30 : vector<160x128xf32>
    %32 = arith.truncf %31 : vector<160x128xf32> to vector<160x128xbf16>
    %c0_26 = arith.constant 0 : index
    %c0_27 = arith.constant 0 : index
    %33 = vector.load %arg11[%c0_26, %c0_27] : memref<128x128xbf16, #tpu.memory_space<vmem>>, vector<128x128xbf16>
    %cst_28 = arith.constant dense<0.000000e+00> : vector<160x128xf32>
    %34 = tpu.matmul %32, %33, %cst_28 {dimension_numbers = #tpu.dot_dimension_numbers<[1], [0], [0], [1], [0, 0, 1, 1], [], []>} : vector<160x128xbf16>, vector<128x128xbf16>, vector<160x128xf32> -> vector<160x128xf32>
    %c0_29 = arith.constant 0 : index
    %c0_30 = arith.constant 0 : index
    %35 = vector.load %arg12[%c0_29, %c0_30] : memref<1x128xf32, #tpu.memory_space<vmem>>, vector<1x128xf32>
    %36 = vector.broadcast %35 : vector<1x128xf32> to vector<160x128xf32>
    %37 = arith.addf %34, %36 : vector<160x128xf32>
    %cst_31 = arith.constant 0.000000e+00 : f32
    %38 = vector.broadcast %cst_31 : f32 to vector<160x128xf32>
    %39 = arith.maximumf %37, %38 : vector<160x128xf32>
    %40 = arith.truncf %39 : vector<160x128xf32> to vector<160x128xbf16>
    %c0_32 = arith.constant 0 : index
    %c0_33 = arith.constant 0 : index
    %41 = vector.load %arg13[%c0_32, %c0_33] : memref<128x8xbf16, #tpu.memory_space<vmem>>, vector<128x8xbf16>
    %cst_34 = arith.constant dense<0.000000e+00> : vector<160x8xf32>
    %42 = tpu.matmul %40, %41, %cst_34 {dimension_numbers = #tpu.dot_dimension_numbers<[1], [0], [0], [1], [0, 0, 1, 1], [], []>} : vector<160x128xbf16>, vector<128x8xbf16>, vector<160x8xf32> -> vector<160x8xf32>
    %43 = arith.addf %24, %42 : vector<160x8xf32>
    %c0_35 = arith.constant 0 : index
    %c0_36 = arith.constant 0 : index
    %44 = vector.load %arg14[%c0_35, %c0_36] : memref<1x8xf32, #tpu.memory_space<vmem>>, vector<1x8xf32>
    %45 = vector.broadcast %44 : vector<1x8xf32> to vector<160x8xf32>
    %46 = arith.addf %43, %45 : vector<160x8xf32>
    %47 = arith.truncf %46 : vector<160x8xf32> to vector<160x8xbf16>
    %c0_37 = arith.constant 0 : index
    %c0_38 = arith.constant 0 : index
    %48 = vector.load %arg15[%c0_37, %c0_38] : memref<160x8xbf16, #tpu.memory_space<vmem>>, vector<160x8xbf16>
    tpu.vector_store %arg15[%c0_37, %c0_38], %47 {strides = array<i32>} : memref<160x8xbf16, #tpu.memory_space<vmem>>, vector<160x8xbf16>,
    return
  }
  func.func @transform_0(%arg0: i32) -> (i32, i32) {
    %c0_i32 = arith.constant 0 : i32
    %c0_i32_0 = arith.constant 0 : i32
    return %arg0, %c0_i32 : i32, i32
  }
  func.func @transform_1(%arg0: i32) -> (i32, i32) {
    %c0_i32 = arith.constant 0 : i32
    %c0_i32_0 = arith.constant 0 : i32
    return %arg0, %c0_i32 : i32, i32
  }
  func.func @transform_2(%arg0: i32) -> (i32, i32) {
    %c0_i32 = arith.constant 0 : i32
    %c0_i32_0 = arith.constant 0 : i32
    %c0_i32_1 = arith.constant 0 : i32
    return %c0_i32, %c0_i32_0 : i32, i32
  }
  func.func @transform_3(%arg0: i32) -> (i32, i32) {
    %c0_i32 = arith.constant 0 : i32
    %c0_i32_0 = arith.constant 0 : i32
    %c0_i32_1 = arith.constant 0 : i32
    return %c0_i32, %c0_i32_0 : i32, i32
  }
  func.func @transform_4(%arg0: i32) -> (i32, i32) {
    %c0_i32 = arith.constant 0 : i32
    %c0_i32_0 = arith.constant 0 : i32
    %c0_i32_1 = arith.constant 0 : i32
    return %c0_i32, %c0_i32_0 : i32, i32
  }
  func.func @transform_5(%arg0: i32) -> (i32, i32) {
    %c0_i32 = arith.constant 0 : i32
    %c0_i32_0 = arith.constant 0 : i32
    %c0_i32_1 = arith.constant 0 : i32
    return %c0_i32, %c0_i32_0 : i32, i32
  }
  func.func @transform_6(%arg0: i32) -> (i32, i32) {
    %c0_i32 = arith.constant 0 : i32
    %c0_i32_0 = arith.constant 0 : i32
    %c0_i32_1 = arith.constant 0 : i32
    return %c0_i32, %c0_i32_0 : i32, i32
  }
  func.func @transform_7(%arg0: i32) -> (i32, i32) {
    %c0_i32 = arith.constant 0 : i32
    %c0_i32_0 = arith.constant 0 : i32
    %c0_i32_1 = arith.constant 0 : i32
    return %c0_i32, %c0_i32_0 : i32, i32
  }
  func.func @transform_8(%arg0: i32) -> (i32, i32) {
    %c0_i32 = arith.constant 0 : i32
    %c0_i32_0 = arith.constant 0 : i32
    %c0_i32_1 = arith.constant 0 : i32
    return %c0_i32, %c0_i32_0 : i32, i32
  }
  func.func @transform_9(%arg0: i32) -> (i32, i32) {
    %c0_i32 = arith.constant 0 : i32
    %c0_i32_0 = arith.constant 0 : i32
    %c0_i32_1 = arith.constant 0 : i32
    return %c0_i32, %c0_i32_0 : i32, i32
  }
  func.func @transform_10(%arg0: i32) -> (i32, i32) {
    %c0_i32 = arith.constant 0 : i32
    %c0_i32_0 = arith.constant 0 : i32
    %c0_i32_1 = arith.constant 0 : i32
    return %c0_i32, %c0_i32_0 : i32, i32
  }
  func.func @transform_11(%arg0: i32) -> (i32, i32) {
    %c0_i32 = arith.constant 0 : i32
    %c0_i32_0 = arith.constant 0 : i32
    %c0_i32_1 = arith.constant 0 : i32
    return %c0_i32, %c0_i32_0 : i32, i32
  }
  func.func @transform_12(%arg0: i32) -> (i32, i32) {
    %c0_i32 = arith.constant 0 : i32
    %c0_i32_0 = arith.constant 0 : i32
    %c0_i32_1 = arith.constant 0 : i32
    return %c0_i32, %c0_i32_0 : i32, i32
  }
  func.func @transform_13(%arg0: i32) -> (i32, i32) {
    %c0_i32 = arith.constant 0 : i32
    %c0_i32_0 = arith.constant 0 : i32
    %c0_i32_1 = arith.constant 0 : i32
    return %c0_i32, %c0_i32_0 : i32, i32
  }
  func.func @transform_14(%arg0: i32) -> (i32, i32) {
    %c0_i32 = arith.constant 0 : i32
    %c0_i32_0 = arith.constant 0 : i32
    return %arg0, %c0_i32 : i32, i32
  }
}

module attributes {stable_mosaic.version = 11 : i64} {
  func.func @lpmlp_kernel(%arg0: i32, %arg1: memref<160x16xf32, #tpu.memory_space<vmem>>, %arg2: memref<160x8xf32, #tpu.memory_space<vmem>>, %arg3: memref<16x128xbf16, #tpu.memory_space<vmem>>, %arg4: memref<1x128xf32, #tpu.memory_space<vmem>>, %arg5: memref<128x128xbf16, #tpu.memory_space<vmem>>, %arg6: memref<1x128xf32, #tpu.memory_space<vmem>>, %arg7: memref<128x8xbf16, #tpu.memory_space<vmem>>, %arg8: memref<16x8xbf16, #tpu.memory_space<vmem>>, %arg9: memref<8x128xbf16, #tpu.memory_space<vmem>>, %arg10: memref<1x128xf32, #tpu.memory_space<vmem>>, %arg11: memref<128x128xbf16, #tpu.memory_space<vmem>>, %arg12: memref<1x128xf32, #tpu.memory_space<vmem>>, %arg13: memref<128x8xbf16, #tpu.memory_space<vmem>>, %arg14: memref<1x8xf32, #tpu.memory_space<vmem>>, %arg15: memref<160x8xbf16, #tpu.memory_space<vmem>>) attributes {dimension_semantics = [#tpu.dimension_semantics<parallel>], iteration_bounds = array<i64: 2>, scalar_prefetch = 0 : i64, scratch_operands = 0 : i64, tpu.core_type = #tpu.core_type<tc>, window_params = [{transform_indices = @transform_0, window_bounds = array<i64: 160, 16>}, {transform_indices = @transform_1, window_bounds = array<i64: 160, 8>}, {pipeline_mode = #tpu.pipeline_mode<synchronous>, transform_indices = @transform_2, window_bounds = array<i64: 16, 128>}, {pipeline_mode = #tpu.pipeline_mode<synchronous>, transform_indices = @transform_3, window_bounds = array<i64: 1, 128>}, {pipeline_mode = #tpu.pipeline_mode<synchronous>, transform_indices = @transform_4, window_bounds = array<i64: 128, 128>}, {pipeline_mode = #tpu.pipeline_mode<synchronous>, transform_indices = @transform_5, window_bounds = array<i64: 1, 128>}, {pipeline_mode = #tpu.pipeline_mode<synchronous>, transform_indices = @transform_6, window_bounds = array<i64: 128, 8>}, {pipeline_mode = #tpu.pipeline_mode<synchronous>, transform_indices = @transform_7, window_bounds = array<i64: 16, 8>}, {pipeline_mode = #tpu.pipeline_mode<synchronous>, transform_indices = @transform_8, window_bounds = array<i64: 8, 128>}, {pipeline_mode = #tpu.pipeline_mode<synchronous>, transform_indices = @transform_9, window_bounds = array<i64: 1, 128>}, {pipeline_mode = #tpu.pipeline_mode<synchronous>, transform_indices = @transform_10, window_bounds = array<i64: 128, 128>}, {pipeline_mode = #tpu.pipeline_mode<synchronous>, transform_indices = @transform_11, window_bounds = array<i64: 1, 128>}, {pipeline_mode = #tpu.pipeline_mode<synchronous>, transform_indices = @transform_12, window_bounds = array<i64: 128, 8>}, {pipeline_mode = #tpu.pipeline_mode<synchronous>, transform_indices = @transform_13, window_bounds = array<i64: 1, 8>}, {transform_indices = @transform_14, window_bounds = array<i64: 160, 8>}]} {
    %c0 = arith.constant 0 : index
    %c0_0 = arith.constant 0 : index
    %0 = vector.load %arg1[%c0, %c0_0] : memref<160x16xf32, #tpu.memory_space<vmem>>, vector<160x16xf32>
    %1 = arith.truncf %0 : vector<160x16xf32> to vector<160x16xbf16>
    %c0_1 = arith.constant 0 : index
    %c0_2 = arith.constant 0 : index
    %2 = vector.load %arg2[%c0_1, %c0_2] : memref<160x8xf32, #tpu.memory_space<vmem>>, vector<160x8xf32>
    %3 = arith.truncf %2 : vector<160x8xf32> to vector<160x8xbf16>
    %c0_3 = arith.constant 0 : index
    %c0_4 = arith.constant 0 : index
    %4 = vector.load %arg3[%c0_3, %c0_4] : memref<16x128xbf16, #tpu.memory_space<vmem>>, vector<16x128xbf16>
    %cst = arith.constant dense<0.000000e+00> : vector<160x128xf32>
    %5 = tpu.matmul %1, %4, %cst {dimension_numbers = #tpu.dot_dimension_numbers<[1], [0], [0], [1], [0, 0, 1, 1], [], []>} : vector<160x16xbf16>, vector<16x128xbf16>, vector<160x128xf32> -> vector<160x128xf32>
    %c0_5 = arith.constant 0 : index
    %c0_6 = arith.constant 0 : index
    %6 = vector.load %arg4[%c0_5, %c0_6] : memref<1x128xf32, #tpu.memory_space<vmem>>, vector<1x128xf32>
    %7 = vector.broadcast %6 : vector<1x128xf32> to vector<160x128xf32>
    %8 = arith.addf %5, %7 : vector<160x128xf32>
    %cst_7 = arith.constant 0.000000e+00 : f32
    %9 = vector.broadcast %cst_7 : f32 to vector<160x128xf32>
    %10 = arith.maximumf %8, %9 : vector<160x128xf32>
    %11 = arith.truncf %10 : vector<160x128xf32> to vector<160x128xbf16>
    %c0_8 = arith.constant 0 : index
    %c0_9 = arith.constant 0 : index
    %12 = vector.load %arg5[%c0_8, %c0_9] : memref<128x128xbf16, #tpu.memory_space<vmem>>, vector<128x128xbf16>
    %cst_10 = arith.constant dense<0.000000e+00> : vector<160x128xf32>
    %13 = tpu.matmul %11, %12, %cst_10 {dimension_numbers = #tpu.dot_dimension_numbers<[1], [0], [0], [1], [0, 0, 1, 1], [], []>} : vector<160x128xbf16>, vector<128x128xbf16>, vector<160x128xf32> -> vector<160x128xf32>
    %c0_11 = arith.constant 0 : index
    %c0_12 = arith.constant 0 : index
    %14 = vector.load %arg6[%c0_11, %c0_12] : memref<1x128xf32, #tpu.memory_space<vmem>>, vector<1x128xf32>
    %15 = vector.broadcast %14 : vector<1x128xf32> to vector<160x128xf32>
    %16 = arith.addf %13, %15 : vector<160x128xf32>
    %cst_13 = arith.constant 0.000000e+00 : f32
    %17 = vector.broadcast %cst_13 : f32 to vector<160x128xf32>
    %18 = arith.maximumf %16, %17 : vector<160x128xf32>
    %19 = arith.truncf %18 : vector<160x128xf32> to vector<160x128xbf16>
    %c0_14 = arith.constant 0 : index
    %c0_15 = arith.constant 0 : index
    %20 = vector.load %arg7[%c0_14, %c0_15] : memref<128x8xbf16, #tpu.memory_space<vmem>>, vector<128x8xbf16>
    %cst_16 = arith.constant dense<0.000000e+00> : vector<160x8xf32>
    %21 = tpu.matmul %19, %20, %cst_16 {dimension_numbers = #tpu.dot_dimension_numbers<[1], [0], [0], [1], [0, 0, 1, 1], [], []>} : vector<160x128xbf16>, vector<128x8xbf16>, vector<160x8xf32> -> vector<160x8xf32>
    %c0_17 = arith.constant 0 : index
    %c0_18 = arith.constant 0 : index
    %22 = vector.load %arg8[%c0_17, %c0_18] : memref<16x8xbf16, #tpu.memory_space<vmem>>, vector<16x8xbf16>
    %cst_19 = arith.constant dense<0.000000e+00> : vector<160x8xf32>
    %23 = tpu.matmul %1, %22, %cst_19 {dimension_numbers = #tpu.dot_dimension_numbers<[1], [0], [0], [1], [0, 0, 1, 1], [], []>} : vector<160x16xbf16>, vector<16x8xbf16>, vector<160x8xf32> -> vector<160x8xf32>
    %24 = arith.addf %21, %23 : vector<160x8xf32>
    %c0_20 = arith.constant 0 : index
    %c0_21 = arith.constant 0 : index
    %25 = vector.load %arg9[%c0_20, %c0_21] : memref<8x128xbf16, #tpu.memory_space<vmem>>, vector<8x128xbf16>
    %cst_22 = arith.constant dense<0.000000e+00> : vector<160x128xf32>
    %26 = tpu.matmul %3, %25, %cst_22 {dimension_numbers = #tpu.dot_dimension_numbers<[1], [0], [0], [1], [0, 0, 1, 1], [], []>} : vector<160x8xbf16>, vector<8x128xbf16>, vector<160x128xf32> -> vector<160x128xf32>
    %c0_23 = arith.constant 0 : index
    %c0_24 = arith.constant 0 : index
    %27 = vector.load %arg10[%c0_23, %c0_24] : memref<1x128xf32, #tpu.memory_space<vmem>>, vector<1x128xf32>
    %28 = vector.broadcast %27 : vector<1x128xf32> to vector<160x128xf32>
    %29 = arith.addf %26, %28 : vector<160x128xf32>
    %cst_25 = arith.constant 0.000000e+00 : f32
    %30 = vector.broadcast %cst_25 : f32 to vector<160x128xf32>
    %31 = arith.maximumf %29, %30 : vector<160x128xf32>
    %32 = arith.truncf %31 : vector<160x128xf32> to vector<160x128xbf16>
    %c0_26 = arith.constant 0 : index
    %c0_27 = arith.constant 0 : index
    %33 = vector.load %arg11[%c0_26, %c0_27] : memref<128x128xbf16, #tpu.memory_space<vmem>>, vector<128x128xbf16>
    %cst_28 = arith.constant dense<0.000000e+00> : vector<160x128xf32>
    %34 = tpu.matmul %32, %33, %cst_28 {dimension_numbers = #tpu.dot_dimension_numbers<[1], [0], [0], [1], [0, 0, 1, 1], [], []>} : vector<160x128xbf16>, vector<128x128xbf16>, vector<160x128xf32> -> vector<160x128xf32>
    %c0_29 = arith.constant 0 : index
    %c0_30 = arith.constant 0 : index
    %35 = vector.load %arg12[%c0_29, %c0_30] : memref<1x128xf32, #tpu.memory_space<vmem>>, vector<1x128xf32>
    %36 = vector.broadcast %35 : vector<1x128xf32> to vector<160x128xf32>
    %37 = arith.addf %34, %36 : vector<160x128xf32>
    %cst_31 = arith.constant 0.000000e+00 : f32
    %38 = vector.broadcast %cst_31 : f32 to vector<160x128xf32>
    %39 = arith.maximumf %37, %38 : vector<160x128xf32>
    %40 = arith.truncf %39 : vector<160x128xf32> to vector<160x128xbf16>
    %c0_32 = arith.constant 0 : index
    %c0_33 = arith.constant 0 : index
    %41 = vector.load %arg13[%c0_32, %c0_33] : memref<128x8xbf16, #tpu.memory_space<vmem>>, vector<128x8xbf16>
    %cst_34 = arith.constant dense<0.000000e+00> : vector<160x8xf32>
    %42 = tpu.matmul %40, %41, %cst_34 {dimension_numbers = #tpu.dot_dimension_numbers<[1], [0], [0], [1], [0, 0, 1, 1], [], []>} : vector<160x128xbf16>, vector<128x8xbf16>, vector<160x8xf32> -> vector<160x8xf32>
    %43 = arith.addf %24, %42 : vector<160x8xf32>
    %c0_35 = arith.constant 0 : index
    %c0_36 = arith.constant 0 : index
    %44 = vector.load %arg14[%c0_35, %c0_36] : memref<1x8xf32, #tpu.memory_space<vmem>>, vector<1x8xf32>
    %45 = vector.broadcast %44 : vector<1x8xf32> to vector<160x8xf32>
    %46 = arith.addf %43, %45 : vector<160x8xf32>
    %47 = arith.truncf %46 : vector<160x8xf32> to vector<160x8xbf16>
    %c0_37 = arith.constant 0 : index
    %c0_38 = arith.constant 0 : index
    %48 = vector.load %arg15[%c0_37, %c0_38] : memref<160x8xbf16, #tpu.memory_space<vmem>>, vector<160x8xbf16>
    tpu.vector_store %arg15[%c0_37, %c0_38], %47 {strides = array<i32>} : memref<160x8xbf16, #tpu.memory_space<vmem>>, vector<160x8xbf16>,
    return
  }
  func.func @transform_0(%arg0: i32) -> (i32, i32) {
    %c0_i32 = arith.constant 0 : i32
    %c0_i32_0 = arith.constant 0 : i32
    return %arg0, %c0_i32 : i32, i32
  }
  func.func @transform_1(%arg0: i32) -> (i32, i32) {
    %c0_i32 = arith.constant 0 : i32
    %c0_i32_0 = arith.constant 0 : i32
    return %arg0, %c0_i32 : i32, i32
  }
  func.func @transform_2(%arg0: i32) -> (i32, i32) {
    %c0_i32 = arith.constant 0 : i32
    %c0_i32_0 = arith.constant 0 : i32
    %c0_i32_1 = arith.constant 0 : i32
    return %c0_i32, %c0_i32_0 : i32, i32
  }
  func.func @transform_3(%arg0: i32) -> (i32, i32) {
    %c0_i32 = arith.constant 0 : i32
    %c0_i32_0 = arith.constant 0 : i32
    %c0_i32_1 = arith.constant 0 : i32
    return %c0_i32, %c0_i32_0 : i32, i32
  }
  func.func @transform_4(%arg0: i32) -> (i32, i32) {
    %c0_i32 = arith.constant 0 : i32
    %c0_i32_0 = arith.constant 0 : i32
    %c0_i32_1 = arith.constant 0 : i32
    return %c0_i32, %c0_i32_0 : i32, i32
  }
  func.func @transform_5(%arg0: i32) -> (i32, i32) {
    %c0_i32 = arith.constant 0 : i32
    %c0_i32_0 = arith.constant 0 : i32
    %c0_i32_1 = arith.constant 0 : i32
    return %c0_i32, %c0_i32_0 : i32, i32
  }
  func.func @transform_6(%arg0: i32) -> (i32, i32) {
    %c0_i32 = arith.constant 0 : i32
    %c0_i32_0 = arith.constant 0 : i32
    %c0_i32_1 = arith.constant 0 : i32
    return %c0_i32, %c0_i32_0 : i32, i32
  }
  func.func @transform_7(%arg0: i32) -> (i32, i32) {
    %c0_i32 = arith.constant 0 : i32
    %c0_i32_0 = arith.constant 0 : i32
    %c0_i32_1 = arith.constant 0 : i32
    return %c0_i32, %c0_i32_0 : i32, i32
  }
  func.func @transform_8(%arg0: i32) -> (i32, i32) {
    %c0_i32 = arith.constant 0 : i32
    %c0_i32_0 = arith.constant 0 : i32
    %c0_i32_1 = arith.constant 0 : i32
    return %c0_i32, %c0_i32_0 : i32, i32
  }
  func.func @transform_9(%arg0: i32) -> (i32, i32) {
    %c0_i32 = arith.constant 0 : i32
    %c0_i32_0 = arith.constant 0 : i32
    %c0_i32_1 = arith.constant 0 : i32
    return %c0_i32, %c0_i32_0 : i32, i32
  }
  func.func @transform_10(%arg0: i32) -> (i32, i32) {
    %c0_i32 = arith.constant 0 : i32
    %c0_i32_0 = arith.constant 0 : i32
    %c0_i32_1 = arith.constant 0 : i32
    return %c0_i32, %c0_i32_0 : i32, i32
  }
  func.func @transform_11(%arg0: i32) -> (i32, i32) {
    %c0_i32 = arith.constant 0 : i32
    %c0_i32_0 = arith.constant 0 : i32
    %c0_i32_1 = arith.constant 0 : i32
    return %c0_i32, %c0_i32_0 : i32, i32
  }
  func.func @transform_12(%arg0: i32) -> (i32, i32) {
    %c0_i32 = arith.constant 0 : i32
    %c0_i32_0 = arith.constant 0 : i32
    %c0_i32_1 = arith.constant 0 : i32
    return %c0_i32, %c0_i32_0 : i32, i32
  }
  func.func @transform_13(%arg0: i32) -> (i32, i32) {
    %c0_i32 = arith.constant 0 : i32
    %c0_i32_0 = arith.constant 0 : i32
    %c0_i32_1 = arith.constant 0 : i32
    return %c0_i32, %c0_i32_0 : i32, i32
  }
  func.func @transform_14(%arg0: i32) -> (i32, i32) {
    %c0_i32 = arith.constant 0 : i32
    %c0_i32_0 = arith.constant 0 : i32
    return %arg0, %c0_i32 : i32, i32
  }
}

</mosaic_0001>

<llo_original>
// kernel: lpmlp_forward.1
$region0: #{lpmlp_forward.1}
  #allocation0 [shape = 'u32[]', space=smem, size = 0x4, offset = 0x4, fixed_abs, tag = 'smem constant byte address 0x4 - core index']
  #allocation1 [shape = 'u32[144,128]{1,0:T(1,128)}', space=vmem, size = 0x12000, scoped, tag = 'internal scratch']
  %s0 = inlined_call_operand.vmem [shape: f32[300,16], index: 0, kind: input, shape index: {}]
  %s1 = inlined_call_operand.vmem [shape: f32[300,8], index: 1, kind: input, shape index: {}]
  %s2 = inlined_call_operand.vmem [shape: bf16[16,128], index: 2, kind: input, shape index: {}]
  %s3 = inlined_call_operand.vmem [shape: f32[1,128], index: 3, kind: input, shape index: {}]
  %s4 = inlined_call_operand.vmem [shape: bf16[128,128], index: 4, kind: input, shape index: {}]
  %s5 = inlined_call_operand.vmem [shape: f32[1,128], index: 5, kind: input, shape index: {}]
  %s6 = inlined_call_operand.vmem [shape: bf16[128,8], index: 6, kind: input, shape index: {}]
  %s7 = inlined_call_operand.vmem [shape: bf16[16,8], index: 7, kind: input, shape index: {}]
  %s8 = inlined_call_operand.vmem [shape: bf16[8,128], index: 8, kind: input, shape index: {}]
  %s9 = inlined_call_operand.vmem [shape: f32[1,128], index: 9, kind: input, shape index: {}]
  %s10 = inlined_call_operand.vmem [shape: bf16[128,128], index: 10, kind: input, shape index: {}]
  %s11 = inlined_call_operand.vmem [shape: f32[1,128], index: 11, kind: input, shape index: {}]
  %s12 = inlined_call_operand.vmem [shape: bf16[128,8], index: 12, kind: input, shape index: {}]
  %s13 = inlined_call_operand.vmem [shape: f32[1,8], index: 13, kind: input, shape index: {}]
  %s14 = inlined_call_operand.vmem [shape: bf16[300,8], index: 14, kind: output, shape index: {}]
  %s15 = sld [smem:[#allocation0]]
  $region133: #{lpmlp_forward.1} parent=0
    _
  %s17 = ssub.s32 1, %s15
  %s18 = scalar_select 0, %s17, %s15
  $region1: #{lpmlp_forward.1} parent=0
    #allocation2 [shape = 'u8[81920]{0}', space=vmem, size = 0x14000, scoped, tag = 'output window, operand 0']
    loop: start=0, step=1, limit=4
    $region2: #{lpmlp_forward.1} parent=1 // loop_pre_header
      _
    $region3: #{lpmlp_forward.1} parent=1 // loop_header
      %s20 = sphi 0, %s24
      %p21 = scmp.ge.s32.totalorder %s20, 4
      %s30 = sphi 0, %s32
      %s33 = sphi 0, %s30
      %s34 = sphi 0, %s33
      %s50 = sphi 0, %s34
      %s56 = sphi 0, %s58
      %s59 = sphi 0, %s56
      %s60 = sphi 0, %s59
      %s76 = sphi 0, %s60
      %s80 = sphi 0, %s80
      %s82 = sphi 0, %s80
      %s83 = sphi 0, %s82
      %s97 = sphi 0, %s83
      %s101 = sphi 0, %s101
      %s103 = sphi 0, %s101
      %s104 = sphi 0, %s103
      %s118 = sphi 0, %s104
      %s122 = sphi 0, %s122
      %s124 = sphi 0, %s122
      %s125 = sphi 0, %s124
      %s139 = sphi 0, %s125
      %s143 = sphi 0, %s143
      %s145 = sphi 0, %s143
      %s146 = sphi 0, %s145
      %s160 = sphi 0, %s146
      %s164 = sphi 0, %s164
      %s166 = sphi 0, %s164
      %s167 = sphi 0, %s166
      %s181 = sphi 0, %s167
      %s185 = sphi 0, %s185
      %s187 = sphi 0, %s185
      %s188 = sphi 0, %s187
      %s202 = sphi 0, %s188
      %s206 = sphi 0, %s206
      %s208 = sphi 0, %s206
      %s209 = sphi 0, %s208
      %s223 = sphi 0, %s209
      %s227 = sphi 0, %s227
      %s229 = sphi 0, %s227
      %s230 = sphi 0, %s229
      %s244 = sphi 0, %s230
      %s248 = sphi 0, %s248
      %s250 = sphi 0, %s248
      %s251 = sphi 0, %s250
      %s265 = sphi 0, %s251
      %s269 = sphi 0, %s269
      %s271 = sphi 0, %s269
      %s272 = sphi 0, %s271
      %s286 = sphi 0, %s272
      %s290 = sphi 0, %s290
      %s292 = sphi 0, %s290
      %s293 = sphi 0, %s292
      %s307 = sphi 0, %s293
      %s311 = sphi 0, %s311
      %s313 = sphi 0, %s311
      %s314 = sphi 0, %s313
      %s328 = sphi 0, %s314
      %s334 = sphi 0, %s336
      %s337 = sphi 0, %s334
      %s338 = sphi 0, %s337
      %s354 = sphi 0, %s338
    $region4: #{lpmlp_forward.1} parent=1 // loop_header_branch
      %23 = sbr.rel (%p21) target = $region8
    $region5: #{lpmlp_forward.1} parent=1 // loop_body
      %s25 = ssub.s32 %s20, 1
      %s26 = ssub.s32 %s20, 2
      %s27 = sadd.s32 %s20, 1
      %s28 = ssub.s32 %s20, %s27
      %p29 = scmp.eq.s32.totalorder %s28, 0
      %s31 = sadd.s32 %s30, 1
      %s32 = scalar_select %p29, %s30, %s31
      %p35 = pneg %p29
      %p36 = scmp.eq.s32.totalorder %s20, 1
      %p37 = por %p35, %p36
      %p38 = scmp.ne.s32.totalorder %s30, %s33
      %p39 = scmp.eq.s32.totalorder %s20, 0
      %p40 = por %p38, %p39
      %p41 = scmp.ne.s32.totalorder %s30, %s33
      %p42 = scmp.eq.s32.totalorder %s25, 1
      %p43 = por %p41, %p42
      %p44 = scmp.ne.s32.totalorder %s33, %s34
      %p45 = scmp.eq.s32.totalorder %s25, 0
      %p46 = por %p44, %p45
      %p47 = scmp.ne.s32.totalorder %s33, %s34
      %p48 = scmp.eq.s32.totalorder %s26, 1
      %p49 = por %p47, %p48
      %p51 = scmp.ne.s32.totalorder %s34, %s50
      %p52 = scmp.eq.s32.totalorder %s26, 0
      %p53 = por %p51, %p52
      %s54 = ssub.s32 %s20, %s27
      %p55 = scmp.eq.s32.totalorder %s54, 0
      %s57 = sadd.s32 %s56, 1
      %s58 = scalar_select %p55, %s56, %s57
      %p61 = pneg %p55
      %p62 = scmp.eq.s32.totalorder %s20, 1
      %p63 = por %p61, %p62
      %p64 = scmp.ne.s32.totalorder %s56, %s59
      %p65 = scmp.eq.s32.totalorder %s20, 0
      %p66 = por %p64, %p65
      %p67 = scmp.ne.s32.totalorder %s56, %s59
      %p68 = scmp.eq.s32.totalorder %s25, 1
      %p69 = por %p67, %p68
      %p70 = scmp.ne.s32.totalorder %s59, %s60
      %p71 = scmp.eq.s32.totalorder %s25, 0
      %p72 = por %p70, %p71
      %p73 = scmp.ne.s32.totalorder %s59, %s60
      %p74 = scmp.eq.s32.totalorder %s26, 1
      %p75 = por %p73, %p74
      %p77 = scmp.ne.s32.totalorder %s60, %s76
      %p78 = scmp.eq.s32.totalorder %s26, 0
      %p79 = por %p77, %p78
      %s81 = sadd.s32 %s80, 1
      %p84 = scmp.eq.s32.totalorder %s20, 1
      %p85 = scmp.ne.s32.totalorder %s80, %s82
      %p86 = scmp.eq.s32.totalorder %s20, 0
      %p87 = por %p85, %p86
      %p88 = scmp.ne.s32.totalorder %s80, %s82
      %p89 = scmp.eq.s32.totalorder %s25, 1
      %p90 = por %p88, %p89
      %p91 = scmp.ne.s32.totalorder %s82, %s83
      %p92 = scmp.eq.s32.totalorder %s25, 0
      %p93 = por %p91, %p92
      %p94 = scmp.ne.s32.totalorder %s82, %s83
      %p95 = scmp.eq.s32.totalorder %s26, 1
      %p96 = por %p94, %p95
      %p98 = scmp.ne.s32.totalorder %s83, %s97
      %p99 = scmp.eq.s32.totalorder %s26, 0
      %p100 = por %p98, %p99
      %s102 = sadd.s32 %s101, 1
      %p105 = scmp.eq.s32.totalorder %s20, 1
      %p106 = scmp.ne.s32.totalorder %s101, %s103
      %p107 = scmp.eq.s32.totalorder %s20, 0
      %p108 = por %p106, %p107
      %p109 = scmp.ne.s32.totalorder %s101, %s103
      %p110 = scmp.eq.s32.totalorder %s25, 1
      %p111 = por %p109, %p110
      %p112 = scmp.ne.s32.totalorder %s103, %s104
      %p113 = scmp.eq.s32.totalorder %s25, 0
      %p114 = por %p112, %p113
      %p115 = scmp.ne.s32.totalorder %s103, %s104
      %p116 = scmp.eq.s32.totalorder %s26, 1
      %p117 = por %p115, %p116
      %p119 = scmp.ne.s32.totalorder %s104, %s118
      %p120 = scmp.eq.s32.totalorder %s26, 0
      %p121 = por %p119, %p120
      %s123 = sadd.s32 %s122, 1
      %p126 = scmp.eq.s32.totalorder %s20, 1
      %p127 = scmp.ne.s32.totalorder %s122, %s124
      %p128 = scmp.eq.s32.totalorder %s20, 0
      %p129 = por %p127, %p128
      %p130 = scmp.ne.s32.totalorder %s122, %s124
      %p131 = scmp.eq.s32.totalorder %s25, 1
      %p132 = por %p130, %p131
      %p133 = scmp.ne.s32.totalorder %s124, %s125
      %p134 = scmp.eq.s32.totalorder %s25, 0
      %p135 = por %p133, %p134
      %p136 = scmp.ne.s32.totalorder %s124, %s125
      %p137 = scmp.eq.s32.totalorder %s26, 1
      %p138 = por %p136, %p137
      %p140 = scmp.ne.s32.totalorder %s125, %s139
      %p141 = scmp.eq.s32.totalorder %s26, 0
      %p142 = por %p140, %p141
      %s144 = sadd.s32 %s143, 1
      %p147 = scmp.eq.s32.totalorder %s20, 1
      %p148 = scmp.ne.s32.totalorder %s143, %s145
      %p149 = scmp.eq.s32.totalorder %s20, 0
      %p150 = por %p148, %p149
      %p151 = scmp.ne.s32.totalorder %s143, %s145
      %p152 = scmp.eq.s32.totalorder %s25, 1
      %p153 = por %p151, %p152
      %p154 = scmp.ne.s32.totalorder %s145, %s146
      %p155 = scmp.eq.s32.totalorder %s25, 0
      %p156 = por %p154, %p155
      %p157 = scmp.ne.s32.totalorder %s145, %s146
      %p158 = scmp.eq.s32.totalorder %s26, 1
      %p159 = por %p157, %p158
      %p161 = scmp.ne.s32.totalorder %s146, %s160
      %p162 = scmp.eq.s32.totalorder %s26, 0
      %p163 = por %p161, %p162
      %s165 = sadd.s32 %s164, 1
      %p168 = scmp.eq.s32.totalorder %s20, 1
      %p169 = scmp.ne.s32.totalorder %s164, %s166
      %p170 = scmp.eq.s32.totalorder %s20, 0
      %p171 = por %p169, %p170
      %p172 = scmp.ne.s32.totalorder %s164, %s166
      %p173 = scmp.eq.s32.totalorder %s25, 1
      %p174 = por %p172, %p173
      %p175 = scmp.ne.s32.totalorder %s166, %s167
      %p176 = scmp.eq.s32.totalorder %s25, 0
      %p177 = por %p175, %p176
      %p178 = scmp.ne.s32.totalorder %s166, %s167
      %p179 = scmp.eq.s32.totalorder %s26, 1
      %p180 = por %p178, %p179
      %p182 = scmp.ne.s32.totalorder %s167, %s181
      %p183 = scmp.eq.s32.totalorder %s26, 0
      %p184 = por %p182, %p183
      %s186 = sadd.s32 %s185, 1
      %p189 = scmp.eq.s32.totalorder %s20, 1
      %p190 = scmp.ne.s32.totalorder %s185, %s187
      %p191 = scmp.eq.s32.totalorder %s20, 0
      %p192 = por %p190, %p191
      %p193 = scmp.ne.s32.totalorder %s185, %s187
      %p194 = scmp.eq.s32.totalorder %s25, 1
      %p195 = por %p193, %p194
      %p196 = scmp.ne.s32.totalorder %s187, %s188
      %p197 = scmp.eq.s32.totalorder %s25, 0
      %p198 = por %p196, %p197
      %p199 = scmp.ne.s32.totalorder %s187, %s188
      %p200 = scmp.eq.s32.totalorder %s26, 1
      %p201 = por %p199, %p200
      %p203 = scmp.ne.s32.totalorder %s188, %s202
      %p204 = scmp.eq.s32.totalorder %s26, 0
      %p205 = por %p203, %p204
      %s207 = sadd.s32 %s206, 1
      %p210 = scmp.eq.s32.totalorder %s20, 1
      %p211 = scmp.ne.s32.totalorder %s206, %s208
      %p212 = scmp.eq.s32.totalorder %s20, 0
      %p213 = por %p211, %p212
      %p214 = scmp.ne.s32.totalorder %s206, %s208
      %p215 = scmp.eq.s32.totalorder %s25, 1
      %p216 = por %p214, %p215
      %p217 = scmp.ne.s32.totalorder %s208, %s209
      %p218 = scmp.eq.s32.totalorder %s25, 0
      %p219 = por %p217, %p218
      %p220 = scmp.ne.s32.totalorder %s208, %s209
      %p221 = scmp.eq.s32.totalorder %s26, 1
      %p222 = por %p220, %p221
      %p224 = scmp.ne.s32.totalorder %s209, %s223
      %p225 = scmp.eq.s32.totalorder %s26, 0
      %p226 = por %p224, %p225
      %s228 = sadd.s32 %s227, 1
      %p231 = scmp.eq.s32.totalorder %s20, 1
      %p232 = scmp.ne.s32.totalorder %s227, %s229
      %p233 = scmp.eq.s32.totalorder %s20, 0
      %p234 = por %p232, %p233
      %p235 = scmp.ne.s32.totalorder %s227, %s229
      %p236 = scmp.eq.s32.totalorder %s25, 1
      %p237 = por %p235, %p236
      %p238 = scmp.ne.s32.totalorder %s229, %s230
      %p239 = scmp.eq.s32.totalorder %s25, 0
      %p240 = por %p238, %p239
      %p241 = scmp.ne.s32.totalorder %s229, %s230
      %p242 = scmp.eq.s32.totalorder %s26, 1
      %p243 = por %p241, %p242
      %p245 = scmp.ne.s32.totalorder %s230, %s244
      %p246 = scmp.eq.s32.totalorder %s26, 0
      %p247 = por %p245, %p246
      %s249 = sadd.s32 %s248, 1
      %p252 = scmp.eq.s32.totalorder %s20, 1
      %p253 = scmp.ne.s32.totalorder %s248, %s250
      %p254 = scmp.eq.s32.totalorder %s20, 0
      %p255 = por %p253, %p254
      %p256 = scmp.ne.s32.totalorder %s248, %s250
      %p257 = scmp.eq.s32.totalorder %s25, 1
      %p258 = por %p256, %p257
      %p259 = scmp.ne.s32.totalorder %s250, %s251
      %p260 = scmp.eq.s32.totalorder %s25, 0
      %p261 = por %p259, %p260
      %p262 = scmp.ne.s32.totalorder %s250, %s251
      %p263 = scmp.eq.s32.totalorder %s26, 1
      %p264 = por %p262, %p263
      %p266 = scmp.ne.s32.totalorder %s251, %s265
      %p267 = scmp.eq.s32.totalorder %s26, 0
      %p268 = por %p266, %p267
      %s270 = sadd.s32 %s269, 1
      %p273 = scmp.eq.s32.totalorder %s20, 1
      %p274 = scmp.ne.s32.totalorder %s269, %s271
      %p275 = scmp.eq.s32.totalorder %s20, 0
      %p276 = por %p274, %p275
      %p277 = scmp.ne.s32.totalorder %s269, %s271
      %p278 = scmp.eq.s32.totalorder %s25, 1
      %p279 = por %p277, %p278
      %p280 = scmp.ne.s32.totalorder %s271, %s272
      %p281 = scmp.eq.s32.totalorder %s25, 0
      %p282 = por %p280, %p281
      %p283 = scmp.ne.s32.totalorder %s271, %s272
      %p284 = scmp.eq.s32.totalorder %s26, 1
      %p285 = por %p283, %p284
      %p287 = scmp.ne.s32.totalorder %s272, %s286
      %p288 = scmp.eq.s32.totalorder %s26, 0
      %p289 = por %p287, %p288
      %s291 = sadd.s32 %s290, 1
      %p294 = scmp.eq.s32.totalorder %s20, 1
      %p295 = scmp.ne.s32.totalorder %s290, %s292
      %p296 = scmp.eq.s32.totalorder %s20, 0
      %p297 = por %p295, %p296
      %p298 = scmp.ne.s32.totalorder %s290, %s292
      %p299 = scmp.eq.s32.totalorder %s25, 1
      %p300 = por %p298, %p299
      %p301 = scmp.ne.s32.totalorder %s292, %s293
      %p302 = scmp.eq.s32.totalorder %s25, 0
      %p303 = por %p301, %p302
      %p304 = scmp.ne.s32.totalorder %s292, %s293
      %p305 = scmp.eq.s32.totalorder %s26, 1
      %p306 = por %p304, %p305
      %p308 = scmp.ne.s32.totalorder %s293, %s307
      %p309 = scmp.eq.s32.totalorder %s26, 0
      %p310 = por %p308, %p309
      %s312 = sadd.s32 %s311, 1
      %p315 = scmp.eq.s32.totalorder %s20, 1
      %p316 = scmp.ne.s32.totalorder %s311, %s313
      %p317 = scmp.eq.s32.totalorder %s20, 0
      %p318 = por %p316, %p317
      %p319 = scmp.ne.s32.totalorder %s311, %s313
      %p320 = scmp.eq.s32.totalorder %s25, 1
      %p321 = por %p319, %p320
      %p322 = scmp.ne.s32.totalorder %s313, %s314
      %p323 = scmp.eq.s32.totalorder %s25, 0
      %p324 = por %p322, %p323
      %p325 = scmp.ne.s32.totalorder %s313, %s314
      %p326 = scmp.eq.s32.totalorder %s26, 1
      %p327 = por %p325, %p326
      %p329 = scmp.ne.s32.totalorder %s314, %s328
      %p330 = scmp.eq.s32.totalorder %s26, 0
      %p331 = por %p329, %p330
      %s332 = ssub.s32 %s20, %s27
      %p333 = scmp.eq.s32.totalorder %s332, 0
      %s335 = sadd.s32 %s334, 1
      %s336 = scalar_select %p333, %s334, %s335
      %p339 = pneg %p333
      %p340 = scmp.eq.s32.totalorder %s20, 1
      %p341 = por %p339, %p340
      %p342 = scmp.ne.s32.totalorder %s334, %s337
      %p343 = scmp.eq.s32.totalorder %s20, 0
      %p344 = por %p342, %p343
      %p345 = scmp.ne.s32.totalorder %s334, %s337
      %p346 = scmp.eq.s32.totalorder %s25, 1
      %p347 = por %p345, %p346
      %p348 = scmp.ne.s32.totalorder %s337, %s338
      %p349 = scmp.eq.s32.totalorder %s25, 0
      %p350 = por %p348, %p349
      %p351 = scmp.ne.s32.totalorder %s337, %s338
      %p352 = scmp.eq.s32.totalorder %s26, 1
      %p353 = por %p351, %p352
      %p355 = scmp.ne.s32.totalorder %s338, %s354
      %p356 = scmp.eq.s32.totalorder %s26, 0
      %p357 = por %p355, %p356
      %p358 = scmp.le.s32.totalorder 1, %s20
      %p359 = scmp.lt.s32.totalorder %s20, 3
      %p360 = pnand %p358, %p359
      %p361 = pneg %p360
      // Predicated region
      $region9: #{lpmlp_forward.1} parent=5 // pred_check
        _
      $region10: #{lpmlp_forward.1} parent=5 // pred_check_branch
        %363 = sbr.rel (%p360) target = $region12
      $region11: #{lpmlp_forward.1} parent=5 // pred_region
        %s364 = ssub.s32 %s20, 1
        // Predicated region
        $region13: #{lpmlp_forward.1} parent=11 // pred_check
          %p365 = pneg %p93
        $region14: #{lpmlp_forward.1} parent=11 // pred_check_branch
          %367 = sbr.rel (%p365) target = $region16
        $region15: #{lpmlp_forward.1} parent=11 // pred_region
          _
        $region16: #{lpmlp_forward.1} parent=11 // pred_fallthru
          _
        // Predicated region
        $region17: #{lpmlp_forward.1} parent=11 // pred_check
          %p368 = pneg %p114
        $region18: #{lpmlp_forward.1} parent=11 // pred_check_branch
          %370 = sbr.rel (%p368) target = $region20
        $region19: #{lpmlp_forward.1} parent=11 // pred_region
          _
        $region20: #{lpmlp_forward.1} parent=11 // pred_fallthru
          _
        // Predicated region
        $region21: #{lpmlp_forward.1} parent=11 // pred_check
          %p371 = pneg %p135
        $region22: #{lpmlp_forward.1} parent=11 // pred_check_branch
          %373 = sbr.rel (%p371) target = $region24
        $region23: #{lpmlp_forward.1} parent=11 // pred_region
          _
        $region24: #{lpmlp_forward.1} parent=11 // pred_fallthru
          _
        // Predicated region
        $region25: #{lpmlp_forward.1} parent=11 // pred_check
          %p374 = pneg %p156
        $region26: #{lpmlp_forward.1} parent=11 // pred_check_branch
          %376 = sbr.rel (%p374) target = $region28
        $region27: #{lpmlp_forward.1} parent=11 // pred_region
          _
        $region28: #{lpmlp_forward.1} parent=11 // pred_fallthru
          _
        // Predicated region
        $region29: #{lpmlp_forward.1} parent=11 // pred_check
          %p377 = pneg %p177
        $region30: #{lpmlp_forward.1} parent=11 // pred_check_branch
          %379 = sbr.rel (%p377) target = $region32
        $region31: #{lpmlp_forward.1} parent=11 // pred_region
          _
        $region32: #{lpmlp_forward.1} parent=11 // pred_fallthru
          _
        // Predicated region
        $region33: #{lpmlp_forward.1} parent=11 // pred_check
          %p380 = pneg %p198
        $region34: #{lpmlp_forward.1} parent=11 // pred_check_branch
          %382 = sbr.rel (%p380) target = $region36
        $region35: #{lpmlp_forward.1} parent=11 // pred_region
          _
        $region36: #{lpmlp_forward.1} parent=11 // pred_fallthru
          _
        // Predicated region
        $region37: #{lpmlp_forward.1} parent=11 // pred_check
          %p383 = pneg %p219
        $region38: #{lpmlp_forward.1} parent=11 // pred_check_branch
          %385 = sbr.rel (%p383) target = $region40
        $region39: #{lpmlp_forward.1} parent=11 // pred_region
          _
        $region40: #{lpmlp_forward.1} parent=11 // pred_fallthru
          _
        // Predicated region
        $region41: #{lpmlp_forward.1} parent=11 // pred_check
          %p386 = pneg %p240
        $region42: #{lpmlp_forward.1} parent=11 // pred_check_branch
          %388 = sbr.rel (%p386) target = $region44
        $region43: #{lpmlp_forward.1} parent=11 // pred_region
          _
        $region44: #{lpmlp_forward.1} parent=11 // pred_fallthru
          _
        // Predicated region
        $region45: #{lpmlp_forward.1} parent=11 // pred_check
          %p389 = pneg %p261
        $region46: #{lpmlp_forward.1} parent=11 // pred_check_branch
          %391 = sbr.rel (%p389) target = $region48
        $region47: #{lpmlp_forward.1} parent=11 // pred_region
          _
        $region48: #{lpmlp_forward.1} parent=11 // pred_fallthru
          _
        // Predicated region
        $region49: #{lpmlp_forward.1} parent=11 // pred_check
          %p392 = pneg %p282
        $region50: #{lpmlp_forward.1} parent=11 // pred_check_branch
          %394 = sbr.rel (%p392) target = $region52
        $region51: #{lpmlp_forward.1} parent=11 // pred_region
          _
        $region52: #{lpmlp_forward.1} parent=11 // pred_fallthru
          _
        // Predicated region
        $region53: #{lpmlp_forward.1} parent=11 // pred_check
          %p395 = pneg %p303
        $region54: #{lpmlp_forward.1} parent=11 // pred_check_branch
          %397 = sbr.rel (%p395) target = $region56
        $region55: #{lpmlp_forward.1} parent=11 // pred_region
          _
        $region56: #{lpmlp_forward.1} parent=11 // pred_fallthru
          _
        // Predicated region
        $region57: #{lpmlp_forward.1} parent=11 // pred_check
          %p398 = pneg %p324
        $region58: #{lpmlp_forward.1} parent=11 // pred_check_branch
          %400 = sbr.rel (%p398) target = $region60
        $region59: #{lpmlp_forward.1} parent=11 // pred_region
          _
        $region60: #{lpmlp_forward.1} parent=11 // pred_fallthru
          _
      $region12: #{lpmlp_forward.1} parent=5 // pred_fallthru
        _
      %p401 = scmp.lt.s32.totalorder %s20, 2
      // Predicated region
      $region61: #{lpmlp_forward.1} parent=5 // pred_check
        %p402 = pneg %p401
      $region62: #{lpmlp_forward.1} parent=5 // pred_check_branch
        %404 = sbr.rel (%p402) target = $region64
      $region63: #{lpmlp_forward.1} parent=5 // pred_region
        // Predicated region
        $region65: #{lpmlp_forward.1} parent=63 // pred_check
          %p405 = pneg %p40
        $region66: #{lpmlp_forward.1} parent=63 // pred_check_branch
          %407 = sbr.rel (%p405) target = $region68
        $region67: #{lpmlp_forward.1} parent=63 // pred_region
          %s408 = smul.u32 20, %s20
          %s409 = ssub.s32 38, %s408
          %p410 = scmp.lt.s32.totalorder %s409, 20
          %s411 = scalar_select %p410, %s409, 20
          %s412 = smul.u32 128, %s411
          %p413 = scmp.lt.s32.totalorder %s408, 37
          %s414 = scalar_select %p413, %s408, 37
          %s415 = smul.addr %s414, 8
          %s416 = scalar_lea.vmem %s0, %s415
          %s417 = smul.u32 20, %s20
          %s418 = ssub.s32 38, %s417
          %p419 = scmp.lt.s32.totalorder %s418, 20
          %s420 = scalar_select %p419, %s418, 20
          %s421 = smul.u32 128, %s420
        $region68: #{lpmlp_forward.1} parent=63 // pred_fallthru
          _
        // Predicated region
        $region69: #{lpmlp_forward.1} parent=63 // pred_check
          %p422 = pneg %p66
        $region70: #{lpmlp_forward.1} parent=63 // pred_check_branch
          %424 = sbr.rel (%p422) target = $region72
        $region71: #{lpmlp_forward.1} parent=63 // pred_region
          %s425 = smul.u32 20, %s20
          %s426 = ssub.s32 38, %s425
          %p427 = scmp.lt.s32.totalorder %s426, 20
          %s428 = scalar_select %p427, %s426, 20
          %s429 = smul.u32 128, %s428
          %p430 = scmp.lt.s32.totalorder %s425, 37
          %s431 = scalar_select %p430, %s425, 37
          %s432 = smul.addr %s431, 8
          %s433 = scalar_lea.vmem %s1, %s432
          %s434 = smul.u32 20, %s20
          %s435 = ssub.s32 38, %s434
          %p436 = scmp.lt.s32.totalorder %s435, 20
          %s437 = scalar_select %p436, %s435, 20
          %s438 = smul.u32 128, %s437
        $region72: #{lpmlp_forward.1} parent=63 // pred_fallthru
          _
      $region64: #{lpmlp_forward.1} parent=5 // pred_fallthru
        _
      %p439 = scmp.le.s32.totalorder 1, %s20
      %p440 = scmp.lt.s32.totalorder %s20, 3
      %p441 = pnand %p439, %p440
      %p442 = pneg %p441
      // Predicated region
      $region73: #{lpmlp_forward.1} parent=5 // pred_check
        _
      $region74: #{lpmlp_forward.1} parent=5 // pred_check_branch
        %444 = sbr.rel (%p441) target = $region76
      $region75: #{lpmlp_forward.1} parent=5 // pred_region
        %s445 = ssub.s32 %s20, 1
        %s446 = smul.u32 20, %s25
        %s447 = ssub.s32 38, %s446
        %p448 = scmp.lt.s32.totalorder %s447, 20
        %s449 = scalar_select %p448, %s447, 20
        %s450 = smul.u32 128, %s449
        %p451 = scmp.lt.s32.totalorder %s446, 37
        %s452 = scalar_select %p451, %s446, 37
        %s453 = smul.addr %s452, 8
        %s454 = scalar_lea.vmem %s0, %s453
        %p455 = pneg %p46
        %p456 = pneg %p43
        %s457 = smul.u32 20, %s25
        %s458 = ssub.s32 38, %s457
        %p459 = scmp.lt.s32.totalorder %s458, 20
        %s460 = scalar_select %p459, %s458, 20
        %s461 = smul.u32 128, %s460
        %p462 = scmp.lt.s32.totalorder %s457, 37
        %s463 = scalar_select %p462, %s457, 37
        %s464 = smul.addr %s463, 8
        %s465 = scalar_lea.vmem %s1, %s464
        %p466 = pneg %p72
        %p467 = pneg %p69
        %p468 = pneg %p93
        %p469 = pneg %p90
        %p470 = pneg %p114
        %p471 = pneg %p111
        %p472 = pneg %p135
        %p473 = pneg %p132
        %p474 = pneg %p156
        %p475 = pneg %p153
        %p476 = pneg %p177
        %p477 = pneg %p174
        %p478 = pneg %p198
        %p479 = pneg %p195
        %p480 = pneg %p219
        %p481 = pneg %p216
        %p482 = pneg %p240
        %p483 = pneg %p237
        %p484 = pneg %p261
        %p485 = pneg %p258
        %p486 = pneg %p282
        %p487 = pneg %p279
        %p488 = pneg %p303
        %p489 = pneg %p300
        %p490 = pneg %p324
        %p491 = pneg %p321
        %p492 = pneg %p350
        %p493 = pneg %p347
        %s494 = sand.u32 %s337, 1
        %s495 = sand.u32 %s337, 1
        %s496 = smul.addr %s495, 80
        %s497 = scalar_lea.vmem [#allocation2], %s496
        %s498 = smul.u32 20, %s25
        %s499 = ssub.s32 38, %s498
        %p500 = scmp.lt.s32.totalorder %s499, 20
        %s501 = scalar_select %p500, %s499, 20
        %s502 = smul.u32 128, %s501
        %p503 = scmp.lt.s32.totalorder %s498, 37
        %s504 = scalar_select %p503, %s498, 37
        %s505 = smul.addr %s504, 8
        %s506 = scalar_lea.vmem %s0, %s505
        %s507 = smul.u32 20, %s25
        %s508 = ssub.s32 38, %s507
        %p509 = scmp.lt.s32.totalorder %s508, 20
        %s510 = scalar_select %p509, %s508, 20
        %s511 = smul.u32 128, %s510
        %s512 = smul.u32 20, %s25
        %s513 = ssub.s32 38, %s512
        %p514 = scmp.lt.s32.totalorder %s513, 20
        %s515 = scalar_select %p514, %s513, 20
        %s516 = smul.u32 128, %s515
        %p517 = scmp.lt.s32.totalorder %s512, 37
        %s518 = scalar_select %p517, %s512, 37
        %s519 = smul.addr %s518, 8
        %s520 = scalar_lea.vmem %s1, %s519
        %s521 = smul.u32 20, %s25
        %s522 = ssub.s32 38, %s521
        %p523 = scmp.lt.s32.totalorder %s522, 20
        %s524 = scalar_select %p523, %s522, 20
        %s525 = smul.u32 128, %s524
        %s526 = smul.u32 20, %s25
        %s527 = ssub.s32 38, %s526
        %p528 = scmp.lt.s32.totalorder %s527, 20
        %s529 = scalar_select %p528, %s527, 20
        %s530 = smul.u32 64, %s529
        %v532 = vld [vmem:[%s506] sm:$0xff]
        %v533 = vld [vmem:[%s506 + $0x8] sm:$0xff]
        %v534 = vld [vmem:[%s506 + $0x10] sm:$0xff]
        %v535 = vld [vmem:[%s506 + $0x18] sm:$0xff]
        %v536 = vld [vmem:[%s506 + $0x20] sm:$0xff]
        %v537 = vld [vmem:[%s506 + $0x28] sm:$0xff]
        %v538 = vld [vmem:[%s506 + $0x30] sm:$0xff]
        %v539 = vld [vmem:[%s506 + $0x38] sm:$0xff]
        %v540 = vld [vmem:[%s506 + $0x40] sm:$0xff]
        %v541 = vld [vmem:[%s506 + $0x48] sm:$0xff]
        %v542 = vld [vmem:[%s506 + $0x50] sm:$0xff]
        %v543 = vld [vmem:[%s506 + $0x58] sm:$0xff]
        %v544 = vld [vmem:[%s506 + $0x60] sm:$0xff]
        %v545 = vld [vmem:[%s506 + $0x68] sm:$0xff]
        %v546 = vld [vmem:[%s506 + $0x70] sm:$0xff]
        %v547 = vld [vmem:[%s506 + $0x78] sm:$0xff]
        %v548 = vld [vmem:[%s506 + $0x80] sm:$0xff]
        %v549 = vld [vmem:[%s506 + $0x88] sm:$0xff]
        %v550 = vld [vmem:[%s506 + $0x90] sm:$0xff]
        %v551 = vld [vmem:[%s506 + $0x98] sm:$0xff]
        %v552 = vpack.c.bf16 %v533, %v532
        %v553 = vpack.c.bf16 %v535, %v534
        %v554 = vpack.c.bf16 %v537, %v536
        %v555 = vpack.c.bf16 %v539, %v538
        %v556 = vpack.c.bf16 %v541, %v540
        %v557 = vpack.c.bf16 %v543, %v542
        %v558 = vpack.c.bf16 %v545, %v544
        %v559 = vpack.c.bf16 %v547, %v546
        %v560 = vpack.c.bf16 %v549, %v548
        %v561 = vpack.c.bf16 %v551, %v550
        %v562 = vld [vmem:[%s520] sm:$0xff]
        %v563 = vld [vmem:[%s520 + $0x8] sm:$0xff]
        %v564 = vld [vmem:[%s520 + $0x10] sm:$0xff]
        %v565 = vld [vmem:[%s520 + $0x18] sm:$0xff]
        %v566 = vld [vmem:[%s520 + $0x20] sm:$0xff]
        %v567 = vld [vmem:[%s520 + $0x28] sm:$0xff]
        %v568 = vld [vmem:[%s520 + $0x30] sm:$0xff]
        %v569 = vld [vmem:[%s520 + $0x38] sm:$0xff]
        %v570 = vld [vmem:[%s520 + $0x40] sm:$0xff]
        %v571 = vld [vmem:[%s520 + $0x48] sm:$0xff]
        %v572 = vld [vmem:[%s520 + $0x50] sm:$0xff]
        %v573 = vld [vmem:[%s520 + $0x58] sm:$0xff]
        %v574 = vld [vmem:[%s520 + $0x60] sm:$0xff]
        %v575 = vld [vmem:[%s520 + $0x68] sm:$0xff]
        %v576 = vld [vmem:[%s520 + $0x70] sm:$0xff]
        %v577 = vld [vmem:[%s520 + $0x78] sm:$0xff]
        %v578 = vld [vmem:[%s520 + $0x80] sm:$0xff]
        %v579 = vld [vmem:[%s520 + $0x88] sm:$0xff]
        %v580 = vld [vmem:[%s520 + $0x90] sm:$0xff]
        %v581 = vld [vmem:[%s520 + $0x98] sm:$0xff]
        %v582 = vpack.c.bf16 %v563, %v562
        %v583 = vpack.c.bf16 %v565, %v564
        %v584 = vpack.c.bf16 %v567, %v566
        %v585 = vpack.c.bf16 %v569, %v568
        %v586 = vpack.c.bf16 %v571, %v570
        %v587 = vpack.c.bf16 %v573, %v572
        %v588 = vpack.c.bf16 %v575, %v574
        %v589 = vpack.c.bf16 %v577, %v576
        %v590 = vpack.c.bf16 %v579, %v578
        %v591 = vpack.c.bf16 %v581, %v580
        %v592 = vld [vmem:[%s2] sm:$0xf]
        %v593 = vld [vmem:[%s2 + $0x4] sm:$0xf]
        %v594 = vld [vmem:[%s3] sm:$0x1]
        %v596 = vlaneseq
        %v597 = vshrl.u32 %v596, 7
        %v598 = vsub.s32 0, %v597
        %v599 = vrot.slane %v594, %v598
        %v603 = vunpack.c.l.b16 %v592
        %v604 = vunpack.c.l.b16 %v593
        %v605 = vpack.c.b16 %v604, %v603
        %vm607 = vcmask 130048
        %v609 = vsel %vm607, %v552, 0
        %v612 = vsel %vm607, %v553, 0
        %v615 = vsel %vm607, %v554, 0
        %v618 = vsel %vm607, %v555, 0
        %v621 = vsel %vm607, %v556, 0
        %v624 = vsel %vm607, %v557, 0
        %v627 = vsel %vm607, %v558, 0
        %v630 = vsel %vm607, %v559, 0
        %v633 = vsel %vm607, %v560, 0
        %v636 = vsel %vm607, %v561, 0
        %638 = vmatprep.subr.bf16.mxu0 0
        %639 = vmatpush1.bf16.msra.mxu0 0
        %640 = vmatprep.subr.bf16.mxu0 0
        %641 = vmatpush1.bf16.msra.mxu0 0
        %642 = vmatprep.subr.bf16.mxu0 0
        %643 = vmatpush1.bf16.msra.mxu0 0
        %644 = vmatprep.subr.bf16.mxu0 0
        %645 = vmatpush1.bf16.msra.mxu0 0
        %646 = vmatprep.subr.bf16.mxu0 0
        %647 = vmatpush1.bf16.msra.mxu0 0
        %648 = vmatprep.subr.bf16.mxu0 0
        %649 = vmatpush1.bf16.msra.mxu0 0
        %650 = vmatprep.subr.bf16.mxu0 0
        %651 = vmatpush1.bf16.msra.mxu0 0
        %652 = vmatprep.subr.bf16.mxu0 0
        %653 = vmatpush1.bf16.msra.mxu0 %v605
        %654 = vmatprep.subr.bf16.mxu0 0
        %655 = vmatpush2.bf16.msra.mxu0 0
        %656 = vmatprep.subr.bf16.mxu0 0
        %657 = vmatpush2.bf16.msra.mxu0 0
        %658 = vmatprep.subr.bf16.mxu0 0
        %659 = vmatpush2.bf16.msra.mxu0 0
        %660 = vmatprep.subr.bf16.mxu0 0
        %661 = vmatpush2.bf16.msra.mxu0 0
        %662 = vmatprep.subr.bf16.mxu0 0
        %663 = vmatpush2.bf16.msra.mxu0 0
        %664 = vmatprep.subr.bf16.mxu0 0
        %665 = vmatpush2.bf16.msra.mxu0 0
        %666 = vmatprep.subr.bf16.mxu0 0
        %667 = vmatpush2.bf16.msra.mxu0 0
        %668 = vmatprep.subr.bf16.mxu0 0
        %669 = vmatpush2.bf16.msra.mxu0 0
        %670 = vmatprep.mubr.bf16.mxu0 0
        %671 = vmatmul.mubr.bf16.gmra.mxu0 %v609
        %v672 = vpop.f32.mrf.mxu0
        %v673 = vadd.f32 %v599, %v672
        %v674 = vpop.f32.mrf.mxu0
        %v675 = vpop.f32.mrf.mxu0
        %v676 = vadd.f32 %v599, %v675
        %v677 = vpop.f32.mrf.mxu0
        %678 = vmatprep.mubr.bf16.mxu0 0
        %679 = vmatmul.mubr.bf16.gmra.mxu0 %v612
        %v680 = vpop.f32.mrf.mxu0
        %v681 = vadd.f32 %v599, %v680
        %v682 = vpop.f32.mrf.mxu0
        %v683 = vpop.f32.mrf.mxu0
        %v684 = vadd.f32 %v599, %v683
        %v685 = vpop.f32.mrf.mxu0
        %686 = vmatprep.mubr.bf16.mxu0 0
        %687 = vmatmul.mubr.bf16.gmra.mxu0 %v615
        %v688 = vpop.f32.mrf.mxu0
        %v689 = vadd.f32 %v599, %v688
        %v690 = vpop.f32.mrf.mxu0
        %v691 = vpop.f32.mrf.mxu0
        %v692 = vadd.f32 %v599, %v691
        %v693 = vpop.f32.mrf.mxu0
        %694 = vmatprep.mubr.bf16.mxu0 0
        %695 = vmatmul.mubr.bf16.gmra.mxu0 %v618
        %v696 = vpop.f32.mrf.mxu0
        %v697 = vadd.f32 %v599, %v696
        %v698 = vpop.f32.mrf.mxu0
        %v699 = vpop.f32.mrf.mxu0
        %v700 = vadd.f32 %v599, %v699
        %v701 = vpop.f32.mrf.mxu0
        %702 = vmatprep.mubr.bf16.mxu0 0
        %703 = vmatmul.mubr.bf16.gmra.mxu0 %v621
        %v704 = vpop.f32.mrf.mxu0
        %v705 = vadd.f32 %v599, %v704
        %v706 = vpop.f32.mrf.mxu0
        %v707 = vpop.f32.mrf.mxu0
        %v708 = vadd.f32 %v599, %v707
        %v709 = vpop.f32.mrf.mxu0
        %710 = vmatprep.mubr.bf16.mxu0 0
        %711 = vmatmul.mubr.bf16.gmra.mxu0 %v624
        %v712 = vpop.f32.mrf.mxu0
        %v713 = vadd.f32 %v599, %v712
        %v714 = vpop.f32.mrf.mxu0
        %v715 = vpop.f32.mrf.mxu0
        %v716 = vadd.f32 %v599, %v715
        %v717 = vpop.f32.mrf.mxu0
        %718 = vmatprep.mubr.bf16.mxu0 0
        %719 = vmatmul.mubr.bf16.gmra.mxu0 %v627
        %v720 = vpop.f32.mrf.mxu0
        %v721 = vadd.f32 %v599, %v720
        %v722 = vpop.f32.mrf.mxu0
        %v723 = vpop.f32.mrf.mxu0
        %v724 = vadd.f32 %v599, %v723
        %v725 = vpop.f32.mrf.mxu0
        %726 = vmatprep.mubr.bf16.mxu0 0
        %727 = vmatmul.mubr.bf16.gmra.mxu0 %v630
        %v728 = vpop.f32.mrf.mxu0
        %v729 = vadd.f32 %v599, %v728
        %v730 = vpop.f32.mrf.mxu0
        %v731 = vpop.f32.mrf.mxu0
        %v732 = vadd.f32 %v599, %v731
        %v733 = vpop.f32.mrf.mxu0
        %734 = vmatprep.mubr.bf16.mxu0 0
        %735 = vmatmul.mubr.bf16.gmra.mxu0 %v633
        %v736 = vpop.f32.mrf.mxu0
        %v737 = vadd.f32 %v599, %v736
        %v738 = vpop.f32.mrf.mxu0
        %v739 = vpop.f32.mrf.mxu0
        %v740 = vadd.f32 %v599, %v739
        %v741 = vpop.f32.mrf.mxu0
        %742 = vmatprep.mubr.bf16.mxu0 0
        %743 = vmatmul.mubr.bf16.gmra.mxu0 %v636
        %v744 = vpop.f32.mrf.mxu0
        %v745 = vadd.f32 %v599, %v744
        %v746 = vpop.f32.mrf.mxu0
        %v747 = vpop.f32.mrf.mxu0
        %v748 = vadd.f32 %v599, %v747
        %v749 = vpop.f32.mrf.mxu0
        %750 = vdwg.mxu0
        %v751 = vmax.f32 %v673, 0.0
        %v752 = vmax.f32 %v676, 0.0
        %v753 = vmax.f32 %v681, 0.0
        %v754 = vmax.f32 %v684, 0.0
        %v755 = vmax.f32 %v689, 0.0
        %v756 = vmax.f32 %v692, 0.0
        %v757 = vmax.f32 %v697, 0.0
        %v758 = vmax.f32 %v700, 0.0
        %v759 = vmax.f32 %v705, 0.0
        %v760 = vmax.f32 %v708, 0.0
        %v761 = vmax.f32 %v713, 0.0
        %v762 = vmax.f32 %v716, 0.0
        %v763 = vmax.f32 %v721, 0.0
        %v764 = vmax.f32 %v724, 0.0
        %v765 = vmax.f32 %v729, 0.0
        %v766 = vmax.f32 %v732, 0.0
        %v767 = vmax.f32 %v737, 0.0
        %v768 = vmax.f32 %v740, 0.0
        %v769 = vmax.f32 %v745, 0.0
        %v770 = vmax.f32 %v748, 0.0
        %v771 = vpack.c.bf16 %v752, %v751
        %v772 = vpack.c.bf16 %v754, %v753
        %v773 = vpack.c.bf16 %v756, %v755
        %v774 = vpack.c.bf16 %v758, %v757
        %v775 = vpack.c.bf16 %v760, %v759
        %v776 = vpack.c.bf16 %v762, %v761
        %v777 = vpack.c.bf16 %v764, %v763
        %v778 = vpack.c.bf16 %v766, %v765
        %v779 = vpack.c.bf16 %v768, %v767
        %v780 = vpack.c.bf16 %v770, %v769
        %v781 = vld [vmem:[%s4] sm:$0xf]
        %v782 = vld [vmem:[%s4 + $0x4] sm:$0xf]
        %v783 = vld [vmem:[%s4 + $0x8] sm:$0xf]
        %v784 = vld [vmem:[%s4 + $0xc] sm:$0xf]
        %v785 = vld [vmem:[%s4 + $0x10] sm:$0xf]
        %v786 = vld [vmem:[%s4 + $0x14] sm:$0xf]
        %v787 = vld [vmem:[%s4 + $0x18] sm:$0xf]
        %v788 = vld [vmem:[%s4 + $0x1c] sm:$0xf]
        %v789 = vld [vmem:[%s4 + $0x20] sm:$0xf]
        %v790 = vld [vmem:[%s4 + $0x24] sm:$0xf]
        %v791 = vld [vmem:[%s4 + $0x28] sm:$0xf]
        %v792 = vld [vmem:[%s4 + $0x2c] sm:$0xf]
        %v793 = vld [vmem:[%s4 + $0x30] sm:$0xf]
        %v794 = vld [vmem:[%s4 + $0x34] sm:$0xf]
        %v795 = vld [vmem:[%s4 + $0x38] sm:$0xf]
        %v796 = vld [vmem:[%s4 + $0x3c] sm:$0xf]
        %v797 = vld [vmem:[%s5] sm:$0x1]
        %v799 = vlaneseq
        %v800 = vshrl.u32 %v799, 7
        %v801 = vsub.s32 0, %v800
        %v802 = vrot.slane %v797, %v801
        %v820 = vunpack.c.l.b16 %v781
        %v821 = vunpack.c.l.b16 %v782
        %v822 = vunpack.c.l.b16 %v783
        %v823 = vunpack.c.l.b16 %v784
        %v824 = vunpack.c.l.b16 %v785
        %v825 = vunpack.c.l.b16 %v786
        %v826 = vunpack.c.l.b16 %v787
        %v827 = vunpack.c.l.b16 %v788
        %v828 = vunpack.c.l.b16 %v789
        %v829 = vunpack.c.l.b16 %v790
        %v830 = vunpack.c.l.b16 %v791
        %v831 = vunpack.c.l.b16 %v792
        %v832 = vunpack.c.l.b16 %v793
        %v833 = vunpack.c.l.b16 %v794
        %v834 = vunpack.c.l.b16 %v795
        %v835 = vunpack.c.l.b16 %v796
        %v836 = vpack.c.b16 %v821, %v820
        %v837 = vpack.c.b16 %v823, %v822
        %v838 = vpack.c.b16 %v825, %v824
        %v839 = vpack.c.b16 %v827, %v826
        %v840 = vpack.c.b16 %v829, %v828
        %v841 = vpack.c.b16 %v831, %v830
        %v842 = vpack.c.b16 %v833, %v832
        %v843 = vpack.c.b16 %v835, %v834
        %852 = vmatprep.subr.bf16.mxu0 0
        %853 = vmatpush1.bf16.msra.mxu0 %v843
        %854 = vmatprep.subr.bf16.mxu0 0
        %855 = vmatpush1.bf16.msra.mxu0 %v842
        %856 = vmatprep.subr.bf16.mxu0 0
        %857 = vmatpush1.bf16.msra.mxu0 %v841
        %858 = vmatprep.subr.bf16.mxu0 0
        %859 = vmatpush1.bf16.msra.mxu0 %v840
        %860 = vmatprep.subr.bf16.mxu0 0
        %861 = vmatpush1.bf16.msra.mxu0 %v839
        %862 = vmatprep.subr.bf16.mxu0 0
        %863 = vmatpush1.bf16.msra.mxu0 %v838
        %864 = vmatprep.subr.bf16.mxu0 0
        %865 = vmatpush1.bf16.msra.mxu0 %v837
        %866 = vmatprep.subr.bf16.mxu0 0
        %867 = vmatpush1.bf16.msra.mxu0 %v836
        %868 = vmatprep.subr.bf16.mxu0 0
        %869 = vmatpush2.bf16.msra.mxu0 0
        %870 = vmatprep.subr.bf16.mxu0 0
        %871 = vmatpush2.bf16.msra.mxu0 0
        %872 = vmatprep.subr.bf16.mxu0 0
        %873 = vmatpush2.bf16.msra.mxu0 0
        %874 = vmatprep.subr.bf16.mxu0 0
        %875 = vmatpush2.bf16.msra.mxu0 0
        %876 = vmatprep.subr.bf16.mxu0 0
        %877 = vmatpush2.bf16.msra.mxu0 0
        %878 = vmatprep.subr.bf16.mxu0 0
        %879 = vmatpush2.bf16.msra.mxu0 0
        %880 = vmatprep.subr.bf16.mxu0 0
        %881 = vmatpush2.bf16.msra.mxu0 0
        %882 = vmatprep.subr.bf16.mxu0 0
        %883 = vmatpush2.bf16.msra.mxu0 0
        %884 = vmatprep.mubr.bf16.mxu0 0
        %885 = vmatmul.mubr.bf16.gmra.mxu0 %v771
        %v886 = vpop.f32.mrf.mxu0
        %v887 = vadd.f32 %v802, %v886
        %v888 = vpop.f32.mrf.mxu0
        %v889 = vpop.f32.mrf.mxu0
        %v890 = vadd.f32 %v802, %v889
        %v891 = vpop.f32.mrf.mxu0
        %892 = vmatprep.mubr.bf16.mxu0 0
        %893 = vmatmul.mubr.bf16.gmra.mxu0 %v772
        %v894 = vpop.f32.mrf.mxu0
        %v895 = vadd.f32 %v802, %v894
        %v896 = vpop.f32.mrf.mxu0
        %v897 = vpop.f32.mrf.mxu0
        %v898 = vadd.f32 %v802, %v897
        %v899 = vpop.f32.mrf.mxu0
        %900 = vmatprep.mubr.bf16.mxu0 0
        %901 = vmatmul.mubr.bf16.gmra.mxu0 %v773
        %v902 = vpop.f32.mrf.mxu0
        %v903 = vadd.f32 %v802, %v902
        %v904 = vpop.f32.mrf.mxu0
        %v905 = vpop.f32.mrf.mxu0
        %v906 = vadd.f32 %v802, %v905
        %v907 = vpop.f32.mrf.mxu0
        %908 = vmatprep.mubr.bf16.mxu0 0
        %909 = vmatmul.mubr.bf16.gmra.mxu0 %v774
        %v910 = vpop.f32.mrf.mxu0
        %v911 = vadd.f32 %v802, %v910
        %v912 = vpop.f32.mrf.mxu0
        %v913 = vpop.f32.mrf.mxu0
        %v914 = vadd.f32 %v802, %v913
        %v915 = vpop.f32.mrf.mxu0
        %916 = vmatprep.mubr.bf16.mxu0 0
        %917 = vmatmul.mubr.bf16.gmra.mxu0 %v775
        %v918 = vpop.f32.mrf.mxu0
        %v919 = vadd.f32 %v802, %v918
        %v920 = vpop.f32.mrf.mxu0
        %v921 = vpop.f32.mrf.mxu0
        %v922 = vadd.f32 %v802, %v921
        %v923 = vpop.f32.mrf.mxu0
        %924 = vmatprep.mubr.bf16.mxu0 0
        %925 = vmatmul.mubr.bf16.gmra.mxu0 %v776
        %v926 = vpop.f32.mrf.mxu0
        %v927 = vadd.f32 %v802, %v926
        %v928 = vpop.f32.mrf.mxu0
        %v929 = vpop.f32.mrf.mxu0
        %v930 = vadd.f32 %v802, %v929
        %v931 = vpop.f32.mrf.mxu0
        %932 = vmatprep.mubr.bf16.mxu0 0
        %933 = vmatmul.mubr.bf16.gmra.mxu0 %v777
        %v934 = vpop.f32.mrf.mxu0
        %v935 = vadd.f32 %v802, %v934
        %v936 = vpop.f32.mrf.mxu0
        %v937 = vpop.f32.mrf.mxu0
        %v938 = vadd.f32 %v802, %v937
        %v939 = vpop.f32.mrf.mxu0
        %940 = vmatprep.mubr.bf16.mxu0 0
        %941 = vmatmul.mubr.bf16.gmra.mxu0 %v778
        %v942 = vpop.f32.mrf.mxu0
        %v943 = vadd.f32 %v802, %v942
        %v944 = vpop.f32.mrf.mxu0
        %v945 = vpop.f32.mrf.mxu0
        %v946 = vadd.f32 %v802, %v945
        %v947 = vpop.f32.mrf.mxu0
        %948 = vmatprep.mubr.bf16.mxu0 0
        %949 = vmatmul.mubr.bf16.gmra.mxu0 %v779
        %v950 = vpop.f32.mrf.mxu0
        %v951 = vadd.f32 %v802, %v950
        %v952 = vpop.f32.mrf.mxu0
        %v953 = vpop.f32.mrf.mxu0
        %v954 = vadd.f32 %v802, %v953
        %v955 = vpop.f32.mrf.mxu0
        %956 = vmatprep.mubr.bf16.mxu0 0
        %957 = vmatmul.mubr.bf16.gmra.mxu0 %v780
        %v958 = vpop.f32.mrf.mxu0
        %v959 = vadd.f32 %v802, %v958
        %v960 = vpop.f32.mrf.mxu0
        %v961 = vpop.f32.mrf.mxu0
        %v962 = vadd.f32 %v802, %v961
        %v963 = vpop.f32.mrf.mxu0
        %964 = vdwg.mxu0
        %v965 = vmax.f32 %v887, 0.0
        %v966 = vmax.f32 %v890, 0.0
        %v967 = vmax.f32 %v895, 0.0
        %v968 = vmax.f32 %v898, 0.0
        %v969 = vmax.f32 %v903, 0.0
        %v970 = vmax.f32 %v906, 0.0
        %v971 = vmax.f32 %v911, 0.0
        %v972 = vmax.f32 %v914, 0.0
        %v973 = vmax.f32 %v919, 0.0
        %v974 = vmax.f32 %v922, 0.0
        %v975 = vmax.f32 %v927, 0.0
        %v976 = vmax.f32 %v930, 0.0
        %v977 = vmax.f32 %v935, 0.0
        %v978 = vmax.f32 %v938, 0.0
        %v979 = vmax.f32 %v943, 0.0
        %v980 = vmax.f32 %v946, 0.0
        %v981 = vmax.f32 %v951, 0.0
        %v982 = vmax.f32 %v954, 0.0
        %v983 = vmax.f32 %v959, 0.0
        %v984 = vmax.f32 %v962, 0.0
        %v985 = vpack.c.bf16 %v966, %v965
        %v986 = vpack.c.bf16 %v968, %v967
        %v987 = vpack.c.bf16 %v970, %v969
        %v988 = vpack.c.bf16 %v972, %v971
        %v989 = vpack.c.bf16 %v974, %v973
        %v990 = vpack.c.bf16 %v976, %v975
        %v991 = vpack.c.bf16 %v978, %v977
        %v992 = vpack.c.bf16 %v980, %v979
        %v993 = vpack.c.bf16 %v982, %v981
        %v994 = vpack.c.bf16 %v984, %v983
        %v995 = vld [vmem:[%s6] sm:$0xf]
        %v996 = vld [vmem:[%s6 + $0x4] sm:$0xf]
        %v997 = vld [vmem:[%s6 + $0x8] sm:$0xf]
        %v998 = vld [vmem:[%s6 + $0xc] sm:$0xf]
        %v999 = vld [vmem:[%s6 + $0x10] sm:$0xf]
        %v1000 = vld [vmem:[%s6 + $0x14] sm:$0xf]
        %v1001 = vld [vmem:[%s6 + $0x18] sm:$0xf]
        %v1002 = vld [vmem:[%s6 + $0x1c] sm:$0xf]
        %v1003 = vld [vmem:[%s6 + $0x20] sm:$0xf]
        %v1004 = vld [vmem:[%s6 + $0x24] sm:$0xf]
        %v1005 = vld [vmem:[%s6 + $0x28] sm:$0xf]
        %v1006 = vld [vmem:[%s6 + $0x2c] sm:$0xf]
        %v1007 = vld [vmem:[%s6 + $0x30] sm:$0xf]
        %v1008 = vld [vmem:[%s6 + $0x34] sm:$0xf]
        %v1009 = vld [vmem:[%s6 + $0x38] sm:$0xf]
        %v1010 = vld [vmem:[%s6 + $0x3c] sm:$0xf]
        %v1011 = vld [vmem:[%s7] sm:$0xf]
        %v1012 = vld [vmem:[%s7 + $0x4] sm:$0xf]
        %v1015 = vunpack.c.l.b16 %v1011
        %v1016 = vunpack.c.l.b16 %v1012
        %v1017 = vpack.c.b16 %v1016, %v1015
        %1019 = vmatprep.subr.bf16.mxu0 0
        %1020 = vmatpush1.bf16.msra.mxu0 0
        %1021 = vmatprep.subr.bf16.mxu0 0
        %1022 = vmatpush1.bf16.msra.mxu0 0
        %1023 = vmatprep.subr.bf16.mxu0 0
        %1024 = vmatpush1.bf16.msra.mxu0 0
        %1025 = vmatprep.subr.bf16.mxu0 0
        %1026 = vmatpush1.bf16.msra.mxu0 0
        %1027 = vmatprep.subr.bf16.mxu0 0
        %1028 = vmatpush1.bf16.msra.mxu0 0
        %1029 = vmatprep.subr.bf16.mxu0 0
        %1030 = vmatpush1.bf16.msra.mxu0 0
        %1031 = vmatprep.subr.bf16.mxu0 0
        %1032 = vmatpush1.bf16.msra.mxu0 0
        %1033 = vmatprep.subr.bf16.mxu0 0
        %1034 = vmatpush1.bf16.msra.mxu0 %v1017
        %1035 = vmatprep.subr.bf16.mxu0 0
        %1036 = vmatpush2.bf16.msra.mxu0 0
        %1037 = vmatprep.subr.bf16.mxu0 0
        %1038 = vmatpush2.bf16.msra.mxu0 0
        %1039 = vmatprep.subr.bf16.mxu0 0
        %1040 = vmatpush2.bf16.msra.mxu0 0
        %1041 = vmatprep.subr.bf16.mxu0 0
        %1042 = vmatpush2.bf16.msra.mxu0 0
        %1043 = vmatprep.subr.bf16.mxu0 0
        %1044 = vmatpush2.bf16.msra.mxu0 0
        %1045 = vmatprep.subr.bf16.mxu0 0
        %1046 = vmatpush2.bf16.msra.mxu0 0
        %1047 = vmatprep.subr.bf16.mxu0 0
        %1048 = vmatpush2.bf16.msra.mxu0 0
        %1049 = vmatprep.subr.bf16.mxu0 0
        %1050 = vmatpush2.bf16.msra.mxu0 0
        %1051 = vmatprep.mubr.bf16.mxu0 0
        %1052 = vmatmul.mubr.bf16.gmra.mxu0 %v609
        %v1053 = vpop.f32.mrf.mxu0
        %v1054 = vadd.f32 0.0, %v1053
        %v1055 = vpop.f32.mrf.mxu0
        %v1056 = vpop.f32.mrf.mxu0
        %v1057 = vadd.f32 0.0, %v1056
        %v1058 = vpop.f32.mrf.mxu0
        %1059 = vmatprep.mubr.bf16.mxu0 0
        %1060 = vmatmul.mubr.bf16.gmra.mxu0 %v612
        %v1061 = vpop.f32.mrf.mxu0
        %v1062 = vadd.f32 0.0, %v1061
        %v1063 = vpop.f32.mrf.mxu0
        %v1064 = vpop.f32.mrf.mxu0
        %v1065 = vadd.f32 0.0, %v1064
        %v1066 = vpop.f32.mrf.mxu0
        %1067 = vmatprep.mubr.bf16.mxu0 0
        %1068 = vmatmul.mubr.bf16.gmra.mxu0 %v615
        %v1069 = vpop.f32.mrf.mxu0
        %v1070 = vadd.f32 0.0, %v1069
        %v1071 = vpop.f32.mrf.mxu0
        %v1072 = vpop.f32.mrf.mxu0
        %v1073 = vadd.f32 0.0, %v1072
        %v1074 = vpop.f32.mrf.mxu0
        %1075 = vmatprep.mubr.bf16.mxu0 0
        %1076 = vmatmul.mubr.bf16.gmra.mxu0 %v618
        %v1077 = vpop.f32.mrf.mxu0
        %v1078 = vadd.f32 0.0, %v1077
        %v1079 = vpop.f32.mrf.mxu0
        %v1080 = vpop.f32.mrf.mxu0
        %v1081 = vadd.f32 0.0, %v1080
        %v1082 = vpop.f32.mrf.mxu0
        %1083 = vmatprep.mubr.bf16.mxu0 0
        %1084 = vmatmul.mubr.bf16.gmra.mxu0 %v621
        %v1085 = vpop.f32.mrf.mxu0
        %v1086 = vadd.f32 0.0, %v1085
        %v1087 = vpop.f32.mrf.mxu0
        %v1088 = vpop.f32.mrf.mxu0
        %v1089 = vadd.f32 0.0, %v1088
        %v1090 = vpop.f32.mrf.mxu0
        %1091 = vmatprep.mubr.bf16.mxu0 0
        %1092 = vmatmul.mubr.bf16.gmra.mxu0 %v624
        %v1093 = vpop.f32.mrf.mxu0
        %v1094 = vadd.f32 0.0, %v1093
        %v1095 = vpop.f32.mrf.mxu0
        %v1096 = vpop.f32.mrf.mxu0
        %v1097 = vadd.f32 0.0, %v1096
        %v1098 = vpop.f32.mrf.mxu0
        %1099 = vmatprep.mubr.bf16.mxu0 0
        %1100 = vmatmul.mubr.bf16.gmra.mxu0 %v627
        %v1101 = vpop.f32.mrf.mxu0
        %v1102 = vadd.f32 0.0, %v1101
        %v1103 = vpop.f32.mrf.mxu0
        %v1104 = vpop.f32.mrf.mxu0
        %v1105 = vadd.f32 0.0, %v1104
        %v1106 = vpop.f32.mrf.mxu0
        %1107 = vmatprep.mubr.bf16.mxu0 0
        %1108 = vmatmul.mubr.bf16.gmra.mxu0 %v630
        %v1109 = vpop.f32.mrf.mxu0
        %v1110 = vadd.f32 0.0, %v1109
        %v1111 = vpop.f32.mrf.mxu0
        %v1112 = vpop.f32.mrf.mxu0
        %v1113 = vadd.f32 0.0, %v1112
        %v1114 = vpop.f32.mrf.mxu0
        %1115 = vmatprep.mubr.bf16.mxu0 0
        %1116 = vmatmul.mubr.bf16.gmra.mxu0 %v633
        %v1117 = vpop.f32.mrf.mxu0
        %v1118 = vadd.f32 0.0, %v1117
        %v1119 = vpop.f32.mrf.mxu0
        %v1120 = vpop.f32.mrf.mxu0
        %v1121 = vadd.f32 0.0, %v1120
        %v1122 = vpop.f32.mrf.mxu0
        %1123 = vmatprep.mubr.bf16.mxu0 0
        %1124 = vmatmul.mubr.bf16.gmra.mxu0 %v636
        %v1125 = vpop.f32.mrf.mxu0
        %v1126 = vadd.f32 0.0, %v1125
        %v1127 = vpop.f32.mrf.mxu0
        %v1128 = vpop.f32.mrf.mxu0
        %v1129 = vadd.f32 0.0, %v1128
        %v1130 = vpop.f32.mrf.mxu0
        %1131 = vdwg.mxu0
        %v1148 = vunpack.c.l.b16 %v995
        %v1149 = vunpack.c.l.b16 %v996
        %v1150 = vunpack.c.l.b16 %v997
        %v1151 = vunpack.c.l.b16 %v998
        %v1152 = vunpack.c.l.b16 %v999
        %v1153 = vunpack.c.l.b16 %v1000
        %v1154 = vunpack.c.l.b16 %v1001
        %v1155 = vunpack.c.l.b16 %v1002
        %v1156 = vunpack.c.l.b16 %v1003
        %v1157 = vunpack.c.l.b16 %v1004
        %v1158 = vunpack.c.l.b16 %v1005
        %v1159 = vunpack.c.l.b16 %v1006
        %v1160 = vunpack.c.l.b16 %v1007
        %v1161 = vunpack.c.l.b16 %v1008
        %v1162 = vunpack.c.l.b16 %v1009
        %v1163 = vunpack.c.l.b16 %v1010
        %v1164 = vpack.c.b16 %v1149, %v1148
        %v1165 = vpack.c.b16 %v1151, %v1150
        %v1166 = vpack.c.b16 %v1153, %v1152
        %v1167 = vpack.c.b16 %v1155, %v1154
        %v1168 = vpack.c.b16 %v1157, %v1156
        %v1169 = vpack.c.b16 %v1159, %v1158
        %v1170 = vpack.c.b16 %v1161, %v1160
        %v1171 = vpack.c.b16 %v1163, %v1162
        %1180 = vmatprep.subr.bf16.mxu0 0
        %1181 = vmatpush1.bf16.msra.mxu0 %v1171
        %1182 = vmatprep.subr.bf16.mxu0 0
        %1183 = vmatpush1.bf16.msra.mxu0 %v1170
        %1184 = vmatprep.subr.bf16.mxu0 0
        %1185 = vmatpush1.bf16.msra.mxu0 %v1169
        %1186 = vmatprep.subr.bf16.mxu0 0
        %1187 = vmatpush1.bf16.msra.mxu0 %v1168
        %1188 = vmatprep.subr.bf16.mxu0 0
        %1189 = vmatpush1.bf16.msra.mxu0 %v1167
        %1190 = vmatprep.subr.bf16.mxu0 0
        %1191 = vmatpush1.bf16.msra.mxu0 %v1166
        %1192 = vmatprep.subr.bf16.mxu0 0
        %1193 = vmatpush1.bf16.msra.mxu0 %v1165
        %1194 = vmatprep.subr.bf16.mxu0 0
        %1195 = vmatpush1.bf16.msra.mxu0 %v1164
        %1196 = vmatprep.subr.bf16.mxu0 0
        %1197 = vmatpush2.bf16.msra.mxu0 0
        %1198 = vmatprep.subr.bf16.mxu0 0
        %1199 = vmatpush2.bf16.msra.mxu0 0
        %1200 = vmatprep.subr.bf16.mxu0 0
        %1201 = vmatpush2.bf16.msra.mxu0 0
        %1202 = vmatprep.subr.bf16.mxu0 0
        %1203 = vmatpush2.bf16.msra.mxu0 0
        %1204 = vmatprep.subr.bf16.mxu0 0
        %1205 = vmatpush2.bf16.msra.mxu0 0
        %1206 = vmatprep.subr.bf16.mxu0 0
        %1207 = vmatpush2.bf16.msra.mxu0 0
        %1208 = vmatprep.subr.bf16.mxu0 0
        %1209 = vmatpush2.bf16.msra.mxu0 0
        %1210 = vmatprep.subr.bf16.mxu0 0
        %1211 = vmatpush2.bf16.msra.mxu0 0
        %1212 = vmatprep.mubr.bf16.mxu0 0
        %1213 = vmatmul.mubr.bf16.gmra.mxu0 %v985
        %v1214 = vpop.f32.mrf.mxu0
        %v1215 = vadd.f32 %v1054, %v1214
        %v1216 = vpop.f32.mrf.mxu0
        %v1217 = vpop.f32.mrf.mxu0
        %v1218 = vadd.f32 %v1057, %v1217
        %v1219 = vpop.f32.mrf.mxu0
        %1220 = vmatprep.mubr.bf16.mxu0 0
        %1221 = vmatmul.mubr.bf16.gmra.mxu0 %v986
        %v1222 = vpop.f32.mrf.mxu0
        %v1223 = vadd.f32 %v1062, %v1222
        %v1224 = vpop.f32.mrf.mxu0
        %v1225 = vpop.f32.mrf.mxu0
        %v1226 = vadd.f32 %v1065, %v1225
        %v1227 = vpop.f32.mrf.mxu0
        %1228 = vmatprep.mubr.bf16.mxu0 0
        %1229 = vmatmul.mubr.bf16.gmra.mxu0 %v987
        %v1230 = vpop.f32.mrf.mxu0
        %v1231 = vadd.f32 %v1070, %v1230
        %v1232 = vpop.f32.mrf.mxu0
        %v1233 = vpop.f32.mrf.mxu0
        %v1234 = vadd.f32 %v1073, %v1233
        %v1235 = vpop.f32.mrf.mxu0
        %1236 = vmatprep.mubr.bf16.mxu0 0
        %1237 = vmatmul.mubr.bf16.gmra.mxu0 %v988
        %v1238 = vpop.f32.mrf.mxu0
        %v1239 = vadd.f32 %v1078, %v1238
        %v1240 = vpop.f32.mrf.mxu0
        %v1241 = vpop.f32.mrf.mxu0
        %v1242 = vadd.f32 %v1081, %v1241
        %v1243 = vpop.f32.mrf.mxu0
        %1244 = vmatprep.mubr.bf16.mxu0 0
        %1245 = vmatmul.mubr.bf16.gmra.mxu0 %v989
        %v1246 = vpop.f32.mrf.mxu0
        %v1247 = vadd.f32 %v1086, %v1246
        %v1248 = vpop.f32.mrf.mxu0
        %v1249 = vpop.f32.mrf.mxu0
        %v1250 = vadd.f32 %v1089, %v1249
        %v1251 = vpop.f32.mrf.mxu0
        %1252 = vmatprep.mubr.bf16.mxu0 0
        %1253 = vmatmul.mubr.bf16.gmra.mxu0 %v990
        %v1254 = vpop.f32.mrf.mxu0
        %v1255 = vadd.f32 %v1094, %v1254
        %v1256 = vpop.f32.mrf.mxu0
        %v1257 = vpop.f32.mrf.mxu0
        %v1258 = vadd.f32 %v1097, %v1257
        %v1259 = vpop.f32.mrf.mxu0
        %1260 = vmatprep.mubr.bf16.mxu0 0
        %1261 = vmatmul.mubr.bf16.gmra.mxu0 %v991
        %v1262 = vpop.f32.mrf.mxu0
        %v1263 = vadd.f32 %v1102, %v1262
        %v1264 = vpop.f32.mrf.mxu0
        %v1265 = vpop.f32.mrf.mxu0
        %v1266 = vadd.f32 %v1105, %v1265
        %v1267 = vpop.f32.mrf.mxu0
        %1268 = vmatprep.mubr.bf16.mxu0 0
        %1269 = vmatmul.mubr.bf16.gmra.mxu0 %v992
        %v1270 = vpop.f32.mrf.mxu0
        %v1271 = vadd.f32 %v1110, %v1270
        %v1272 = vpop.f32.mrf.mxu0
        %v1273 = vpop.f32.mrf.mxu0
        %v1274 = vadd.f32 %v1113, %v1273
        %v1275 = vpop.f32.mrf.mxu0
        %1276 = vmatprep.mubr.bf16.mxu0 0
        %1277 = vmatmul.mubr.bf16.gmra.mxu0 %v993
        %v1278 = vpop.f32.mrf.mxu0
        %v1279 = vadd.f32 %v1118, %v1278
        %v1280 = vpop.f32.mrf.mxu0
        %v1281 = vpop.f32.mrf.mxu0
        %v1282 = vadd.f32 %v1121, %v1281
        %v1283 = vpop.f32.mrf.mxu0
        %1284 = vmatprep.mubr.bf16.mxu0 0
        %1285 = vmatmul.mubr.bf16.gmra.mxu0 %v994
        %v1286 = vpop.f32.mrf.mxu0
        %v1287 = vadd.f32 %v1126, %v1286
        %v1288 = vpop.f32.mrf.mxu0
        %v1289 = vpop.f32.mrf.mxu0
        %v1290 = vadd.f32 %v1129, %v1289
        %v1291 = vpop.f32.mrf.mxu0
        %1292 = vdwg.mxu0
        %v1293 = vld [vmem:[%s8] sm:$0xf]
        %v1294 = vld [vmem:[%s9] sm:$0x1]
        %v1296 = vlaneseq
        %v1297 = vshrl.u32 %v1296, 7
        %v1298 = vsub.s32 0, %v1297
        %v1299 = vrot.slane %v1294, %v1298
        %vm1301 = vcmask 64512
        %v1303 = vsel %vm1301, %v582, 0
        %v1306 = vsel %vm1301, %v583, 0
        %v1309 = vsel %vm1301, %v584, 0
        %v1312 = vsel %vm1301, %v585, 0
        %v1315 = vsel %vm1301, %v586, 0
        %v1318 = vsel %vm1301, %v587, 0
        %v1321 = vsel %vm1301, %v588, 0
        %v1324 = vsel %vm1301, %v589, 0
        %v1327 = vsel %vm1301, %v590, 0
        %v1330 = vsel %vm1301, %v591, 0
        %vm1332 = vcmask 1043456
        %v1334 = vsel %vm1332, %v1293, 0
        %1336 = vmatprep.subr.bf16.mxu0 0
        %1337 = vmatpush1.bf16.msra.mxu0 0
        %1338 = vmatprep.subr.bf16.mxu0 0
        %1339 = vmatpush1.bf16.msra.mxu0 0
        %1340 = vmatprep.subr.bf16.mxu0 0
        %1341 = vmatpush1.bf16.msra.mxu0 0
        %1342 = vmatprep.subr.bf16.mxu0 0
        %1343 = vmatpush1.bf16.msra.mxu0 0
        %1344 = vmatprep.subr.bf16.mxu0 0
        %1345 = vmatpush1.bf16.msra.mxu0 0
        %1346 = vmatprep.subr.bf16.mxu0 0
        %1347 = vmatpush1.bf16.msra.mxu0 0
        %1348 = vmatprep.subr.bf16.mxu0 0
        %1349 = vmatpush1.bf16.msra.mxu0 0
        %1350 = vmatprep.subr.bf16.mxu0 0
        %1351 = vmatpush1.bf16.msra.mxu0 %v1334
        %1352 = vmatprep.subr.bf16.mxu0 0
        %1353 = vmatpush2.bf16.msra.mxu0 0
        %1354 = vmatprep.subr.bf16.mxu0 0
        %1355 = vmatpush2.bf16.msra.mxu0 0
        %1356 = vmatprep.subr.bf16.mxu0 0
        %1357 = vmatpush2.bf16.msra.mxu0 0
        %1358 = vmatprep.subr.bf16.mxu0 0
        %1359 = vmatpush2.bf16.msra.mxu0 0
        %1360 = vmatprep.subr.bf16.mxu0 0
        %1361 = vmatpush2.bf16.msra.mxu0 0
        %1362 = vmatprep.subr.bf16.mxu0 0
        %1363 = vmatpush2.bf16.msra.mxu0 0
        %1364 = vmatprep.subr.bf16.mxu0 0
        %1365 = vmatpush2.bf16.msra.mxu0 0
        %1366 = vmatprep.subr.bf16.mxu0 0
        %1367 = vmatpush2.bf16.msra.mxu0 0
        %1368 = vmatprep.mubr.bf16.mxu0 0
        %1369 = vmatmul.mubr.bf16.gmra.mxu0 %v1303
        %v1370 = vpop.f32.mrf.mxu0
        %v1371 = vadd.f32 %v1299, %v1370
        %v1372 = vpop.f32.mrf.mxu0
        %v1373 = vpop.f32.mrf.mxu0
        %v1374 = vadd.f32 %v1299, %v1373
        %v1375 = vpop.f32.mrf.mxu0
        %1376 = vmatprep.mubr.bf16.mxu0 0
        %1377 = vmatmul.mubr.bf16.gmra.mxu0 %v1306
        %v1378 = vpop.f32.mrf.mxu0
        %v1379 = vadd.f32 %v1299, %v1378
        %v1380 = vpop.f32.mrf.mxu0
        %v1381 = vpop.f32.mrf.mxu0
        %v1382 = vadd.f32 %v1299, %v1381
        %v1383 = vpop.f32.mrf.mxu0
        %1384 = vmatprep.mubr.bf16.mxu0 0
        %1385 = vmatmul.mubr.bf16.gmra.mxu0 %v1309
        %v1386 = vpop.f32.mrf.mxu0
        %v1387 = vadd.f32 %v1299, %v1386
        %v1388 = vpop.f32.mrf.mxu0
        %v1389 = vpop.f32.mrf.mxu0
        %v1390 = vadd.f32 %v1299, %v1389
        %v1391 = vpop.f32.mrf.mxu0
        %1392 = vmatprep.mubr.bf16.mxu0 0
        %1393 = vmatmul.mubr.bf16.gmra.mxu0 %v1312
        %v1394 = vpop.f32.mrf.mxu0
        %v1395 = vadd.f32 %v1299, %v1394
        %v1396 = vpop.f32.mrf.mxu0
        %v1397 = vpop.f32.mrf.mxu0
        %v1398 = vadd.f32 %v1299, %v1397
        %v1399 = vpop.f32.mrf.mxu0
        %1400 = vmatprep.mubr.bf16.mxu0 0
        %1401 = vmatmul.mubr.bf16.gmra.mxu0 %v1315
        %v1402 = vpop.f32.mrf.mxu0
        %v1403 = vadd.f32 %v1299, %v1402
        %v1404 = vpop.f32.mrf.mxu0
        %v1405 = vpop.f32.mrf.mxu0
        %v1406 = vadd.f32 %v1299, %v1405
        %v1407 = vpop.f32.mrf.mxu0
        %1408 = vmatprep.mubr.bf16.mxu0 0
        %1409 = vmatmul.mubr.bf16.gmra.mxu0 %v1318
        %v1410 = vpop.f32.mrf.mxu0
        %v1411 = vadd.f32 %v1299, %v1410
        %v1412 = vpop.f32.mrf.mxu0
        %v1413 = vpop.f32.mrf.mxu0
        %v1414 = vadd.f32 %v1299, %v1413
        %v1415 = vpop.f32.mrf.mxu0
        %1416 = vmatprep.mubr.bf16.mxu0 0
        %1417 = vmatmul.mubr.bf16.gmra.mxu0 %v1321
        %v1418 = vpop.f32.mrf.mxu0
        %v1419 = vadd.f32 %v1299, %v1418
        %v1420 = vpop.f32.mrf.mxu0
        %v1421 = vpop.f32.mrf.mxu0
        %v1422 = vadd.f32 %v1299, %v1421
        %v1423 = vpop.f32.mrf.mxu0
        %1424 = vmatprep.mubr.bf16.mxu0 0
        %1425 = vmatmul.mubr.bf16.gmra.mxu0 %v1324
        %v1426 = vpop.f32.mrf.mxu0
        %v1427 = vadd.f32 %v1299, %v1426
        %v1428 = vpop.f32.mrf.mxu0
        %v1429 = vpop.f32.mrf.mxu0
        %v1430 = vadd.f32 %v1299, %v1429
        %v1431 = vpop.f32.mrf.mxu0
        %1432 = vmatprep.mubr.bf16.mxu0 0
        %1433 = vmatmul.mubr.bf16.gmra.mxu0 %v1327
        %v1434 = vpop.f32.mrf.mxu0
        %v1435 = vadd.f32 %v1299, %v1434
        %v1436 = vpop.f32.mrf.mxu0
        %v1437 = vpop.f32.mrf.mxu0
        %v1438 = vadd.f32 %v1299, %v1437
        %v1439 = vpop.f32.mrf.mxu0
        %1440 = vmatprep.mubr.bf16.mxu0 0
        %1441 = vmatmul.mubr.bf16.gmra.mxu0 %v1330
        %v1442 = vpop.f32.mrf.mxu0
        %v1443 = vadd.f32 %v1299, %v1442
        %v1444 = vpop.f32.mrf.mxu0
        %v1445 = vpop.f32.mrf.mxu0
        %v1446 = vadd.f32 %v1299, %v1445
        %v1447 = vpop.f32.mrf.mxu0
        %1448 = vdwg.mxu0
        %v1449 = vmax.f32 %v1371, 0.0
        %v1450 = vmax.f32 %v1374, 0.0
        %v1451 = vmax.f32 %v1379, 0.0
        %v1452 = vmax.f32 %v1382, 0.0
        %v1453 = vmax.f32 %v1387, 0.0
        %v1454 = vmax.f32 %v1390, 0.0
        %v1455 = vmax.f32 %v1395, 0.0
        %v1456 = vmax.f32 %v1398, 0.0
        %v1457 = vmax.f32 %v1403, 0.0
        %v1458 = vmax.f32 %v1406, 0.0
        %v1459 = vmax.f32 %v1411, 0.0
        %v1460 = vmax.f32 %v1414, 0.0
        %v1461 = vmax.f32 %v1419, 0.0
        %v1462 = vmax.f32 %v1422, 0.0
        %v1463 = vmax.f32 %v1427, 0.0
        %v1464 = vmax.f32 %v1430, 0.0
        %v1465 = vmax.f32 %v1435, 0.0
        %v1466 = vmax.f32 %v1438, 0.0
        %v1467 = vmax.f32 %v1443, 0.0
        %v1468 = vmax.f32 %v1446, 0.0
        %v1469 = vpack.c.bf16 %v1450, %v1449
        %v1470 = vpack.c.bf16 %v1452, %v1451
        %v1471 = vpack.c.bf16 %v1454, %v1453
        %v1472 = vpack.c.bf16 %v1456, %v1455
        %v1473 = vpack.c.bf16 %v1458, %v1457
        %v1474 = vpack.c.bf16 %v1460, %v1459
        %v1475 = vpack.c.bf16 %v1462, %v1461
        %v1476 = vpack.c.bf16 %v1464, %v1463
        %v1477 = vpack.c.bf16 %v1466, %v1465
        %v1478 = vpack.c.bf16 %v1468, %v1467
        %v1479 = vld [vmem:[%s10] sm:$0xf]
        %v1480 = vld [vmem:[%s10 + $0x4] sm:$0xf]
        %v1481 = vld [vmem:[%s10 + $0x8] sm:$0xf]
        %v1482 = vld [vmem:[%s10 + $0xc] sm:$0xf]
        %v1483 = vld [vmem:[%s10 + $0x10] sm:$0xf]
        %v1484 = vld [vmem:[%s10 + $0x14] sm:$0xf]
        %v1485 = vld [vmem:[%s10 + $0x18] sm:$0xf]
        %v1486 = vld [vmem:[%s10 + $0x1c] sm:$0xf]
        %v1487 = vld [vmem:[%s10 + $0x20] sm:$0xf]
        %v1488 = vld [vmem:[%s10 + $0x24] sm:$0xf]
        %v1489 = vld [vmem:[%s10 + $0x28] sm:$0xf]
        %v1490 = vld [vmem:[%s10 + $0x2c] sm:$0xf]
        %v1491 = vld [vmem:[%s10 + $0x30] sm:$0xf]
        %v1492 = vld [vmem:[%s10 + $0x34] sm:$0xf]
        %v1493 = vld [vmem:[%s10 + $0x38] sm:$0xf]
        %v1494 = vld [vmem:[%s10 + $0x3c] sm:$0xf]
        %v1495 = vld [vmem:[%s11] sm:$0x1]
        %v1497 = vlaneseq
        %v1498 = vshrl.u32 %v1497, 7
        %v1499 = vsub.s32 0, %v1498
        %v1500 = vrot.slane %v1495, %v1499
        %v1518 = vunpack.c.l.b16 %v1479
        %v1519 = vunpack.c.l.b16 %v1480
        %v1520 = vunpack.c.l.b16 %v1481
        %v1521 = vunpack.c.l.b16 %v1482
        %v1522 = vunpack.c.l.b16 %v1483
        %v1523 = vunpack.c.l.b16 %v1484
        %v1524 = vunpack.c.l.b16 %v1485
        %v1525 = vunpack.c.l.b16 %v1486
        %v1526 = vunpack.c.l.b16 %v1487
        %v1527 = vunpack.c.l.b16 %v1488
        %v1528 = vunpack.c.l.b16 %v1489
        %v1529 = vunpack.c.l.b16 %v1490
        %v1530 = vunpack.c.l.b16 %v1491
        %v1531 = vunpack.c.l.b16 %v1492
        %v1532 = vunpack.c.l.b16 %v1493
        %v1533 = vunpack.c.l.b16 %v1494
        %v1534 = vpack.c.b16 %v1519, %v1518
        %v1535 = vpack.c.b16 %v1521, %v1520
        %v1536 = vpack.c.b16 %v1523, %v1522
        %v1537 = vpack.c.b16 %v1525, %v1524
        %v1538 = vpack.c.b16 %v1527, %v1526
        %v1539 = vpack.c.b16 %v1529, %v1528
        %v1540 = vpack.c.b16 %v1531, %v1530
        %v1541 = vpack.c.b16 %v1533, %v1532
        %1550 = vmatprep.subr.bf16.mxu0 0
        %1551 = vmatpush1.bf16.msra.mxu0 %v1541
        %1552 = vmatprep.subr.bf16.mxu0 0
        %1553 = vmatpush1.bf16.msra.mxu0 %v1540
        %1554 = vmatprep.subr.bf16.mxu0 0
        %1555 = vmatpush1.bf16.msra.mxu0 %v1539
        %1556 = vmatprep.subr.bf16.mxu0 0
        %1557 = vmatpush1.bf16.msra.mxu0 %v1538
        %1558 = vmatprep.subr.bf16.mxu0 0
        %1559 = vmatpush1.bf16.msra.mxu0 %v1537
        %1560 = vmatprep.subr.bf16.mxu0 0
        %1561 = vmatpush1.bf16.msra.mxu0 %v1536
        %1562 = vmatprep.subr.bf16.mxu0 0
        %1563 = vmatpush1.bf16.msra.mxu0 %v1535
        %1564 = vmatprep.subr.bf16.mxu0 0
        %1565 = vmatpush1.bf16.msra.mxu0 %v1534
        %1566 = vmatprep.subr.bf16.mxu0 0
        %1567 = vmatpush2.bf16.msra.mxu0 0
        %1568 = vmatprep.subr.bf16.mxu0 0
        %1569 = vmatpush2.bf16.msra.mxu0 0
        %1570 = vmatprep.subr.bf16.mxu0 0
        %1571 = vmatpush2.bf16.msra.mxu0 0
        %1572 = vmatprep.subr.bf16.mxu0 0
        %1573 = vmatpush2.bf16.msra.mxu0 0
        %1574 = vmatprep.subr.bf16.mxu0 0
        %1575 = vmatpush2.bf16.msra.mxu0 0
        %1576 = vmatprep.subr.bf16.mxu0 0
        %1577 = vmatpush2.bf16.msra.mxu0 0
        %1578 = vmatprep.subr.bf16.mxu0 0
        %1579 = vmatpush2.bf16.msra.mxu0 0
        %1580 = vmatprep.subr.bf16.mxu0 0
        %1581 = vmatpush2.bf16.msra.mxu0 0
        %1582 = vmatprep.mubr.bf16.mxu0 0
        %1583 = vmatmul.mubr.bf16.gmra.mxu0 %v1469
        %v1584 = vpop.f32.mrf.mxu0
        %v1585 = vadd.f32 %v1500, %v1584
        %v1586 = vpop.f32.mrf.mxu0
        %v1587 = vpop.f32.mrf.mxu0
        %v1588 = vadd.f32 %v1500, %v1587
        %v1589 = vpop.f32.mrf.mxu0
        %1590 = vmatprep.mubr.bf16.mxu0 0
        %1591 = vmatmul.mubr.bf16.gmra.mxu0 %v1470
        %v1592 = vpop.f32.mrf.mxu0
        %v1593 = vadd.f32 %v1500, %v1592
        %v1594 = vpop.f32.mrf.mxu0
        %v1595 = vpop.f32.mrf.mxu0
        %v1596 = vadd.f32 %v1500, %v1595
        %v1597 = vpop.f32.mrf.mxu0
        %1598 = vmatprep.mubr.bf16.mxu0 0
        %1599 = vmatmul.mubr.bf16.gmra.mxu0 %v1471
        %v1600 = vpop.f32.mrf.mxu0
        %v1601 = vadd.f32 %v1500, %v1600
        %v1602 = vpop.f32.mrf.mxu0
        %v1603 = vpop.f32.mrf.mxu0
        %v1604 = vadd.f32 %v1500, %v1603
        %v1605 = vpop.f32.mrf.mxu0
        %1606 = vmatprep.mubr.bf16.mxu0 0
        %1607 = vmatmul.mubr.bf16.gmra.mxu0 %v1472
        %v1608 = vpop.f32.mrf.mxu0
        %v1609 = vadd.f32 %v1500, %v1608
        %v1610 = vpop.f32.mrf.mxu0
        %v1611 = vpop.f32.mrf.mxu0
        %v1612 = vadd.f32 %v1500, %v1611
        %v1613 = vpop.f32.mrf.mxu0
        %1614 = vmatprep.mubr.bf16.mxu0 0
        %1615 = vmatmul.mubr.bf16.gmra.mxu0 %v1473
        %v1616 = vpop.f32.mrf.mxu0
        %v1617 = vadd.f32 %v1500, %v1616
        %v1618 = vpop.f32.mrf.mxu0
        %v1619 = vpop.f32.mrf.mxu0
        %v1620 = vadd.f32 %v1500, %v1619
        %v1621 = vpop.f32.mrf.mxu0
        %1622 = vmatprep.mubr.bf16.mxu0 0
        %1623 = vmatmul.mubr.bf16.gmra.mxu0 %v1474
        %v1624 = vpop.f32.mrf.mxu0
        %v1625 = vadd.f32 %v1500, %v1624
        %v1626 = vpop.f32.mrf.mxu0
        %v1627 = vpop.f32.mrf.mxu0
        %v1628 = vadd.f32 %v1500, %v1627
        %v1629 = vpop.f32.mrf.mxu0
        %1630 = vmatprep.mubr.bf16.mxu0 0
        %1631 = vmatmul.mubr.bf16.gmra.mxu0 %v1475
        %v1632 = vpop.f32.mrf.mxu0
        %v1633 = vadd.f32 %v1500, %v1632
        %v1634 = vpop.f32.mrf.mxu0
        %v1635 = vpop.f32.mrf.mxu0
        %v1636 = vadd.f32 %v1500, %v1635
        %v1637 = vpop.f32.mrf.mxu0
        %1638 = vmatprep.mubr.bf16.mxu0 0
        %1639 = vmatmul.mubr.bf16.gmra.mxu0 %v1476
        %v1640 = vpop.f32.mrf.mxu0
        %v1641 = vadd.f32 %v1500, %v1640
        %v1642 = vpop.f32.mrf.mxu0
        %v1643 = vpop.f32.mrf.mxu0
        %v1644 = vadd.f32 %v1500, %v1643
        %v1645 = vpop.f32.mrf.mxu0
        %1646 = vmatprep.mubr.bf16.mxu0 0
        %1647 = vmatmul.mubr.bf16.gmra.mxu0 %v1477
        %v1648 = vpop.f32.mrf.mxu0
        %v1649 = vadd.f32 %v1500, %v1648
        %v1650 = vpop.f32.mrf.mxu0
        %v1651 = vpop.f32.mrf.mxu0
        %v1652 = vadd.f32 %v1500, %v1651
        %v1653 = vpop.f32.mrf.mxu0
        %1654 = vmatprep.mubr.bf16.mxu0 0
        %1655 = vmatmul.mubr.bf16.gmra.mxu0 %v1478
        %v1656 = vpop.f32.mrf.mxu0
        %v1657 = vadd.f32 %v1500, %v1656
        %v1658 = vpop.f32.mrf.mxu0
        %v1659 = vpop.f32.mrf.mxu0
        %v1660 = vadd.f32 %v1500, %v1659
        %v1661 = vpop.f32.mrf.mxu0
        %1662 = vdwg.mxu0
        %v1663 = vmax.f32 %v1585, 0.0
        %v1664 = vmax.f32 %v1588, 0.0
        %v1665 = vmax.f32 %v1593, 0.0
        %v1666 = vmax.f32 %v1596, 0.0
        %v1667 = vmax.f32 %v1601, 0.0
        %v1668 = vmax.f32 %v1604, 0.0
        %v1669 = vmax.f32 %v1609, 0.0
        %v1670 = vmax.f32 %v1612, 0.0
        %v1671 = vmax.f32 %v1617, 0.0
        %v1672 = vmax.f32 %v1620, 0.0
        %v1673 = vmax.f32 %v1625, 0.0
        %v1674 = vmax.f32 %v1628, 0.0
        %v1675 = vmax.f32 %v1633, 0.0
        %v1676 = vmax.f32 %v1636, 0.0
        %v1677 = vmax.f32 %v1641, 0.0
        %v1678 = vmax.f32 %v1644, 0.0
        %v1679 = vmax.f32 %v1649, 0.0
        %v1680 = vmax.f32 %v1652, 0.0
        %v1681 = vmax.f32 %v1657, 0.0
        %v1682 = vmax.f32 %v1660, 0.0
        %v1683 = vpack.c.bf16 %v1664, %v1663
        %v1684 = vpack.c.bf16 %v1666, %v1665
        %v1685 = vpack.c.bf16 %v1668, %v1667
        %v1686 = vpack.c.bf16 %v1670, %v1669
        %v1687 = vpack.c.bf16 %v1672, %v1671
        %v1688 = vpack.c.bf16 %v1674, %v1673
        %v1689 = vpack.c.bf16 %v1676, %v1675
        %v1690 = vpack.c.bf16 %v1678, %v1677
        %v1691 = vpack.c.bf16 %v1680, %v1679
        %v1692 = vpack.c.bf16 %v1682, %v1681
        %v1693 = vld [vmem:[%s12] sm:$0xf]
        %v1694 = vld [vmem:[%s12 + $0x4] sm:$0xf]
        %v1695 = vld [vmem:[%s12 + $0x8] sm:$0xf]
        %v1696 = vld [vmem:[%s12 + $0xc] sm:$0xf]
        %v1697 = vld [vmem:[%s12 + $0x10] sm:$0xf]
        %v1698 = vld [vmem:[%s12 + $0x14] sm:$0xf]
        %v1699 = vld [vmem:[%s12 + $0x18] sm:$0xf]
        %v1700 = vld [vmem:[%s12 + $0x1c] sm:$0xf]
        %v1701 = vld [vmem:[%s12 + $0x20] sm:$0xf]
        %v1702 = vld [vmem:[%s12 + $0x24] sm:$0xf]
        %v1703 = vld [vmem:[%s12 + $0x28] sm:$0xf]
        %v1704 = vld [vmem:[%s12 + $0x2c] sm:$0xf]
        %v1705 = vld [vmem:[%s12 + $0x30] sm:$0xf]
        %v1706 = vld [vmem:[%s12 + $0x34] sm:$0xf]
        %v1707 = vld [vmem:[%s12 + $0x38] sm:$0xf]
        %v1708 = vld [vmem:[%s12 + $0x3c] sm:$0xf]
        %v1725 = vunpack.c.l.b16 %v1693
        %v1726 = vunpack.c.l.b16 %v1694
        %v1727 = vunpack.c.l.b16 %v1695
        %v1728 = vunpack.c.l.b16 %v1696
        %v1729 = vunpack.c.l.b16 %v1697
        %v1730 = vunpack.c.l.b16 %v1698
        %v1731 = vunpack.c.l.b16 %v1699
        %v1732 = vunpack.c.l.b16 %v1700
        %v1733 = vunpack.c.l.b16 %v1701
        %v1734 = vunpack.c.l.b16 %v1702
        %v1735 = vunpack.c.l.b16 %v1703
        %v1736 = vunpack.c.l.b16 %v1704
        %v1737 = vunpack.c.l.b16 %v1705
        %v1738 = vunpack.c.l.b16 %v1706
        %v1739 = vunpack.c.l.b16 %v1707
        %v1740 = vunpack.c.l.b16 %v1708
        %v1741 = vpack.c.b16 %v1726, %v1725
        %v1742 = vpack.c.b16 %v1728, %v1727
        %v1743 = vpack.c.b16 %v1730, %v1729
        %v1744 = vpack.c.b16 %v1732, %v1731
        %v1745 = vpack.c.b16 %v1734, %v1733
        %v1746 = vpack.c.b16 %v1736, %v1735
        %v1747 = vpack.c.b16 %v1738, %v1737
        %v1748 = vpack.c.b16 %v1740, %v1739
        %1757 = vmatprep.subr.bf16.mxu0 0
        %1758 = vmatpush1.bf16.msra.mxu0 %v1748
        %1759 = vmatprep.subr.bf16.mxu0 0
        %1760 = vmatpush1.bf16.msra.mxu0 %v1747
        %1761 = vmatprep.subr.bf16.mxu0 0
        %1762 = vmatpush1.bf16.msra.mxu0 %v1746
        %1763 = vmatprep.subr.bf16.mxu0 0
        %1764 = vmatpush1.bf16.msra.mxu0 %v1745
        %1765 = vmatprep.subr.bf16.mxu0 0
        %1766 = vmatpush1.bf16.msra.mxu0 %v1744
        %1767 = vmatprep.subr.bf16.mxu0 0
        %1768 = vmatpush1.bf16.msra.mxu0 %v1743
        %1769 = vmatprep.subr.bf16.mxu0 0
        %1770 = vmatpush1.bf16.msra.mxu0 %v1742
        %1771 = vmatprep.subr.bf16.mxu0 0
        %1772 = vmatpush1.bf16.msra.mxu0 %v1741
        %1773 = vmatprep.subr.bf16.mxu0 0
        %1774 = vmatpush2.bf16.msra.mxu0 0
        %1775 = vmatprep.subr.bf16.mxu0 0
        %1776 = vmatpush2.bf16.msra.mxu0 0
        %1777 = vmatprep.subr.bf16.mxu0 0
        %1778 = vmatpush2.bf16.msra.mxu0 0
        %1779 = vmatprep.subr.bf16.mxu0 0
        %1780 = vmatpush2.bf16.msra.mxu0 0
        %1781 = vmatprep.subr.bf16.mxu0 0
        %1782 = vmatpush2.bf16.msra.mxu0 0
        %1783 = vmatprep.subr.bf16.mxu0 0
        %1784 = vmatpush2.bf16.msra.mxu0 0
        %1785 = vmatprep.subr.bf16.mxu0 0
        %1786 = vmatpush2.bf16.msra.mxu0 0
        %1787 = vmatprep.subr.bf16.mxu0 0
        %1788 = vmatpush2.bf16.msra.mxu0 0
        %1789 = vmatprep.mubr.bf16.mxu0 0
        %1790 = vmatmul.mubr.bf16.gmra.mxu0 %v1683
        %v1791 = vpop.f32.mrf.mxu0
        %v1792 = vadd.f32 0.0, %v1791
        %v1793 = vpop.f32.mrf.mxu0
        %v1794 = vpop.f32.mrf.mxu0
        %v1795 = vadd.f32 0.0, %v1794
        %v1796 = vpop.f32.mrf.mxu0
        %1797 = vmatprep.mubr.bf16.mxu0 0
        %1798 = vmatmul.mubr.bf16.gmra.mxu0 %v1684
        %v1799 = vpop.f32.mrf.mxu0
        %v1800 = vadd.f32 0.0, %v1799
        %v1801 = vpop.f32.mrf.mxu0
        %v1802 = vpop.f32.mrf.mxu0
        %v1803 = vadd.f32 0.0, %v1802
        %v1804 = vpop.f32.mrf.mxu0
        %1805 = vmatprep.mubr.bf16.mxu0 0
        %1806 = vmatmul.mubr.bf16.gmra.mxu0 %v1685
        %v1807 = vpop.f32.mrf.mxu0
        %v1808 = vadd.f32 0.0, %v1807
        %v1809 = vpop.f32.mrf.mxu0
        %v1810 = vpop.f32.mrf.mxu0
        %v1811 = vadd.f32 0.0, %v1810
        %v1812 = vpop.f32.mrf.mxu0
        %1813 = vmatprep.mubr.bf16.mxu0 0
        %1814 = vmatmul.mubr.bf16.gmra.mxu0 %v1686
        %v1815 = vpop.f32.mrf.mxu0
        %v1816 = vadd.f32 0.0, %v1815
        %v1817 = vpop.f32.mrf.mxu0
        %v1818 = vpop.f32.mrf.mxu0
        %v1819 = vadd.f32 0.0, %v1818
        %v1820 = vpop.f32.mrf.mxu0
        %1821 = vmatprep.mubr.bf16.mxu0 0
        %1822 = vmatmul.mubr.bf16.gmra.mxu0 %v1687
        %v1823 = vpop.f32.mrf.mxu0
        %v1824 = vadd.f32 0.0, %v1823
        %v1825 = vpop.f32.mrf.mxu0
        %v1826 = vpop.f32.mrf.mxu0
        %v1827 = vadd.f32 0.0, %v1826
        %v1828 = vpop.f32.mrf.mxu0
        %1829 = vmatprep.mubr.bf16.mxu0 0
        %1830 = vmatmul.mubr.bf16.gmra.mxu0 %v1688
        %v1831 = vpop.f32.mrf.mxu0
        %v1832 = vadd.f32 0.0, %v1831
        %v1833 = vpop.f32.mrf.mxu0
        %v1834 = vpop.f32.mrf.mxu0
        %v1835 = vadd.f32 0.0, %v1834
        %v1836 = vpop.f32.mrf.mxu0
        %1837 = vmatprep.mubr.bf16.mxu0 0
        %1838 = vmatmul.mubr.bf16.gmra.mxu0 %v1689
        %v1839 = vpop.f32.mrf.mxu0
        %v1840 = vadd.f32 0.0, %v1839
        %v1841 = vpop.f32.mrf.mxu0
        %v1842 = vpop.f32.mrf.mxu0
        %v1843 = vadd.f32 0.0, %v1842
        %v1844 = vpop.f32.mrf.mxu0
        %1845 = vmatprep.mubr.bf16.mxu0 0
        %1846 = vmatmul.mubr.bf16.gmra.mxu0 %v1690
        %v1847 = vpop.f32.mrf.mxu0
        %v1848 = vadd.f32 0.0, %v1847
        %v1849 = vpop.f32.mrf.mxu0
        %v1850 = vpop.f32.mrf.mxu0
        %v1851 = vadd.f32 0.0, %v1850
        %v1852 = vpop.f32.mrf.mxu0
        %1853 = vmatprep.mubr.bf16.mxu0 0
        %1854 = vmatmul.mubr.bf16.gmra.mxu0 %v1691
        %v1855 = vpop.f32.mrf.mxu0
        %v1856 = vadd.f32 0.0, %v1855
        %v1857 = vpop.f32.mrf.mxu0
        %v1858 = vpop.f32.mrf.mxu0
        %v1859 = vadd.f32 0.0, %v1858
        %v1860 = vpop.f32.mrf.mxu0
        %1861 = vmatprep.mubr.bf16.mxu0 0
        %1862 = vmatmul.mubr.bf16.gmra.mxu0 %v1692
        %v1863 = vpop.f32.mrf.mxu0
        %v1864 = vadd.f32 0.0, %v1863
        %v1865 = vpop.f32.mrf.mxu0
        %v1866 = vpop.f32.mrf.mxu0
        %v1867 = vadd.f32 0.0, %v1866
        %v1868 = vpop.f32.mrf.mxu0
        %1869 = vdwg.mxu0
        %v1870 = vadd.f32 %v1215, %v1792
        %v1871 = vadd.f32 %v1218, %v1795
        %v1872 = vadd.f32 %v1223, %v1800
        %v1873 = vadd.f32 %v1226, %v1803
        %v1874 = vadd.f32 %v1231, %v1808
        %v1875 = vadd.f32 %v1234, %v1811
        %v1876 = vadd.f32 %v1239, %v1816
        %v1877 = vadd.f32 %v1242, %v1819
        %v1878 = vadd.f32 %v1247, %v1824
        %v1879 = vadd.f32 %v1250, %v1827
        %v1880 = vadd.f32 %v1255, %v1832
        %v1881 = vadd.f32 %v1258, %v1835
        %v1882 = vadd.f32 %v1263, %v1840
        %v1883 = vadd.f32 %v1266, %v1843
        %v1884 = vadd.f32 %v1271, %v1848
        %v1885 = vadd.f32 %v1274, %v1851
        %v1886 = vadd.f32 %v1279, %v1856
        %v1887 = vadd.f32 %v1282, %v1859
        %v1888 = vadd.f32 %v1287, %v1864
        %v1889 = vadd.f32 %v1290, %v1867
        %v1890 = vld [vmem:[%s13] sm:$0x1]
        %v1892 = vlaneseq
        %v1893 = vshrl.u32 %v1892, 7
        %v1894 = vsub.s32 0, %v1893
        %v1895 = vrot.slane %v1890, %v1894
        %v1897 = vadd.f32 %v1870, %v1895
        %v1898 = vadd.f32 %v1871, %v1895
        %v1899 = vadd.f32 %v1872, %v1895
        %v1900 = vadd.f32 %v1873, %v1895
        %v1901 = vadd.f32 %v1874, %v1895
        %v1902 = vadd.f32 %v1875, %v1895
        %v1903 = vadd.f32 %v1876, %v1895
        %v1904 = vadd.f32 %v1877, %v1895
        %v1905 = vadd.f32 %v1878, %v1895
        %v1906 = vadd.f32 %v1879, %v1895
        %v1907 = vadd.f32 %v1880, %v1895
        %v1908 = vadd.f32 %v1881, %v1895
        %v1909 = vadd.f32 %v1882, %v1895
        %v1910 = vadd.f32 %v1883, %v1895
        %v1911 = vadd.f32 %v1884, %v1895
        %v1912 = vadd.f32 %v1885, %v1895
        %v1913 = vadd.f32 %v1886, %v1895
        %v1914 = vadd.f32 %v1887, %v1895
        %v1915 = vadd.f32 %v1888, %v1895
        %v1916 = vadd.f32 %v1889, %v1895
        %v1917 = vpack.c.bf16 %v1898, %v1897
        %v1918 = vpack.c.bf16 %v1900, %v1899
        %v1919 = vpack.c.bf16 %v1902, %v1901
        %v1920 = vpack.c.bf16 %v1904, %v1903
        %v1921 = vpack.c.bf16 %v1906, %v1905
        %v1922 = vpack.c.bf16 %v1908, %v1907
        %v1923 = vpack.c.bf16 %v1910, %v1909
        %v1924 = vpack.c.bf16 %v1912, %v1911
        %v1925 = vpack.c.bf16 %v1914, %v1913
        %v1926 = vpack.c.bf16 %v1916, %v1915
        %v1937 = vunpack.c.l.b16 %v1917
        %v1938 = vunpack.c.h.b16 %v1917
        %v1939 = vunpack.c.l.b16 %v1918
        %v1940 = vunpack.c.h.b16 %v1918
        %v1941 = vunpack.c.l.b16 %v1919
        %v1942 = vunpack.c.h.b16 %v1919
        %v1943 = vunpack.c.l.b16 %v1920
        %v1944 = vunpack.c.h.b16 %v1920
        %v1945 = vunpack.c.l.b16 %v1921
        %v1946 = vunpack.c.h.b16 %v1921
        %v1947 = vunpack.c.l.b16 %v1922
        %v1948 = vunpack.c.h.b16 %v1922
        %v1949 = vunpack.c.l.b16 %v1923
        %v1950 = vunpack.c.h.b16 %v1923
        %v1951 = vunpack.c.l.b16 %v1924
        %v1952 = vunpack.c.h.b16 %v1924
        %v1953 = vunpack.c.l.b16 %v1925
        %v1954 = vunpack.c.h.b16 %v1925
        %v1955 = vunpack.c.l.b16 %v1926
        %v1956 = vunpack.c.h.b16 %v1926
        %v1957 = vpack.c.b16 %v1937, %v1937
        %v1958 = vpack.c.b16 %v1938, %v1938
        %v1959 = vpack.c.b16 %v1939, %v1939
        %v1960 = vpack.c.b16 %v1940, %v1940
        %v1961 = vpack.c.b16 %v1941, %v1941
        %v1962 = vpack.c.b16 %v1942, %v1942
        %v1963 = vpack.c.b16 %v1943, %v1943
        %v1964 = vpack.c.b16 %v1944, %v1944
        %v1965 = vpack.c.b16 %v1945, %v1945
        %v1966 = vpack.c.b16 %v1946, %v1946
        %v1967 = vpack.c.b16 %v1947, %v1947
        %v1968 = vpack.c.b16 %v1948, %v1948
        %v1969 = vpack.c.b16 %v1949, %v1949
        %v1970 = vpack.c.b16 %v1950, %v1950
        %v1971 = vpack.c.b16 %v1951, %v1951
        %v1972 = vpack.c.b16 %v1952, %v1952
        %v1973 = vpack.c.b16 %v1953, %v1953
        %v1974 = vpack.c.b16 %v1954, %v1954
        %v1975 = vpack.c.b16 %v1955, %v1955
        %v1976 = vpack.c.b16 %v1956, %v1956
        %vm1997 = vcmask 60416
        %1998 = vst.msk [vmem:[%s497] sm:$0xf] %vm1997, %v1957
        %1999 = vst.msk [vmem:[%s497 + $0x4] sm:$0xf] %vm1997, %v1958
        %2000 = vst.msk [vmem:[%s497 + $0x8] sm:$0xf] %vm1997, %v1959
        %2001 = vst.msk [vmem:[%s497 + $0xc] sm:$0xf] %vm1997, %v1960
        %2002 = vst.msk [vmem:[%s497 + $0x10] sm:$0xf] %vm1997, %v1961
        %2003 = vst.msk [vmem:[%s497 + $0x14] sm:$0xf] %vm1997, %v1962
        %2004 = vst.msk [vmem:[%s497 + $0x18] sm:$0xf] %vm1997, %v1963
        %2005 = vst.msk [vmem:[%s497 + $0x1c] sm:$0xf] %vm1997, %v1964
        %2006 = vst.msk [vmem:[%s497 + $0x20] sm:$0xf] %vm1997, %v1965
        %2007 = vst.msk [vmem:[%s497 + $0x24] sm:$0xf] %vm1997, %v1966
        %2008 = vst.msk [vmem:[%s497 + $0x28] sm:$0xf] %vm1997, %v1967
        %2009 = vst.msk [vmem:[%s497 + $0x2c] sm:$0xf] %vm1997, %v1968
        %2010 = vst.msk [vmem:[%s497 + $0x30] sm:$0xf] %vm1997, %v1969
        %2011 = vst.msk [vmem:[%s497 + $0x34] sm:$0xf] %vm1997, %v1970
        %2012 = vst.msk [vmem:[%s497 + $0x38] sm:$0xf] %vm1997, %v1971
        %2013 = vst.msk [vmem:[%s497 + $0x3c] sm:$0xf] %vm1997, %v1972
        %2014 = vst.msk [vmem:[%s497 + $0x40] sm:$0xf] %vm1997, %v1973
        %2015 = vst.msk [vmem:[%s497 + $0x44] sm:$0xf] %vm1997, %v1974
        %2016 = vst.msk [vmem:[%s497 + $0x48] sm:$0xf] %vm1997, %v1975
        %2017 = vst.msk [vmem:[%s497 + $0x4c] sm:$0xf] %vm1997, %v1976
        %s2018 = sand.u32 %s337, 1
        %s2019 = sand.u32 %s337, 1
        %s2020 = smul.addr %s2019, 80
        %s2021 = scalar_lea.vmem [#allocation2], %s2020
        // Predicated region
        $region77: #{lpmlp_forward.1} parent=75 // pred_check
          %p2022 = pneg %p347
        $region78: #{lpmlp_forward.1} parent=75 // pred_check_branch
          %2024 = sbr.rel (%p2022) target = $region80
        $region79: #{lpmlp_forward.1} parent=75 // pred_region
          %s2025 = smul.u32 20, %s25
          %s2026 = ssub.s32 38, %s2025
          %p2027 = scmp.lt.s32.totalorder %s2026, 20
          %s2028 = scalar_select %p2027, %s2026, 20
          %s2029 = smul.u32 64, %s2028
          %p2030 = scmp.ne.s32.totalorder 0, %s2029
          %s2031 = smul.addr %s2025, 4
          %s2032 = scalar_lea.vmem %s14, %s2031
          // Predicated region
          $region81: #{lpmlp_forward.1} parent=79 // pred_check
            %p2033 = pneg %p2030
          $region82: #{lpmlp_forward.1} parent=79 // pred_check_branch
            %2035 = sbr.rel (%p2033) target = $region84
          $region83: #{lpmlp_forward.1} parent=79 // pred_region
            // Predicated region
            $region85: #{lpmlp_forward.1} parent=83 // pred_check
              _
            $region86: #{lpmlp_forward.1} parent=83 // pred_check_branch
              %2037 = sbr.rel target = $region88
            $region87: #{lpmlp_forward.1} parent=83 // pred_region
              // Predicated region
              $region107: #{lpmlp_forward.1} parent=87 // pred_check
                _
              $region108: #{lpmlp_forward.1} parent=87 // pred_check_branch
                %2126 = sbr.rel (0) target = $region110
              $region109: #{lpmlp_forward.1} parent=87 // pred_region
                %s2128 = ssub.s32 16, 1
                %s2129 = sdiv.u32.pop %s2028, 20
                %s2130 = srem.u32.pop %s2028, 20
                // While loop
                $region111: #{lpmlp_forward.1} parent=109 // loop_pre_header
                  _
                $region112: #{lpmlp_forward.1} parent=109 // loop_header
                  %s2132 = sphi 0, %s2134
                  %p2133 = scmp.ge.s32.totalorder %s2132, %s2129
                  %s2137 = sphi 0, %s2182
                  %s2138 = sphi %s2021, %s2185
                  %s2139 = sphi %s2032, %s2186
                $region113: #{lpmlp_forward.1} parent=109 // loop_header_branch
                  %2136 = sbr.rel (%p2133) target = $region117
                $region114: #{lpmlp_forward.1} parent=109 // loop_body
                  %v2140 = vld [vmem:[%s2138] sm:%s2128]
                  %2141 = vst [vmem:[%s2139] sm:%s2128] %v2140
                  %v2142 = vld [vmem:[%s2138 + $0x4] sm:%s2128]
                  %2143 = vst [vmem:[%s2139 + $0x4] sm:%s2128] %v2142
                  %v2144 = vld [vmem:[%s2138 + $0x8] sm:%s2128]
                  %2145 = vst [vmem:[%s2139 + $0x8] sm:%s2128] %v2144
                  %v2146 = vld [vmem:[%s2138 + $0xc] sm:%s2128]
                  %2147 = vst [vmem:[%s2139 + $0xc] sm:%s2128] %v2146
                  %v2148 = vld [vmem:[%s2138 + $0x10] sm:%s2128]
                  %2149 = vst [vmem:[%s2139 + $0x10] sm:%s2128] %v2148
                  %v2150 = vld [vmem:[%s2138 + $0x14] sm:%s2128]
                  %2151 = vst [vmem:[%s2139 + $0x14] sm:%s2128] %v2150
                  %v2152 = vld [vmem:[%s2138 + $0x18] sm:%s2128]
                  %2153 = vst [vmem:[%s2139 + $0x18] sm:%s2128] %v2152
                  %v2154 = vld [vmem:[%s2138 + $0x1c] sm:%s2128]
                  %2155 = vst [vmem:[%s2139 + $0x1c] sm:%s2128] %v2154
                  %v2156 = vld [vmem:[%s2138 + $0x20] sm:%s2128]
                  %2157 = vst [vmem:[%s2139 + $0x20] sm:%s2128] %v2156
                  %v2158 = vld [vmem:[%s2138 + $0x24] sm:%s2128]
                  %2159 = vst [vmem:[%s2139 + $0x24] sm:%s2128] %v2158
                  %v2160 = vld [vmem:[%s2138 + $0x28] sm:%s2128]
                  %2161 = vst [vmem:[%s2139 + $0x28] sm:%s2128] %v2160
                  %v2162 = vld [vmem:[%s2138 + $0x2c] sm:%s2128]
                  %2163 = vst [vmem:[%s2139 + $0x2c] sm:%s2128] %v2162
                  %v2164 = vld [vmem:[%s2138 + $0x30] sm:%s2128]
                  %2165 = vst [vmem:[%s2139 + $0x30] sm:%s2128] %v2164
                  %v2166 = vld [vmem:[%s2138 + $0x34] sm:%s2128]
                  %2167 = vst [vmem:[%s2139 + $0x34] sm:%s2128] %v2166
                  %v2168 = vld [vmem:[%s2138 + $0x38] sm:%s2128]
                  %2169 = vst [vmem:[%s2139 + $0x38] sm:%s2128] %v2168
                  %v2170 = vld [vmem:[%s2138 + $0x3c] sm:%s2128]
                  %2171 = vst [vmem:[%s2139 + $0x3c] sm:%s2128] %v2170
                  %v2172 = vld [vmem:[%s2138 + $0x40] sm:%s2128]
                  %2173 = vst [vmem:[%s2139 + $0x40] sm:%s2128] %v2172
                  %v2174 = vld [vmem:[%s2138 + $0x44] sm:%s2128]
                  %2175 = vst [vmem:[%s2139 + $0x44] sm:%s2128] %v2174
                  %v2176 = vld [vmem:[%s2138 + $0x48] sm:%s2128]
                  %2177 = vst [vmem:[%s2139 + $0x48] sm:%s2128] %v2176
                  %v2178 = vld [vmem:[%s2138 + $0x4c] sm:%s2128]
                  %2179 = vst [vmem:[%s2139 + $0x4c] sm:%s2128] %v2178
                  %s2180 = sadd.s32 1, %s2137
                  %p2181 = scmp.ge.s32.totalorder %s2180, %s2129
                  %s2182 = scalar_select %p2181, 0, %s2180
                  %s2183 = smul.u32 %s2182, 80
                  %s2184 = smul.u32 %s2182, 80
                  %s2185 = scalar_lea.vmem %s2021, %s2183 [#allocation2]
                  %s2186 = scalar_lea.vmem %s2032, %s2184
                $region115: #{lpmlp_forward.1} parent=109 // loop_footer
                  %s2134 = sadd.s32 %s2132, 1
                $region116: #{lpmlp_forward.1} parent=109 // loop_footer_branch
                  %2131 = sbr.rel target = $region112
                $region117: #{lpmlp_forward.1} parent=109 // loop_exit
                  _
                %s2187 = sdiv.u32.pop %s2028, 20
                %s2188 = srem.u32.pop %s2028, 20
                %s2189 = smul.u32 %s2187, 20
                %s2190 = smul.u32 4, %s2189
                %s2191 = scalar_lea.vmem %s2021, %s2190 [#allocation2]
                %s2192 = smul.u32 4, %s2189
                %s2193 = scalar_lea.vmem %s2032, %s2192
                // While loop
                $region118: #{lpmlp_forward.1} parent=109 // loop_pre_header
                  _
                $region119: #{lpmlp_forward.1} parent=109 // loop_header
                  %s2195 = sphi 0, %s2197
                  %p2196 = scmp.ge.s32.totalorder %s2195, %s2188
                  %s2200 = sphi 0, %s2207
                  %s2201 = sphi %s2191, %s2210
                  %s2202 = sphi %s2193, %s2211
                $region120: #{lpmlp_forward.1} parent=109 // loop_header_branch
                  %2199 = sbr.rel (%p2196) target = $region124
                $region121: #{lpmlp_forward.1} parent=109 // loop_body
                  %v2203 = vld [vmem:[%s2201] sm:%s2128]
                  %2204 = vst [vmem:[%s2202] sm:%s2128] %v2203
                  %s2205 = sadd.s32 1, %s2200
                  %p2206 = scmp.ge.s32.totalorder %s2205, %s2188
                  %s2207 = scalar_select %p2206, 0, %s2205
                  %s2208 = smul.u32 %s2207, 4
                  %s2209 = smul.u32 %s2207, 4
                  %s2210 = scalar_lea.vmem %s2191, %s2208 [#allocation2]
                  %s2211 = scalar_lea.vmem %s2193, %s2209
                $region122: #{lpmlp_forward.1} parent=109 // loop_footer
                  %s2197 = sadd.s32 %s2195, 1
                $region123: #{lpmlp_forward.1} parent=109 // loop_footer_branch
                  %2194 = sbr.rel target = $region119
                $region124: #{lpmlp_forward.1} parent=109 // loop_exit
                  _
              $region110: #{lpmlp_forward.1} parent=87 // pred_fallthru
                _
            $region88: #{lpmlp_forward.1} parent=83 // pred_fallthru
              _
            // Predicated region
            $region89: #{lpmlp_forward.1} parent=83 // pred_check
              _
            $region90: #{lpmlp_forward.1} parent=83 // pred_check_branch
              %2039 = sbr.rel (0) target = $region92
            $region91: #{lpmlp_forward.1} parent=83 // pred_region
              %s2041 = ssub.s32 16, 1
              %s2042 = sdiv.u32.pop %s2028, 20
              %s2043 = srem.u32.pop %s2028, 20
              // While loop
              $region93: #{lpmlp_forward.1} parent=91 // loop_pre_header
                _
              $region94: #{lpmlp_forward.1} parent=91 // loop_header
                %s2045 = sphi 0, %s2047
                %p2046 = scmp.ge.s32.totalorder %s2045, %s2042
                %s2050 = sphi 0, %s2095
                %s2051 = sphi %s2021, %s2098
                %s2052 = sphi %s2032, %s2099
              $region95: #{lpmlp_forward.1} parent=91 // loop_header_branch
                %2049 = sbr.rel (%p2046) target = $region99
              $region96: #{lpmlp_forward.1} parent=91 // loop_body
                %v2053 = vld [vmem:[%s2051] sm:%s2041]
                %2054 = vst [vmem:[%s2052] sm:%s2041] %v2053
                %v2055 = vld [vmem:[%s2051 + $0x4] sm:%s2041]
                %2056 = vst [vmem:[%s2052 + $0x4] sm:%s2041] %v2055
                %v2057 = vld [vmem:[%s2051 + $0x8] sm:%s2041]
                %2058 = vst [vmem:[%s2052 + $0x8] sm:%s2041] %v2057
                %v2059 = vld [vmem:[%s2051 + $0xc] sm:%s2041]
                %2060 = vst [vmem:[%s2052 + $0xc] sm:%s2041] %v2059
                %v2061 = vld [vmem:[%s2051 + $0x10] sm:%s2041]
                %2062 = vst [vmem:[%s2052 + $0x10] sm:%s2041] %v2061
                %v2063 = vld [vmem:[%s2051 + $0x14] sm:%s2041]
                %2064 = vst [vmem:[%s2052 + $0x14] sm:%s2041] %v2063
                %v2065 = vld [vmem:[%s2051 + $0x18] sm:%s2041]
                %2066 = vst [vmem:[%s2052 + $0x18] sm:%s2041] %v2065
                %v2067 = vld [vmem:[%s2051 + $0x1c] sm:%s2041]
                %2068 = vst [vmem:[%s2052 + $0x1c] sm:%s2041] %v2067
                %v2069 = vld [vmem:[%s2051 + $0x20] sm:%s2041]
                %2070 = vst [vmem:[%s2052 + $0x20] sm:%s2041] %v2069
                %v2071 = vld [vmem:[%s2051 + $0x24] sm:%s2041]
                %2072 = vst [vmem:[%s2052 + $0x24] sm:%s2041] %v2071
                %v2073 = vld [vmem:[%s2051 + $0x28] sm:%s2041]
                %2074 = vst [vmem:[%s2052 + $0x28] sm:%s2041] %v2073
                %v2075 = vld [vmem:[%s2051 + $0x2c] sm:%s2041]
                %2076 = vst [vmem:[%s2052 + $0x2c] sm:%s2041] %v2075
                %v2077 = vld [vmem:[%s2051 + $0x30] sm:%s2041]
                %2078 = vst [vmem:[%s2052 + $0x30] sm:%s2041] %v2077
                %v2079 = vld [vmem:[%s2051 + $0x34] sm:%s2041]
                %2080 = vst [vmem:[%s2052 + $0x34] sm:%s2041] %v2079
                %v2081 = vld [vmem:[%s2051 + $0x38] sm:%s2041]
                %2082 = vst [vmem:[%s2052 + $0x38] sm:%s2041] %v2081
                %v2083 = vld [vmem:[%s2051 + $0x3c] sm:%s2041]
                %2084 = vst [vmem:[%s2052 + $0x3c] sm:%s2041] %v2083
                %v2085 = vld [vmem:[%s2051 + $0x40] sm:%s2041]
                %2086 = vst [vmem:[%s2052 + $0x40] sm:%s2041] %v2085
                %v2087 = vld [vmem:[%s2051 + $0x44] sm:%s2041]
                %2088 = vst [vmem:[%s2052 + $0x44] sm:%s2041] %v2087
                %v2089 = vld [vmem:[%s2051 + $0x48] sm:%s2041]
                %2090 = vst [vmem:[%s2052 + $0x48] sm:%s2041] %v2089
                %v2091 = vld [vmem:[%s2051 + $0x4c] sm:%s2041]
                %2092 = vst [vmem:[%s2052 + $0x4c] sm:%s2041] %v2091
                %s2093 = sadd.s32 1, %s2050
                %p2094 = scmp.ge.s32.totalorder %s2093, %s2042
                %s2095 = scalar_select %p2094, 0, %s2093
                %s2096 = smul.u32 %s2095, 80
                %s2097 = smul.u32 %s2095, 80
                %s2098 = scalar_lea.vmem %s2021, %s2096 [#allocation2]
                %s2099 = scalar_lea.vmem %s2032, %s2097
              $region97: #{lpmlp_forward.1} parent=91 // loop_footer
                %s2047 = sadd.s32 %s2045, 1
              $region98: #{lpmlp_forward.1} parent=91 // loop_footer_branch
                %2044 = sbr.rel target = $region94
              $region99: #{lpmlp_forward.1} parent=91 // loop_exit
                _
              %s2100 = sdiv.u32.pop %s2028, 20
              %s2101 = srem.u32.pop %s2028, 20
              %s2102 = smul.u32 %s2100, 20
              %s2103 = smul.u32 4, %s2102
              %s2104 = scalar_lea.vmem %s2021, %s2103 [#allocation2]
              %s2105 = smul.u32 4, %s2102
              %s2106 = scalar_lea.vmem %s2032, %s2105
              // While loop
              $region100: #{lpmlp_forward.1} parent=91 // loop_pre_header
                _
              $region101: #{lpmlp_forward.1} parent=91 // loop_header
                %s2108 = sphi 0, %s2110
                %p2109 = scmp.ge.s32.totalorder %s2108, %s2101
                %s2113 = sphi 0, %s2120
                %s2114 = sphi %s2104, %s2123
                %s2115 = sphi %s2106, %s2124
              $region102: #{lpmlp_forward.1} parent=91 // loop_header_branch
                %2112 = sbr.rel (%p2109) target = $region106
              $region103: #{lpmlp_forward.1} parent=91 // loop_body
                %v2116 = vld [vmem:[%s2114] sm:%s2041]
                %2117 = vst [vmem:[%s2115] sm:%s2041] %v2116
                %s2118 = sadd.s32 1, %s2113
                %p2119 = scmp.ge.s32.totalorder %s2118, %s2101
                %s2120 = scalar_select %p2119, 0, %s2118
                %s2121 = smul.u32 %s2120, 4
                %s2122 = smul.u32 %s2120, 4
                %s2123 = scalar_lea.vmem %s2104, %s2121 [#allocation2]
                %s2124 = scalar_lea.vmem %s2106, %s2122
              $region104: #{lpmlp_forward.1} parent=91 // loop_footer
                %s2110 = sadd.s32 %s2108, 1
              $region105: #{lpmlp_forward.1} parent=91 // loop_footer_branch
                %2107 = sbr.rel target = $region101
              $region106: #{lpmlp_forward.1} parent=91 // loop_exit
                _
            $region92: #{lpmlp_forward.1} parent=83 // pred_fallthru
              _
          $region84: #{lpmlp_forward.1} parent=79 // pred_fallthru
            _
          %2212 = vnop
        $region80: #{lpmlp_forward.1} parent=75 // pred_fallthru
          _
      $region76: #{lpmlp_forward.1} parent=5 // pred_fallthru
        _
      %p2213 = scmp.le.s32.totalorder 2, %s20
      // Predicated region
      $region125: #{lpmlp_forward.1} parent=5 // pred_check
        %p2214 = pneg %p2213
      $region126: #{lpmlp_forward.1} parent=5 // pred_check_branch
        %2216 = sbr.rel (%p2214) target = $region128
      $region127: #{lpmlp_forward.1} parent=5 // pred_region
        %s2217 = ssub.s32 %s20, 2
        // Predicated region
        $region129: #{lpmlp_forward.1} parent=127 // pred_check
          %p2218 = pneg %p353
        $region130: #{lpmlp_forward.1} parent=127 // pred_check_branch
          %2220 = sbr.rel (%p2218) target = $region132
        $region131: #{lpmlp_forward.1} parent=127 // pred_region
          %s2221 = sand.u32 %s338, 1
          %s2222 = sand.u32 %s338, 1
          %s2223 = smul.addr %s2222, 80
          %s2224 = scalar_lea.vmem [#allocation2], %s2223
        $region132: #{lpmlp_forward.1} parent=127 // pred_fallthru
          _
      $region128: #{lpmlp_forward.1} parent=5 // pred_fallthru
        _
    $region6: #{lpmlp_forward.1} parent=1 // loop_footer
      %s24 = sadd.s32 1, %s20
    $region7: #{lpmlp_forward.1} parent=1 // loop_footer_branch
      %19 = sbr.rel target = $region3
    $region8: #{lpmlp_forward.1} parent=1 // loop_exit
      _

// kernel: lpmlp_forward.1
$region0: #{lpmlp_forward.1}
  #allocation0 [shape = 'u32[]', space=smem, size = 0x4, offset = 0x4, fixed_abs, tag = 'smem constant byte address 0x4 - core index']
  #allocation1 [shape = 'u32[144,128]{1,0:T(1,128)}', space=vmem, size = 0x12000, scoped, tag = 'internal scratch']
  %s0 = inlined_call_operand.vmem [shape: f32[300,16], index: 0, kind: input, shape index: {}]
  %s1 = inlined_call_operand.vmem [shape: f32[300,8], index: 1, kind: input, shape index: {}]
  %s2 = inlined_call_operand.vmem [shape: bf16[16,128], index: 2, kind: input, shape index: {}]
  %s3 = inlined_call_operand.vmem [shape: f32[1,128], index: 3, kind: input, shape index: {}]
  %s4 = inlined_call_operand.vmem [shape: bf16[128,128], index: 4, kind: input, shape index: {}]
  %s5 = inlined_call_operand.vmem [shape: f32[1,128], index: 5, kind: input, shape index: {}]
  %s6 = inlined_call_operand.vmem [shape: bf16[128,8], index: 6, kind: input, shape index: {}]
  %s7 = inlined_call_operand.vmem [shape: bf16[16,8], index: 7, kind: input, shape index: {}]
  %s8 = inlined_call_operand.vmem [shape: bf16[8,128], index: 8, kind: input, shape index: {}]
  %s9 = inlined_call_operand.vmem [shape: f32[1,128], index: 9, kind: input, shape index: {}]
  %s10 = inlined_call_operand.vmem [shape: bf16[128,128], index: 10, kind: input, shape index: {}]
  %s11 = inlined_call_operand.vmem [shape: f32[1,128], index: 11, kind: input, shape index: {}]
  %s12 = inlined_call_operand.vmem [shape: bf16[128,8], index: 12, kind: input, shape index: {}]
  %s13 = inlined_call_operand.vmem [shape: f32[1,8], index: 13, kind: input, shape index: {}]
  %s14 = inlined_call_operand.vmem [shape: bf16[300,8], index: 14, kind: output, shape index: {}]
  %s15 = sld [smem:[#allocation0]]
  $region133: #{lpmlp_forward.1} parent=0
    _
  %s17 = ssub.s32 1, %s15
  %s18 = scalar_select 0, %s17, %s15
  $region1: #{lpmlp_forward.1} parent=0
    #allocation2 [shape = 'u8[81920]{0}', space=vmem, size = 0x14000, scoped, tag = 'output window, operand 0']
    loop: start=0, step=1, limit=4
    $region2: #{lpmlp_forward.1} parent=1 // loop_pre_header
      _
    $region3: #{lpmlp_forward.1} parent=1 // loop_header
      %s20 = sphi 0, %s24
      %p21 = scmp.ge.s32.totalorder %s20, 4
      %s30 = sphi 0, %s32
      %s33 = sphi 0, %s30
      %s34 = sphi 0, %s33
      %s50 = sphi 0, %s34
      %s56 = sphi 0, %s58
      %s59 = sphi 0, %s56
      %s60 = sphi 0, %s59
      %s76 = sphi 0, %s60
      %s80 = sphi 0, %s80
      %s82 = sphi 0, %s80
      %s83 = sphi 0, %s82
      %s97 = sphi 0, %s83
      %s101 = sphi 0, %s101
      %s103 = sphi 0, %s101
      %s104 = sphi 0, %s103
      %s118 = sphi 0, %s104
      %s122 = sphi 0, %s122
      %s124 = sphi 0, %s122
      %s125 = sphi 0, %s124
      %s139 = sphi 0, %s125
      %s143 = sphi 0, %s143
      %s145 = sphi 0, %s143
      %s146 = sphi 0, %s145
      %s160 = sphi 0, %s146
      %s164 = sphi 0, %s164
      %s166 = sphi 0, %s164
      %s167 = sphi 0, %s166
      %s181 = sphi 0, %s167
      %s185 = sphi 0, %s185
      %s187 = sphi 0, %s185
      %s188 = sphi 0, %s187
      %s202 = sphi 0, %s188
      %s206 = sphi 0, %s206
      %s208 = sphi 0, %s206
      %s209 = sphi 0, %s208
      %s223 = sphi 0, %s209
      %s227 = sphi 0, %s227
      %s229 = sphi 0, %s227
      %s230 = sphi 0, %s229
      %s244 = sphi 0, %s230
      %s248 = sphi 0, %s248
      %s250 = sphi 0, %s248
      %s251 = sphi 0, %s250
      %s265 = sphi 0, %s251
      %s269 = sphi 0, %s269
      %s271 = sphi 0, %s269
      %s272 = sphi 0, %s271
      %s286 = sphi 0, %s272
      %s290 = sphi 0, %s290
      %s292 = sphi 0, %s290
      %s293 = sphi 0, %s292
      %s307 = sphi 0, %s293
      %s311 = sphi 0, %s311
      %s313 = sphi 0, %s311
      %s314 = sphi 0, %s313
      %s328 = sphi 0, %s314
      %s334 = sphi 0, %s336
      %s337 = sphi 0, %s334
      %s338 = sphi 0, %s337
      %s354 = sphi 0, %s338
    $region4: #{lpmlp_forward.1} parent=1 // loop_header_branch
      %23 = sbr.rel (%p21) target = $region8
    $region5: #{lpmlp_forward.1} parent=1 // loop_body
      %s25 = ssub.s32 %s20, 1
      %s26 = ssub.s32 %s20, 2
      %s27 = sadd.s32 %s20, 1
      %s28 = ssub.s32 %s20, %s27
      %p29 = scmp.eq.s32.totalorder %s28, 0
      %s31 = sadd.s32 %s30, 1
      %s32 = scalar_select %p29, %s30, %s31
      %p35 = pneg %p29
      %p36 = scmp.eq.s32.totalorder %s20, 1
      %p37 = por %p35, %p36
      %p38 = scmp.ne.s32.totalorder %s30, %s33
      %p39 = scmp.eq.s32.totalorder %s20, 0
      %p40 = por %p38, %p39
      %p41 = scmp.ne.s32.totalorder %s30, %s33
      %p42 = scmp.eq.s32.totalorder %s25, 1
      %p43 = por %p41, %p42
      %p44 = scmp.ne.s32.totalorder %s33, %s34
      %p45 = scmp.eq.s32.totalorder %s25, 0
      %p46 = por %p44, %p45
      %p47 = scmp.ne.s32.totalorder %s33, %s34
      %p48 = scmp.eq.s32.totalorder %s26, 1
      %p49 = por %p47, %p48
      %p51 = scmp.ne.s32.totalorder %s34, %s50
      %p52 = scmp.eq.s32.totalorder %s26, 0
      %p53 = por %p51, %p52
      %s54 = ssub.s32 %s20, %s27
      %p55 = scmp.eq.s32.totalorder %s54, 0
      %s57 = sadd.s32 %s56, 1
      %s58 = scalar_select %p55, %s56, %s57
      %p61 = pneg %p55
      %p62 = scmp.eq.s32.totalorder %s20, 1
      %p63 = por %p61, %p62
      %p64 = scmp.ne.s32.totalorder %s56, %s59
      %p65 = scmp.eq.s32.totalorder %s20, 0
      %p66 = por %p64, %p65
      %p67 = scmp.ne.s32.totalorder %s56, %s59
      %p68 = scmp.eq.s32.totalorder %s25, 1
      %p69 = por %p67, %p68
      %p70 = scmp.ne.s32.totalorder %s59, %s60
      %p71 = scmp.eq.s32.totalorder %s25, 0
      %p72 = por %p70, %p71
      %p73 = scmp.ne.s32.totalorder %s59, %s60
      %p74 = scmp.eq.s32.totalorder %s26, 1
      %p75 = por %p73, %p74
      %p77 = scmp.ne.s32.totalorder %s60, %s76
      %p78 = scmp.eq.s32.totalorder %s26, 0
      %p79 = por %p77, %p78
      %s81 = sadd.s32 %s80, 1
      %p84 = scmp.eq.s32.totalorder %s20, 1
      %p85 = scmp.ne.s32.totalorder %s80, %s82
      %p86 = scmp.eq.s32.totalorder %s20, 0
      %p87 = por %p85, %p86
      %p88 = scmp.ne.s32.totalorder %s80, %s82
      %p89 = scmp.eq.s32.totalorder %s25, 1
      %p90 = por %p88, %p89
      %p91 = scmp.ne.s32.totalorder %s82, %s83
      %p92 = scmp.eq.s32.totalorder %s25, 0
      %p93 = por %p91, %p92
      %p94 = scmp.ne.s32.totalorder %s82, %s83
      %p95 = scmp.eq.s32.totalorder %s26, 1
      %p96 = por %p94, %p95
      %p98 = scmp.ne.s32.totalorder %s83, %s97
      %p99 = scmp.eq.s32.totalorder %s26, 0
      %p100 = por %p98, %p99
      %s102 = sadd.s32 %s101, 1
      %p105 = scmp.eq.s32.totalorder %s20, 1
      %p106 = scmp.ne.s32.totalorder %s101, %s103
      %p107 = scmp.eq.s32.totalorder %s20, 0
      %p108 = por %p106, %p107
      %p109 = scmp.ne.s32.totalorder %s101, %s103
      %p110 = scmp.eq.s32.totalorder %s25, 1
      %p111 = por %p109, %p110
      %p112 = scmp.ne.s32.totalorder %s103, %s104
      %p113 = scmp.eq.s32.totalorder %s25, 0
      %p114 = por %p112, %p113
      %p115 = scmp.ne.s32.totalorder %s103, %s104
      %p116 = scmp.eq.s32.totalorder %s26, 1
      %p117 = por %p115, %p116
      %p119 = scmp.ne.s32.totalorder %s104, %s118
      %p120 = scmp.eq.s32.totalorder %s26, 0
      %p121 = por %p119, %p120
      %s123 = sadd.s32 %s122, 1
      %p126 = scmp.eq.s32.totalorder %s20, 1
      %p127 = scmp.ne.s32.totalorder %s122, %s124
      %p128 = scmp.eq.s32.totalorder %s20, 0
      %p129 = por %p127, %p128
      %p130 = scmp.ne.s32.totalorder %s122, %s124
      %p131 = scmp.eq.s32.totalorder %s25, 1
      %p132 = por %p130, %p131
      %p133 = scmp.ne.s32.totalorder %s124, %s125
      %p134 = scmp.eq.s32.totalorder %s25, 0
      %p135 = por %p133, %p134
      %p136 = scmp.ne.s32.totalorder %s124, %s125
      %p137 = scmp.eq.s32.totalorder %s26, 1
      %p138 = por %p136, %p137
      %p140 = scmp.ne.s32.totalorder %s125, %s139
      %p141 = scmp.eq.s32.totalorder %s26, 0
      %p142 = por %p140, %p141
      %s144 = sadd.s32 %s143, 1
      %p147 = scmp.eq.s32.totalorder %s20, 1
      %p148 = scmp.ne.s32.totalorder %s143, %s145
      %p149 = scmp.eq.s32.totalorder %s20, 0
      %p150 = por %p148, %p149
      %p151 = scmp.ne.s32.totalorder %s143, %s145
      %p152 = scmp.eq.s32.totalorder %s25, 1
      %p153 = por %p151, %p152
      %p154 = scmp.ne.s32.totalorder %s145, %s146
      %p155 = scmp.eq.s32.totalorder %s25, 0
      %p156 = por %p154, %p155
      %p157 = scmp.ne.s32.totalorder %s145, %s146
      %p158 = scmp.eq.s32.totalorder %s26, 1
      %p159 = por %p157, %p158
      %p161 = scmp.ne.s32.totalorder %s146, %s160
      %p162 = scmp.eq.s32.totalorder %s26, 0
      %p163 = por %p161, %p162
      %s165 = sadd.s32 %s164, 1
      %p168 = scmp.eq.s32.totalorder %s20, 1
      %p169 = scmp.ne.s32.totalorder %s164, %s166
      %p170 = scmp.eq.s32.totalorder %s20, 0
      %p171 = por %p169, %p170
      %p172 = scmp.ne.s32.totalorder %s164, %s166
      %p173 = scmp.eq.s32.totalorder %s25, 1
      %p174 = por %p172, %p173
      %p175 = scmp.ne.s32.totalorder %s166, %s167
      %p176 = scmp.eq.s32.totalorder %s25, 0
      %p177 = por %p175, %p176
      %p178 = scmp.ne.s32.totalorder %s166, %s167
      %p179 = scmp.eq.s32.totalorder %s26, 1
      %p180 = por %p178, %p179
      %p182 = scmp.ne.s32.totalorder %s167, %s181
      %p183 = scmp.eq.s32.totalorder %s26, 0
      %p184 = por %p182, %p183
      %s186 = sadd.s32 %s185, 1
      %p189 = scmp.eq.s32.totalorder %s20, 1
      %p190 = scmp.ne.s32.totalorder %s185, %s187
      %p191 = scmp.eq.s32.totalorder %s20, 0
      %p192 = por %p190, %p191
      %p193 = scmp.ne.s32.totalorder %s185, %s187
      %p194 = scmp.eq.s32.totalorder %s25, 1
      %p195 = por %p193, %p194
      %p196 = scmp.ne.s32.totalorder %s187, %s188
      %p197 = scmp.eq.s32.totalorder %s25, 0
      %p198 = por %p196, %p197
      %p199 = scmp.ne.s32.totalorder %s187, %s188
      %p200 = scmp.eq.s32.totalorder %s26, 1
      %p201 = por %p199, %p200
      %p203 = scmp.ne.s32.totalorder %s188, %s202
      %p204 = scmp.eq.s32.totalorder %s26, 0
      %p205 = por %p203, %p204
      %s207 = sadd.s32 %s206, 1
      %p210 = scmp.eq.s32.totalorder %s20, 1
      %p211 = scmp.ne.s32.totalorder %s206, %s208
      %p212 = scmp.eq.s32.totalorder %s20, 0
      %p213 = por %p211, %p212
      %p214 = scmp.ne.s32.totalorder %s206, %s208
      %p215 = scmp.eq.s32.totalorder %s25, 1
      %p216 = por %p214, %p215
      %p217 = scmp.ne.s32.totalorder %s208, %s209
      %p218 = scmp.eq.s32.totalorder %s25, 0
      %p219 = por %p217, %p218
      %p220 = scmp.ne.s32.totalorder %s208, %s209
      %p221 = scmp.eq.s32.totalorder %s26, 1
      %p222 = por %p220, %p221
      %p224 = scmp.ne.s32.totalorder %s209, %s223
      %p225 = scmp.eq.s32.totalorder %s26, 0
      %p226 = por %p224, %p225
      %s228 = sadd.s32 %s227, 1
      %p231 = scmp.eq.s32.totalorder %s20, 1
      %p232 = scmp.ne.s32.totalorder %s227, %s229
      %p233 = scmp.eq.s32.totalorder %s20, 0
      %p234 = por %p232, %p233
      %p235 = scmp.ne.s32.totalorder %s227, %s229
      %p236 = scmp.eq.s32.totalorder %s25, 1
      %p237 = por %p235, %p236
      %p238 = scmp.ne.s32.totalorder %s229, %s230
      %p239 = scmp.eq.s32.totalorder %s25, 0
      %p240 = por %p238, %p239
      %p241 = scmp.ne.s32.totalorder %s229, %s230
      %p242 = scmp.eq.s32.totalorder %s26, 1
      %p243 = por %p241, %p242
      %p245 = scmp.ne.s32.totalorder %s230, %s244
      %p246 = scmp.eq.s32.totalorder %s26, 0
      %p247 = por %p245, %p246
      %s249 = sadd.s32 %s248, 1
      %p252 = scmp.eq.s32.totalorder %s20, 1
      %p253 = scmp.ne.s32.totalorder %s248, %s250
      %p254 = scmp.eq.s32.totalorder %s20, 0
      %p255 = por %p253, %p254
      %p256 = scmp.ne.s32.totalorder %s248, %s250
      %p257 = scmp.eq.s32.totalorder %s25, 1
      %p258 = por %p256, %p257
      %p259 = scmp.ne.s32.totalorder %s250, %s251
      %p260 = scmp.eq.s32.totalorder %s25, 0
      %p261 = por %p259, %p260
      %p262 = scmp.ne.s32.totalorder %s250, %s251
      %p263 = scmp.eq.s32.totalorder %s26, 1
      %p264 = por %p262, %p263
      %p266 = scmp.ne.s32.totalorder %s251, %s265
      %p267 = scmp.eq.s32.totalorder %s26, 0
      %p268 = por %p266, %p267
      %s270 = sadd.s32 %s269, 1
      %p273 = scmp.eq.s32.totalorder %s20, 1
      %p274 = scmp.ne.s32.totalorder %s269, %s271
      %p275 = scmp.eq.s32.totalorder %s20, 0
      %p276 = por %p274, %p275
      %p277 = scmp.ne.s32.totalorder %s269, %s271
      %p278 = scmp.eq.s32.totalorder %s25, 1
      %p279 = por %p277, %p278
      %p280 = scmp.ne.s32.totalorder %s271, %s272
      %p281 = scmp.eq.s32.totalorder %s25, 0
      %p282 = por %p280, %p281
      %p283 = scmp.ne.s32.totalorder %s271, %s272
      %p284 = scmp.eq.s32.totalorder %s26, 1
      %p285 = por %p283, %p284
      %p287 = scmp.ne.s32.totalorder %s272, %s286
      %p288 = scmp.eq.s32.totalorder %s26, 0
      %p289 = por %p287, %p288
      %s291 = sadd.s32 %s290, 1
      %p294 = scmp.eq.s32.totalorder %s20, 1
      %p295 = scmp.ne.s32.totalorder %s290, %s292
      %p296 = scmp.eq.s32.totalorder %s20, 0
      %p297 = por %p295, %p296
      %p298 = scmp.ne.s32.totalorder %s290, %s292
      %p299 = scmp.eq.s32.totalorder %s25, 1
      %p300 = por %p298, %p299
      %p301 = scmp.ne.s32.totalorder %s292, %s293
      %p302 = scmp.eq.s32.totalorder %s25, 0
      %p303 = por %p301, %p302
      %p304 = scmp.ne.s32.totalorder %s292, %s293
      %p305 = scmp.eq.s32.totalorder %s26, 1
      %p306 = por %p304, %p305
      %p308 = scmp.ne.s32.totalorder %s293, %s307
      %p309 = scmp.eq.s32.totalorder %s26, 0
      %p310 = por %p308, %p309
      %s312 = sadd.s32 %s311, 1
      %p315 = scmp.eq.s32.totalorder %s20, 1
      %p316 = scmp.ne.s32.totalorder %s311, %s313
      %p317 = scmp.eq.s32.totalorder %s20, 0
      %p318 = por %p316, %p317
      %p319 = scmp.ne.s32.totalorder %s311, %s313
      %p320 = scmp.eq.s32.totalorder %s25, 1
      %p321 = por %p319, %p320
      %p322 = scmp.ne.s32.totalorder %s313, %s314
      %p323 = scmp.eq.s32.totalorder %s25, 0
      %p324 = por %p322, %p323
      %p325 = scmp.ne.s32.totalorder %s313, %s314
      %p326 = scmp.eq.s32.totalorder %s26, 1
      %p327 = por %p325, %p326
      %p329 = scmp.ne.s32.totalorder %s314, %s328
      %p330 = scmp.eq.s32.totalorder %s26, 0
      %p331 = por %p329, %p330
      %s332 = ssub.s32 %s20, %s27
      %p333 = scmp.eq.s32.totalorder %s332, 0
      %s335 = sadd.s32 %s334, 1
      %s336 = scalar_select %p333, %s334, %s335
      %p339 = pneg %p333
      %p340 = scmp.eq.s32.totalorder %s20, 1
      %p341 = por %p339, %p340
      %p342 = scmp.ne.s32.totalorder %s334, %s337
      %p343 = scmp.eq.s32.totalorder %s20, 0
      %p344 = por %p342, %p343
      %p345 = scmp.ne.s32.totalorder %s334, %s337
      %p346 = scmp.eq.s32.totalorder %s25, 1
      %p347 = por %p345, %p346
      %p348 = scmp.ne.s32.totalorder %s337, %s338
      %p349 = scmp.eq.s32.totalorder %s25, 0
      %p350 = por %p348, %p349
      %p351 = scmp.ne.s32.totalorder %s337, %s338
      %p352 = scmp.eq.s32.totalorder %s26, 1
      %p353 = por %p351, %p352
      %p355 = scmp.ne.s32.totalorder %s338, %s354
      %p356 = scmp.eq.s32.totalorder %s26, 0
      %p357 = por %p355, %p356
      %p358 = scmp.le.s32.totalorder 1, %s20
      %p359 = scmp.lt.s32.totalorder %s20, 3
      %p360 = pnand %p358, %p359
      %p361 = pneg %p360
      // Predicated region
      $region9: #{lpmlp_forward.1} parent=5 // pred_check
        _
      $region10: #{lpmlp_forward.1} parent=5 // pred_check_branch
        %363 = sbr.rel (%p360) target = $region12
      $region11: #{lpmlp_forward.1} parent=5 // pred_region
        %s364 = ssub.s32 %s20, 1
        // Predicated region
        $region13: #{lpmlp_forward.1} parent=11 // pred_check
          %p365 = pneg %p93
        $region14: #{lpmlp_forward.1} parent=11 // pred_check_branch
          %367 = sbr.rel (%p365) target = $region16
        $region15: #{lpmlp_forward.1} parent=11 // pred_region
          _
        $region16: #{lpmlp_forward.1} parent=11 // pred_fallthru
          _
        // Predicated region
        $region17: #{lpmlp_forward.1} parent=11 // pred_check
          %p368 = pneg %p114
        $region18: #{lpmlp_forward.1} parent=11 // pred_check_branch
          %370 = sbr.rel (%p368) target = $region20
        $region19: #{lpmlp_forward.1} parent=11 // pred_region
          _
        $region20: #{lpmlp_forward.1} parent=11 // pred_fallthru
          _
        // Predicated region
        $region21: #{lpmlp_forward.1} parent=11 // pred_check
          %p371 = pneg %p135
        $region22: #{lpmlp_forward.1} parent=11 // pred_check_branch
          %373 = sbr.rel (%p371) target = $region24
        $region23: #{lpmlp_forward.1} parent=11 // pred_region
          _
        $region24: #{lpmlp_forward.1} parent=11 // pred_fallthru
          _
        // Predicated region
        $region25: #{lpmlp_forward.1} parent=11 // pred_check
          %p374 = pneg %p156
        $region26: #{lpmlp_forward.1} parent=11 // pred_check_branch
          %376 = sbr.rel (%p374) target = $region28
        $region27: #{lpmlp_forward.1} parent=11 // pred_region
          _
        $region28: #{lpmlp_forward.1} parent=11 // pred_fallthru
          _
        // Predicated region
        $region29: #{lpmlp_forward.1} parent=11 // pred_check
          %p377 = pneg %p177
        $region30: #{lpmlp_forward.1} parent=11 // pred_check_branch
          %379 = sbr.rel (%p377) target = $region32
        $region31: #{lpmlp_forward.1} parent=11 // pred_region
          _
        $region32: #{lpmlp_forward.1} parent=11 // pred_fallthru
          _
        // Predicated region
        $region33: #{lpmlp_forward.1} parent=11 // pred_check
          %p380 = pneg %p198
        $region34: #{lpmlp_forward.1} parent=11 // pred_check_branch
          %382 = sbr.rel (%p380) target = $region36
        $region35: #{lpmlp_forward.1} parent=11 // pred_region
          _
        $region36: #{lpmlp_forward.1} parent=11 // pred_fallthru
          _
        // Predicated region
        $region37: #{lpmlp_forward.1} parent=11 // pred_check
          %p383 = pneg %p219
        $region38: #{lpmlp_forward.1} parent=11 // pred_check_branch
          %385 = sbr.rel (%p383) target = $region40
        $region39: #{lpmlp_forward.1} parent=11 // pred_region
          _
        $region40: #{lpmlp_forward.1} parent=11 // pred_fallthru
          _
        // Predicated region
        $region41: #{lpmlp_forward.1} parent=11 // pred_check
          %p386 = pneg %p240
        $region42: #{lpmlp_forward.1} parent=11 // pred_check_branch
          %388 = sbr.rel (%p386) target = $region44
        $region43: #{lpmlp_forward.1} parent=11 // pred_region
          _
        $region44: #{lpmlp_forward.1} parent=11 // pred_fallthru
          _
        // Predicated region
        $region45: #{lpmlp_forward.1} parent=11 // pred_check
          %p389 = pneg %p261
        $region46: #{lpmlp_forward.1} parent=11 // pred_check_branch
          %391 = sbr.rel (%p389) target = $region48
        $region47: #{lpmlp_forward.1} parent=11 // pred_region
          _
        $region48: #{lpmlp_forward.1} parent=11 // pred_fallthru
          _
        // Predicated region
        $region49: #{lpmlp_forward.1} parent=11 // pred_check
          %p392 = pneg %p282
        $region50: #{lpmlp_forward.1} parent=11 // pred_check_branch
          %394 = sbr.rel (%p392) target = $region52
        $region51: #{lpmlp_forward.1} parent=11 // pred_region
          _
        $region52: #{lpmlp_forward.1} parent=11 // pred_fallthru
          _
        // Predicated region
        $region53: #{lpmlp_forward.1} parent=11 // pred_check
          %p395 = pneg %p303
        $region54: #{lpmlp_forward.1} parent=11 // pred_check_branch
          %397 = sbr.rel (%p395) target = $region56
        $region55: #{lpmlp_forward.1} parent=11 // pred_region
          _
        $region56: #{lpmlp_forward.1} parent=11 // pred_fallthru
          _
        // Predicated region
        $region57: #{lpmlp_forward.1} parent=11 // pred_check
          %p398 = pneg %p324
        $region58: #{lpmlp_forward.1} parent=11 // pred_check_branch
          %400 = sbr.rel (%p398) target = $region60
        $region59: #{lpmlp_forward.1} parent=11 // pred_region
          _
        $region60: #{lpmlp_forward.1} parent=11 // pred_fallthru
          _
      $region12: #{lpmlp_forward.1} parent=5 // pred_fallthru
        _
      %p401 = scmp.lt.s32.totalorder %s20, 2
      // Predicated region
      $region61: #{lpmlp_forward.1} parent=5 // pred_check
        %p402 = pneg %p401
      $region62: #{lpmlp_forward.1} parent=5 // pred_check_branch
        %404 = sbr.rel (%p402) target = $region64
      $region63: #{lpmlp_forward.1} parent=5 // pred_region
        // Predicated region
        $region65: #{lpmlp_forward.1} parent=63 // pred_check
          %p405 = pneg %p40
        $region66: #{lpmlp_forward.1} parent=63 // pred_check_branch
          %407 = sbr.rel (%p405) target = $region68
        $region67: #{lpmlp_forward.1} parent=63 // pred_region
          %s408 = smul.u32 20, %s20
          %s409 = ssub.s32 38, %s408
          %p410 = scmp.lt.s32.totalorder %s409, 20
          %s411 = scalar_select %p410, %s409, 20
          %s412 = smul.u32 128, %s411
          %p413 = scmp.lt.s32.totalorder %s408, 37
          %s414 = scalar_select %p413, %s408, 37
          %s415 = smul.addr %s414, 8
          %s416 = scalar_lea.vmem %s0, %s415
          %s417 = smul.u32 20, %s20
          %s418 = ssub.s32 38, %s417
          %p419 = scmp.lt.s32.totalorder %s418, 20
          %s420 = scalar_select %p419, %s418, 20
          %s421 = smul.u32 128, %s420
        $region68: #{lpmlp_forward.1} parent=63 // pred_fallthru
          _
        // Predicated region
        $region69: #{lpmlp_forward.1} parent=63 // pred_check
          %p422 = pneg %p66
        $region70: #{lpmlp_forward.1} parent=63 // pred_check_branch
          %424 = sbr.rel (%p422) target = $region72
        $region71: #{lpmlp_forward.1} parent=63 // pred_region
          %s425 = smul.u32 20, %s20
          %s426 = ssub.s32 38, %s425
          %p427 = scmp.lt.s32.totalorder %s426, 20
          %s428 = scalar_select %p427, %s426, 20
          %s429 = smul.u32 128, %s428
          %p430 = scmp.lt.s32.totalorder %s425, 37
          %s431 = scalar_select %p430, %s425, 37
          %s432 = smul.addr %s431, 8
          %s433 = scalar_lea.vmem %s1, %s432
          %s434 = smul.u32 20, %s20
          %s435 = ssub.s32 38, %s434
          %p436 = scmp.lt.s32.totalorder %s435, 20
          %s437 = scalar_select %p436, %s435, 20
          %s438 = smul.u32 128, %s437
        $region72: #{lpmlp_forward.1} parent=63 // pred_fallthru
          _
      $region64: #{lpmlp_forward.1} parent=5 // pred_fallthru
        _
      %p439 = scmp.le.s32.totalorder 1, %s20
      %p440 = scmp.lt.s32.totalorder %s20, 3
      %p441 = pnand %p439, %p440
      %p442 = pneg %p441
      // Predicated region
      $region73: #{lpmlp_forward.1} parent=5 // pred_check
        _
      $region74: #{lpmlp_forward.1} parent=5 // pred_check_branch
        %444 = sbr.rel (%p441) target = $region76
      $region75: #{lpmlp_forward.1} parent=5 // pred_region
        %s445 = ssub.s32 %s20, 1
        %s446 = smul.u32 20, %s25
        %s447 = ssub.s32 38, %s446
        %p448 = scmp.lt.s32.totalorder %s447, 20
        %s449 = scalar_select %p448, %s447, 20
        %s450 = smul.u32 128, %s449
        %p451 = scmp.lt.s32.totalorder %s446, 37
        %s452 = scalar_select %p451, %s446, 37
        %s453 = smul.addr %s452, 8
        %s454 = scalar_lea.vmem %s0, %s453
        %p455 = pneg %p46
        %p456 = pneg %p43
        %s457 = smul.u32 20, %s25
        %s458 = ssub.s32 38, %s457
        %p459 = scmp.lt.s32.totalorder %s458, 20
        %s460 = scalar_select %p459, %s458, 20
        %s461 = smul.u32 128, %s460
        %p462 = scmp.lt.s32.totalorder %s457, 37
        %s463 = scalar_select %p462, %s457, 37
        %s464 = smul.addr %s463, 8
        %s465 = scalar_lea.vmem %s1, %s464
        %p466 = pneg %p72
        %p467 = pneg %p69
        %p468 = pneg %p93
        %p469 = pneg %p90
        %p470 = pneg %p114
        %p471 = pneg %p111
        %p472 = pneg %p135
        %p473 = pneg %p132
        %p474 = pneg %p156
        %p475 = pneg %p153
        %p476 = pneg %p177
        %p477 = pneg %p174
        %p478 = pneg %p198
        %p479 = pneg %p195
        %p480 = pneg %p219
        %p481 = pneg %p216
        %p482 = pneg %p240
        %p483 = pneg %p237
        %p484 = pneg %p261
        %p485 = pneg %p258
        %p486 = pneg %p282
        %p487 = pneg %p279
        %p488 = pneg %p303
        %p489 = pneg %p300
        %p490 = pneg %p324
        %p491 = pneg %p321
        %p492 = pneg %p350
        %p493 = pneg %p347
        %s494 = sand.u32 %s337, 1
        %s495 = sand.u32 %s337, 1
        %s496 = smul.addr %s495, 80
        %s497 = scalar_lea.vmem [#allocation2], %s496
        %s498 = smul.u32 20, %s25
        %s499 = ssub.s32 38, %s498
        %p500 = scmp.lt.s32.totalorder %s499, 20
        %s501 = scalar_select %p500, %s499, 20
        %s502 = smul.u32 128, %s501
        %p503 = scmp.lt.s32.totalorder %s498, 37
        %s504 = scalar_select %p503, %s498, 37
        %s505 = smul.addr %s504, 8
        %s506 = scalar_lea.vmem %s0, %s505
        %s507 = smul.u32 20, %s25
        %s508 = ssub.s32 38, %s507
        %p509 = scmp.lt.s32.totalorder %s508, 20
        %s510 = scalar_select %p509, %s508, 20
        %s511 = smul.u32 128, %s510
        %s512 = smul.u32 20, %s25
        %s513 = ssub.s32 38, %s512
        %p514 = scmp.lt.s32.totalorder %s513, 20
        %s515 = scalar_select %p514, %s513, 20
        %s516 = smul.u32 128, %s515
        %p517 = scmp.lt.s32.totalorder %s512, 37
        %s518 = scalar_select %p517, %s512, 37
        %s519 = smul.addr %s518, 8
        %s520 = scalar_lea.vmem %s1, %s519
        %s521 = smul.u32 20, %s25
        %s522 = ssub.s32 38, %s521
        %p523 = scmp.lt.s32.totalorder %s522, 20
        %s524 = scalar_select %p523, %s522, 20
        %s525 = smul.u32 128, %s524
        %s526 = smul.u32 20, %s25
        %s527 = ssub.s32 38, %s526
        %p528 = scmp.lt.s32.totalorder %s527, 20
        %s529 = scalar_select %p528, %s527, 20
        %s530 = smul.u32 64, %s529
        %v532 = vld [vmem:[%s506] sm:$0xff]
        %v533 = vld [vmem:[%s506 + $0x8] sm:$0xff]
        %v534 = vld [vmem:[%s506 + $0x10] sm:$0xff]
        %v535 = vld [vmem:[%s506 + $0x18] sm:$0xff]
        %v536 = vld [vmem:[%s506 + $0x20] sm:$0xff]
        %v537 = vld [vmem:[%s506 + $0x28] sm:$0xff]
        %v538 = vld [vmem:[%s506 + $0x30] sm:$0xff]
        %v539 = vld [vmem:[%s506 + $0x38] sm:$0xff]
        %v540 = vld [vmem:[%s506 + $0x40] sm:$0xff]
        %v541 = vld [vmem:[%s506 + $0x48] sm:$0xff]
        %v542 = vld [vmem:[%s506 + $0x50] sm:$0xff]
        %v543 = vld [vmem:[%s506 + $0x58] sm:$0xff]
        %v544 = vld [vmem:[%s506 + $0x60] sm:$0xff]
        %v545 = vld [vmem:[%s506 + $0x68] sm:$0xff]
        %v546 = vld [vmem:[%s506 + $0x70] sm:$0xff]
        %v547 = vld [vmem:[%s506 + $0x78] sm:$0xff]
        %v548 = vld [vmem:[%s506 + $0x80] sm:$0xff]
        %v549 = vld [vmem:[%s506 + $0x88] sm:$0xff]
        %v550 = vld [vmem:[%s506 + $0x90] sm:$0xff]
        %v551 = vld [vmem:[%s506 + $0x98] sm:$0xff]
        %v552 = vpack.c.bf16 %v533, %v532
        %v553 = vpack.c.bf16 %v535, %v534
        %v554 = vpack.c.bf16 %v537, %v536
        %v555 = vpack.c.bf16 %v539, %v538
        %v556 = vpack.c.bf16 %v541, %v540
        %v557 = vpack.c.bf16 %v543, %v542
        %v558 = vpack.c.bf16 %v545, %v544
        %v559 = vpack.c.bf16 %v547, %v546
        %v560 = vpack.c.bf16 %v549, %v548
        %v561 = vpack.c.bf16 %v551, %v550
        %v562 = vld [vmem:[%s520] sm:$0xff]
        %v563 = vld [vmem:[%s520 + $0x8] sm:$0xff]
        %v564 = vld [vmem:[%s520 + $0x10] sm:$0xff]
        %v565 = vld [vmem:[%s520 + $0x18] sm:$0xff]
        %v566 = vld [vmem:[%s520 + $0x20] sm:$0xff]
        %v567 = vld [vmem:[%s520 + $0x28] sm:$0xff]
        %v568 = vld [vmem:[%s520 + $0x30] sm:$0xff]
        %v569 = vld [vmem:[%s520 + $0x38] sm:$0xff]
        %v570 = vld [vmem:[%s520 + $0x40] sm:$0xff]
        %v571 = vld [vmem:[%s520 + $0x48] sm:$0xff]
        %v572 = vld [vmem:[%s520 + $0x50] sm:$0xff]
        %v573 = vld [vmem:[%s520 + $0x58] sm:$0xff]
        %v574 = vld [vmem:[%s520 + $0x60] sm:$0xff]
        %v575 = vld [vmem:[%s520 + $0x68] sm:$0xff]
        %v576 = vld [vmem:[%s520 + $0x70] sm:$0xff]
        %v577 = vld [vmem:[%s520 + $0x78] sm:$0xff]
        %v578 = vld [vmem:[%s520 + $0x80] sm:$0xff]
        %v579 = vld [vmem:[%s520 + $0x88] sm:$0xff]
        %v580 = vld [vmem:[%s520 + $0x90] sm:$0xff]
        %v581 = vld [vmem:[%s520 + $0x98] sm:$0xff]
        %v582 = vpack.c.bf16 %v563, %v562
        %v583 = vpack.c.bf16 %v565, %v564
        %v584 = vpack.c.bf16 %v567, %v566
        %v585 = vpack.c.bf16 %v569, %v568
        %v586 = vpack.c.bf16 %v571, %v570
        %v587 = vpack.c.bf16 %v573, %v572
        %v588 = vpack.c.bf16 %v575, %v574
        %v589 = vpack.c.bf16 %v577, %v576
        %v590 = vpack.c.bf16 %v579, %v578
        %v591 = vpack.c.bf16 %v581, %v580
        %v592 = vld [vmem:[%s2] sm:$0xf]
        %v593 = vld [vmem:[%s2 + $0x4] sm:$0xf]
        %v594 = vld [vmem:[%s3] sm:$0x1]
        %v596 = vlaneseq
        %v597 = vshrl.u32 %v596, 7
        %v598 = vsub.s32 0, %v597
        %v599 = vrot.slane %v594, %v598
        %v603 = vunpack.c.l.b16 %v592
        %v604 = vunpack.c.l.b16 %v593
        %v605 = vpack.c.b16 %v604, %v603
        %vm607 = vcmask 130048
        %v609 = vsel %vm607, %v552, 0
        %v612 = vsel %vm607, %v553, 0
        %v615 = vsel %vm607, %v554, 0
        %v618 = vsel %vm607, %v555, 0
        %v621 = vsel %vm607, %v556, 0
        %v624 = vsel %vm607, %v557, 0
        %v627 = vsel %vm607, %v558, 0
        %v630 = vsel %vm607, %v559, 0
        %v633 = vsel %vm607, %v560, 0
        %v636 = vsel %vm607, %v561, 0
        %638 = vmatprep.subr.bf16.mxu0 0
        %639 = vmatpush1.bf16.msra.mxu0 0
        %640 = vmatprep.subr.bf16.mxu0 0
        %641 = vmatpush1.bf16.msra.mxu0 0
        %642 = vmatprep.subr.bf16.mxu0 0
        %643 = vmatpush1.bf16.msra.mxu0 0
        %644 = vmatprep.subr.bf16.mxu0 0
        %645 = vmatpush1.bf16.msra.mxu0 0
        %646 = vmatprep.subr.bf16.mxu0 0
        %647 = vmatpush1.bf16.msra.mxu0 0
        %648 = vmatprep.subr.bf16.mxu0 0
        %649 = vmatpush1.bf16.msra.mxu0 0
        %650 = vmatprep.subr.bf16.mxu0 0
        %651 = vmatpush1.bf16.msra.mxu0 0
        %652 = vmatprep.subr.bf16.mxu0 0
        %653 = vmatpush1.bf16.msra.mxu0 %v605
        %654 = vmatprep.subr.bf16.mxu0 0
        %655 = vmatpush2.bf16.msra.mxu0 0
        %656 = vmatprep.subr.bf16.mxu0 0
        %657 = vmatpush2.bf16.msra.mxu0 0
        %658 = vmatprep.subr.bf16.mxu0 0
        %659 = vmatpush2.bf16.msra.mxu0 0
        %660 = vmatprep.subr.bf16.mxu0 0
        %661 = vmatpush2.bf16.msra.mxu0 0
        %662 = vmatprep.subr.bf16.mxu0 0
        %663 = vmatpush2.bf16.msra.mxu0 0
        %664 = vmatprep.subr.bf16.mxu0 0
        %665 = vmatpush2.bf16.msra.mxu0 0
        %666 = vmatprep.subr.bf16.mxu0 0
        %667 = vmatpush2.bf16.msra.mxu0 0
        %668 = vmatprep.subr.bf16.mxu0 0
        %669 = vmatpush2.bf16.msra.mxu0 0
        %670 = vmatprep.mubr.bf16.mxu0 0
        %671 = vmatmul.mubr.bf16.gmra.mxu0 %v609
        %v672 = vpop.f32.mrf.mxu0
        %v673 = vadd.f32 %v599, %v672
        %v674 = vpop.f32.mrf.mxu0
        %v675 = vpop.f32.mrf.mxu0
        %v676 = vadd.f32 %v599, %v675
        %v677 = vpop.f32.mrf.mxu0
        %678 = vmatprep.mubr.bf16.mxu0 0
        %679 = vmatmul.mubr.bf16.gmra.mxu0 %v612
        %v680 = vpop.f32.mrf.mxu0
        %v681 = vadd.f32 %v599, %v680
        %v682 = vpop.f32.mrf.mxu0
        %v683 = vpop.f32.mrf.mxu0
        %v684 = vadd.f32 %v599, %v683
        %v685 = vpop.f32.mrf.mxu0
        %686 = vmatprep.mubr.bf16.mxu0 0
        %687 = vmatmul.mubr.bf16.gmra.mxu0 %v615
        %v688 = vpop.f32.mrf.mxu0
        %v689 = vadd.f32 %v599, %v688
        %v690 = vpop.f32.mrf.mxu0
        %v691 = vpop.f32.mrf.mxu0
        %v692 = vadd.f32 %v599, %v691
        %v693 = vpop.f32.mrf.mxu0
        %694 = vmatprep.mubr.bf16.mxu0 0
        %695 = vmatmul.mubr.bf16.gmra.mxu0 %v618
        %v696 = vpop.f32.mrf.mxu0
        %v697 = vadd.f32 %v599, %v696
        %v698 = vpop.f32.mrf.mxu0
        %v699 = vpop.f32.mrf.mxu0
        %v700 = vadd.f32 %v599, %v699
        %v701 = vpop.f32.mrf.mxu0
        %702 = vmatprep.mubr.bf16.mxu0 0
        %703 = vmatmul.mubr.bf16.gmra.mxu0 %v621
        %v704 = vpop.f32.mrf.mxu0
        %v705 = vadd.f32 %v599, %v704
        %v706 = vpop.f32.mrf.mxu0
        %v707 = vpop.f32.mrf.mxu0
        %v708 = vadd.f32 %v599, %v707
        %v709 = vpop.f32.mrf.mxu0
        %710 = vmatprep.mubr.bf16.mxu0 0
        %711 = vmatmul.mubr.bf16.gmra.mxu0 %v624
        %v712 = vpop.f32.mrf.mxu0
        %v713 = vadd.f32 %v599, %v712
        %v714 = vpop.f32.mrf.mxu0
        %v715 = vpop.f32.mrf.mxu0
        %v716 = vadd.f32 %v599, %v715
        %v717 = vpop.f32.mrf.mxu0
        %718 = vmatprep.mubr.bf16.mxu0 0
        %719 = vmatmul.mubr.bf16.gmra.mxu0 %v627
        %v720 = vpop.f32.mrf.mxu0
        %v721 = vadd.f32 %v599, %v720
        %v722 = vpop.f32.mrf.mxu0
        %v723 = vpop.f32.mrf.mxu0
        %v724 = vadd.f32 %v599, %v723
        %v725 = vpop.f32.mrf.mxu0
        %726 = vmatprep.mubr.bf16.mxu0 0
        %727 = vmatmul.mubr.bf16.gmra.mxu0 %v630
        %v728 = vpop.f32.mrf.mxu0
        %v729 = vadd.f32 %v599, %v728
        %v730 = vpop.f32.mrf.mxu0
        %v731 = vpop.f32.mrf.mxu0
        %v732 = vadd.f32 %v599, %v731
        %v733 = vpop.f32.mrf.mxu0
        %734 = vmatprep.mubr.bf16.mxu0 0
        %735 = vmatmul.mubr.bf16.gmra.mxu0 %v633
        %v736 = vpop.f32.mrf.mxu0
        %v737 = vadd.f32 %v599, %v736
        %v738 = vpop.f32.mrf.mxu0
        %v739 = vpop.f32.mrf.mxu0
        %v740 = vadd.f32 %v599, %v739
        %v741 = vpop.f32.mrf.mxu0
        %742 = vmatprep.mubr.bf16.mxu0 0
        %743 = vmatmul.mubr.bf16.gmra.mxu0 %v636
        %v744 = vpop.f32.mrf.mxu0
        %v745 = vadd.f32 %v599, %v744
        %v746 = vpop.f32.mrf.mxu0
        %v747 = vpop.f32.mrf.mxu0
        %v748 = vadd.f32 %v599, %v747
        %v749 = vpop.f32.mrf.mxu0
        %750 = vdwg.mxu0
        %v751 = vmax.f32 %v673, 0.0
        %v752 = vmax.f32 %v676, 0.0
        %v753 = vmax.f32 %v681, 0.0
        %v754 = vmax.f32 %v684, 0.0
        %v755 = vmax.f32 %v689, 0.0
        %v756 = vmax.f32 %v692, 0.0
        %v757 = vmax.f32 %v697, 0.0
        %v758 = vmax.f32 %v700, 0.0
        %v759 = vmax.f32 %v705, 0.0
        %v760 = vmax.f32 %v708, 0.0
        %v761 = vmax.f32 %v713, 0.0
        %v762 = vmax.f32 %v716, 0.0
        %v763 = vmax.f32 %v721, 0.0
        %v764 = vmax.f32 %v724, 0.0
        %v765 = vmax.f32 %v729, 0.0
        %v766 = vmax.f32 %v732, 0.0
        %v767 = vmax.f32 %v737, 0.0
        %v768 = vmax.f32 %v740, 0.0
        %v769 = vmax.f32 %v745, 0.0
        %v770 = vmax.f32 %v748, 0.0
        %v771 = vpack.c.bf16 %v752, %v751
        %v772 = vpack.c.bf16 %v754, %v753
        %v773 = vpack.c.bf16 %v756, %v755
        %v774 = vpack.c.bf16 %v758, %v757
        %v775 = vpack.c.bf16 %v760, %v759
        %v776 = vpack.c.bf16 %v762, %v761
        %v777 = vpack.c.bf16 %v764, %v763
        %v778 = vpack.c.bf16 %v766, %v765
        %v779 = vpack.c.bf16 %v768, %v767
        %v780 = vpack.c.bf16 %v770, %v769
        %v781 = vld [vmem:[%s4] sm:$0xf]
        %v782 = vld [vmem:[%s4 + $0x4] sm:$0xf]
        %v783 = vld [vmem:[%s4 + $0x8] sm:$0xf]
        %v784 = vld [vmem:[%s4 + $0xc] sm:$0xf]
        %v785 = vld [vmem:[%s4 + $0x10] sm:$0xf]
        %v786 = vld [vmem:[%s4 + $0x14] sm:$0xf]
        %v787 = vld [vmem:[%s4 + $0x18] sm:$0xf]
        %v788 = vld [vmem:[%s4 + $0x1c] sm:$0xf]
        %v789 = vld [vmem:[%s4 + $0x20] sm:$0xf]
        %v790 = vld [vmem:[%s4 + $0x24] sm:$0xf]
        %v791 = vld [vmem:[%s4 + $0x28] sm:$0xf]
        %v792 = vld [vmem:[%s4 + $0x2c] sm:$0xf]
        %v793 = vld [vmem:[%s4 + $0x30] sm:$0xf]
        %v794 = vld [vmem:[%s4 + $0x34] sm:$0xf]
        %v795 = vld [vmem:[%s4 + $0x38] sm:$0xf]
        %v796 = vld [vmem:[%s4 + $0x3c] sm:$0xf]
        %v797 = vld [vmem:[%s5] sm:$0x1]
        %v799 = vlaneseq
        %v800 = vshrl.u32 %v799, 7
        %v801 = vsub.s32 0, %v800
        %v802 = vrot.slane %v797, %v801
        %v820 = vunpack.c.l.b16 %v781
        %v821 = vunpack.c.l.b16 %v782
        %v822 = vunpack.c.l.b16 %v783
        %v823 = vunpack.c.l.b16 %v784
        %v824 = vunpack.c.l.b16 %v785
        %v825 = vunpack.c.l.b16 %v786
        %v826 = vunpack.c.l.b16 %v787
        %v827 = vunpack.c.l.b16 %v788
        %v828 = vunpack.c.l.b16 %v789
        %v829 = vunpack.c.l.b16 %v790
        %v830 = vunpack.c.l.b16 %v791
        %v831 = vunpack.c.l.b16 %v792
        %v832 = vunpack.c.l.b16 %v793
        %v833 = vunpack.c.l.b16 %v794
        %v834 = vunpack.c.l.b16 %v795
        %v835 = vunpack.c.l.b16 %v796
        %v836 = vpack.c.b16 %v821, %v820
        %v837 = vpack.c.b16 %v823, %v822
        %v838 = vpack.c.b16 %v825, %v824
        %v839 = vpack.c.b16 %v827, %v826
        %v840 = vpack.c.b16 %v829, %v828
        %v841 = vpack.c.b16 %v831, %v830
        %v842 = vpack.c.b16 %v833, %v832
        %v843 = vpack.c.b16 %v835, %v834
        %852 = vmatprep.subr.bf16.mxu0 0
        %853 = vmatpush1.bf16.msra.mxu0 %v843
        %854 = vmatprep.subr.bf16.mxu0 0
        %855 = vmatpush1.bf16.msra.mxu0 %v842
        %856 = vmatprep.subr.bf16.mxu0 0
        %857 = vmatpush1.bf16.msra.mxu0 %v841
        %858 = vmatprep.subr.bf16.mxu0 0
        %859 = vmatpush1.bf16.msra.mxu0 %v840
        %860 = vmatprep.subr.bf16.mxu0 0
        %861 = vmatpush1.bf16.msra.mxu0 %v839
        %862 = vmatprep.subr.bf16.mxu0 0
        %863 = vmatpush1.bf16.msra.mxu0 %v838
        %864 = vmatprep.subr.bf16.mxu0 0
        %865 = vmatpush1.bf16.msra.mxu0 %v837
        %866 = vmatprep.subr.bf16.mxu0 0
        %867 = vmatpush1.bf16.msra.mxu0 %v836
        %868 = vmatprep.subr.bf16.mxu0 0
        %869 = vmatpush2.bf16.msra.mxu0 0
        %870 = vmatprep.subr.bf16.mxu0 0
        %871 = vmatpush2.bf16.msra.mxu0 0
        %872 = vmatprep.subr.bf16.mxu0 0
        %873 = vmatpush2.bf16.msra.mxu0 0
        %874 = vmatprep.subr.bf16.mxu0 0
        %875 = vmatpush2.bf16.msra.mxu0 0
        %876 = vmatprep.subr.bf16.mxu0 0
        %877 = vmatpush2.bf16.msra.mxu0 0
        %878 = vmatprep.subr.bf16.mxu0 0
        %879 = vmatpush2.bf16.msra.mxu0 0
        %880 = vmatprep.subr.bf16.mxu0 0
        %881 = vmatpush2.bf16.msra.mxu0 0
        %882 = vmatprep.subr.bf16.mxu0 0
        %883 = vmatpush2.bf16.msra.mxu0 0
        %884 = vmatprep.mubr.bf16.mxu0 0
        %885 = vmatmul.mubr.bf16.gmra.mxu0 %v771
        %v886 = vpop.f32.mrf.mxu0
        %v887 = vadd.f32 %v802, %v886
        %v888 = vpop.f32.mrf.mxu0
        %v889 = vpop.f32.mrf.mxu0
        %v890 = vadd.f32 %v802, %v889
        %v891 = vpop.f32.mrf.mxu0
        %892 = vmatprep.mubr.bf16.mxu0 0
        %893 = vmatmul.mubr.bf16.gmra.mxu0 %v772
        %v894 = vpop.f32.mrf.mxu0
        %v895 = vadd.f32 %v802, %v894
        %v896 = vpop.f32.mrf.mxu0
        %v897 = vpop.f32.mrf.mxu0
        %v898 = vadd.f32 %v802, %v897
        %v899 = vpop.f32.mrf.mxu0
        %900 = vmatprep.mubr.bf16.mxu0 0
        %901 = vmatmul.mubr.bf16.gmra.mxu0 %v773
        %v902 = vpop.f32.mrf.mxu0
        %v903 = vadd.f32 %v802, %v902
        %v904 = vpop.f32.mrf.mxu0
        %v905 = vpop.f32.mrf.mxu0
        %v906 = vadd.f32 %v802, %v905
        %v907 = vpop.f32.mrf.mxu0
        %908 = vmatprep.mubr.bf16.mxu0 0
        %909 = vmatmul.mubr.bf16.gmra.mxu0 %v774
        %v910 = vpop.f32.mrf.mxu0
        %v911 = vadd.f32 %v802, %v910
        %v912 = vpop.f32.mrf.mxu0
        %v913 = vpop.f32.mrf.mxu0
        %v914 = vadd.f32 %v802, %v913
        %v915 = vpop.f32.mrf.mxu0
        %916 = vmatprep.mubr.bf16.mxu0 0
        %917 = vmatmul.mubr.bf16.gmra.mxu0 %v775
        %v918 = vpop.f32.mrf.mxu0
        %v919 = vadd.f32 %v802, %v918
        %v920 = vpop.f32.mrf.mxu0
        %v921 = vpop.f32.mrf.mxu0
        %v922 = vadd.f32 %v802, %v921
        %v923 = vpop.f32.mrf.mxu0
        %924 = vmatprep.mubr.bf16.mxu0 0
        %925 = vmatmul.mubr.bf16.gmra.mxu0 %v776
        %v926 = vpop.f32.mrf.mxu0
        %v927 = vadd.f32 %v802, %v926
        %v928 = vpop.f32.mrf.mxu0
        %v929 = vpop.f32.mrf.mxu0
        %v930 = vadd.f32 %v802, %v929
        %v931 = vpop.f32.mrf.mxu0
        %932 = vmatprep.mubr.bf16.mxu0 0
        %933 = vmatmul.mubr.bf16.gmra.mxu0 %v777
        %v934 = vpop.f32.mrf.mxu0
        %v935 = vadd.f32 %v802, %v934
        %v936 = vpop.f32.mrf.mxu0
        %v937 = vpop.f32.mrf.mxu0
        %v938 = vadd.f32 %v802, %v937
        %v939 = vpop.f32.mrf.mxu0
        %940 = vmatprep.mubr.bf16.mxu0 0
        %941 = vmatmul.mubr.bf16.gmra.mxu0 %v778
        %v942 = vpop.f32.mrf.mxu0
        %v943 = vadd.f32 %v802, %v942
        %v944 = vpop.f32.mrf.mxu0
        %v945 = vpop.f32.mrf.mxu0
        %v946 = vadd.f32 %v802, %v945
        %v947 = vpop.f32.mrf.mxu0
        %948 = vmatprep.mubr.bf16.mxu0 0
        %949 = vmatmul.mubr.bf16.gmra.mxu0 %v779
        %v950 = vpop.f32.mrf.mxu0
        %v951 = vadd.f32 %v802, %v950
        %v952 = vpop.f32.mrf.mxu0
        %v953 = vpop.f32.mrf.mxu0
        %v954 = vadd.f32 %v802, %v953
        %v955 = vpop.f32.mrf.mxu0
        %956 = vmatprep.mubr.bf16.mxu0 0
        %957 = vmatmul.mubr.bf16.gmra.mxu0 %v780
        %v958 = vpop.f32.mrf.mxu0
        %v959 = vadd.f32 %v802, %v958
        %v960 = vpop.f32.mrf.mxu0
        %v961 = vpop.f32.mrf.mxu0
        %v962 = vadd.f32 %v802, %v961
        %v963 = vpop.f32.mrf.mxu0
        %964 = vdwg.mxu0
        %v965 = vmax.f32 %v887, 0.0
        %v966 = vmax.f32 %v890, 0.0
        %v967 = vmax.f32 %v895, 0.0
        %v968 = vmax.f32 %v898, 0.0
        %v969 = vmax.f32 %v903, 0.0
        %v970 = vmax.f32 %v906, 0.0
        %v971 = vmax.f32 %v911, 0.0
        %v972 = vmax.f32 %v914, 0.0
        %v973 = vmax.f32 %v919, 0.0
        %v974 = vmax.f32 %v922, 0.0
        %v975 = vmax.f32 %v927, 0.0
        %v976 = vmax.f32 %v930, 0.0
        %v977 = vmax.f32 %v935, 0.0
        %v978 = vmax.f32 %v938, 0.0
        %v979 = vmax.f32 %v943, 0.0
        %v980 = vmax.f32 %v946, 0.0
        %v981 = vmax.f32 %v951, 0.0
        %v982 = vmax.f32 %v954, 0.0
        %v983 = vmax.f32 %v959, 0.0
        %v984 = vmax.f32 %v962, 0.0
        %v985 = vpack.c.bf16 %v966, %v965
        %v986 = vpack.c.bf16 %v968, %v967
        %v987 = vpack.c.bf16 %v970, %v969
        %v988 = vpack.c.bf16 %v972, %v971
        %v989 = vpack.c.bf16 %v974, %v973
        %v990 = vpack.c.bf16 %v976, %v975
        %v991 = vpack.c.bf16 %v978, %v977
        %v992 = vpack.c.bf16 %v980, %v979
        %v993 = vpack.c.bf16 %v982, %v981
        %v994 = vpack.c.bf16 %v984, %v983
        %v995 = vld [vmem:[%s6] sm:$0xf]
        %v996 = vld [vmem:[%s6 + $0x4] sm:$0xf]
        %v997 = vld [vmem:[%s6 + $0x8] sm:$0xf]
        %v998 = vld [vmem:[%s6 + $0xc] sm:$0xf]
        %v999 = vld [vmem:[%s6 + $0x10] sm:$0xf]
        %v1000 = vld [vmem:[%s6 + $0x14] sm:$0xf]
        %v1001 = vld [vmem:[%s6 + $0x18] sm:$0xf]
        %v1002 = vld [vmem:[%s6 + $0x1c] sm:$0xf]
        %v1003 = vld [vmem:[%s6 + $0x20] sm:$0xf]
        %v1004 = vld [vmem:[%s6 + $0x24] sm:$0xf]
        %v1005 = vld [vmem:[%s6 + $0x28] sm:$0xf]
        %v1006 = vld [vmem:[%s6 + $0x2c] sm:$0xf]
        %v1007 = vld [vmem:[%s6 + $0x30] sm:$0xf]
        %v1008 = vld [vmem:[%s6 + $0x34] sm:$0xf]
        %v1009 = vld [vmem:[%s6 + $0x38] sm:$0xf]
        %v1010 = vld [vmem:[%s6 + $0x3c] sm:$0xf]
        %v1011 = vld [vmem:[%s7] sm:$0xf]
        %v1012 = vld [vmem:[%s7 + $0x4] sm:$0xf]
        %v1015 = vunpack.c.l.b16 %v1011
        %v1016 = vunpack.c.l.b16 %v1012
        %v1017 = vpack.c.b16 %v1016, %v1015
        %1019 = vmatprep.subr.bf16.mxu0 0
        %1020 = vmatpush1.bf16.msra.mxu0 0
        %1021 = vmatprep.subr.bf16.mxu0 0
        %1022 = vmatpush1.bf16.msra.mxu0 0
        %1023 = vmatprep.subr.bf16.mxu0 0
        %1024 = vmatpush1.bf16.msra.mxu0 0
        %1025 = vmatprep.subr.bf16.mxu0 0
        %1026 = vmatpush1.bf16.msra.mxu0 0
        %1027 = vmatprep.subr.bf16.mxu0 0
        %1028 = vmatpush1.bf16.msra.mxu0 0
        %1029 = vmatprep.subr.bf16.mxu0 0
        %1030 = vmatpush1.bf16.msra.mxu0 0
        %1031 = vmatprep.subr.bf16.mxu0 0
        %1032 = vmatpush1.bf16.msra.mxu0 0
        %1033 = vmatprep.subr.bf16.mxu0 0
        %1034 = vmatpush1.bf16.msra.mxu0 %v1017
        %1035 = vmatprep.subr.bf16.mxu0 0
        %1036 = vmatpush2.bf16.msra.mxu0 0
        %1037 = vmatprep.subr.bf16.mxu0 0
        %1038 = vmatpush2.bf16.msra.mxu0 0
        %1039 = vmatprep.subr.bf16.mxu0 0
        %1040 = vmatpush2.bf16.msra.mxu0 0
        %1041 = vmatprep.subr.bf16.mxu0 0
        %1042 = vmatpush2.bf16.msra.mxu0 0
        %1043 = vmatprep.subr.bf16.mxu0 0
        %1044 = vmatpush2.bf16.msra.mxu0 0
        %1045 = vmatprep.subr.bf16.mxu0 0
        %1046 = vmatpush2.bf16.msra.mxu0 0
        %1047 = vmatprep.subr.bf16.mxu0 0
        %1048 = vmatpush2.bf16.msra.mxu0 0
        %1049 = vmatprep.subr.bf16.mxu0 0
        %1050 = vmatpush2.bf16.msra.mxu0 0
        %1051 = vmatprep.mubr.bf16.mxu0 0
        %1052 = vmatmul.mubr.bf16.gmra.mxu0 %v609
        %v1053 = vpop.f32.mrf.mxu0
        %v1054 = vadd.f32 0.0, %v1053
        %v1055 = vpop.f32.mrf.mxu0
        %v1056 = vpop.f32.mrf.mxu0
        %v1057 = vadd.f32 0.0, %v1056
        %v1058 = vpop.f32.mrf.mxu0
        %1059 = vmatprep.mubr.bf16.mxu0 0
        %1060 = vmatmul.mubr.bf16.gmra.mxu0 %v612
        %v1061 = vpop.f32.mrf.mxu0
        %v1062 = vadd.f32 0.0, %v1061
        %v1063 = vpop.f32.mrf.mxu0
        %v1064 = vpop.f32.mrf.mxu0
        %v1065 = vadd.f32 0.0, %v1064
        %v1066 = vpop.f32.mrf.mxu0
        %1067 = vmatprep.mubr.bf16.mxu0 0
        %1068 = vmatmul.mubr.bf16.gmra.mxu0 %v615
        %v1069 = vpop.f32.mrf.mxu0
        %v1070 = vadd.f32 0.0, %v1069
        %v1071 = vpop.f32.mrf.mxu0
        %v1072 = vpop.f32.mrf.mxu0
        %v1073 = vadd.f32 0.0, %v1072
        %v1074 = vpop.f32.mrf.mxu0
        %1075 = vmatprep.mubr.bf16.mxu0 0
        %1076 = vmatmul.mubr.bf16.gmra.mxu0 %v618
        %v1077 = vpop.f32.mrf.mxu0
        %v1078 = vadd.f32 0.0, %v1077
        %v1079 = vpop.f32.mrf.mxu0
        %v1080 = vpop.f32.mrf.mxu0
        %v1081 = vadd.f32 0.0, %v1080
        %v1082 = vpop.f32.mrf.mxu0
        %1083 = vmatprep.mubr.bf16.mxu0 0
        %1084 = vmatmul.mubr.bf16.gmra.mxu0 %v621
        %v1085 = vpop.f32.mrf.mxu0
        %v1086 = vadd.f32 0.0, %v1085
        %v1087 = vpop.f32.mrf.mxu0
        %v1088 = vpop.f32.mrf.mxu0
        %v1089 = vadd.f32 0.0, %v1088
        %v1090 = vpop.f32.mrf.mxu0
        %1091 = vmatprep.mubr.bf16.mxu0 0
        %1092 = vmatmul.mubr.bf16.gmra.mxu0 %v624
        %v1093 = vpop.f32.mrf.mxu0
        %v1094 = vadd.f32 0.0, %v1093
        %v1095 = vpop.f32.mrf.mxu0
        %v1096 = vpop.f32.mrf.mxu0
        %v1097 = vadd.f32 0.0, %v1096
        %v1098 = vpop.f32.mrf.mxu0
        %1099 = vmatprep.mubr.bf16.mxu0 0
        %1100 = vmatmul.mubr.bf16.gmra.mxu0 %v627
        %v1101 = vpop.f32.mrf.mxu0
        %v1102 = vadd.f32 0.0, %v1101
        %v1103 = vpop.f32.mrf.mxu0
        %v1104 = vpop.f32.mrf.mxu0
        %v1105 = vadd.f32 0.0, %v1104
        %v1106 = vpop.f32.mrf.mxu0
        %1107 = vmatprep.mubr.bf16.mxu0 0
        %1108 = vmatmul.mubr.bf16.gmra.mxu0 %v630
        %v1109 = vpop.f32.mrf.mxu0
        %v1110 = vadd.f32 0.0, %v1109
        %v1111 = vpop.f32.mrf.mxu0
        %v1112 = vpop.f32.mrf.mxu0
        %v1113 = vadd.f32 0.0, %v1112
        %v1114 = vpop.f32.mrf.mxu0
        %1115 = vmatprep.mubr.bf16.mxu0 0
        %1116 = vmatmul.mubr.bf16.gmra.mxu0 %v633
        %v1117 = vpop.f32.mrf.mxu0
        %v1118 = vadd.f32 0.0, %v1117
        %v1119 = vpop.f32.mrf.mxu0
        %v1120 = vpop.f32.mrf.mxu0
        %v1121 = vadd.f32 0.0, %v1120
        %v1122 = vpop.f32.mrf.mxu0
        %1123 = vmatprep.mubr.bf16.mxu0 0
        %1124 = vmatmul.mubr.bf16.gmra.mxu0 %v636
        %v1125 = vpop.f32.mrf.mxu0
        %v1126 = vadd.f32 0.0, %v1125
        %v1127 = vpop.f32.mrf.mxu0
        %v1128 = vpop.f32.mrf.mxu0
        %v1129 = vadd.f32 0.0, %v1128
        %v1130 = vpop.f32.mrf.mxu0
        %1131 = vdwg.mxu0
        %v1148 = vunpack.c.l.b16 %v995
        %v1149 = vunpack.c.l.b16 %v996
        %v1150 = vunpack.c.l.b16 %v997
        %v1151 = vunpack.c.l.b16 %v998
        %v1152 = vunpack.c.l.b16 %v999
        %v1153 = vunpack.c.l.b16 %v1000
        %v1154 = vunpack.c.l.b16 %v1001
        %v1155 = vunpack.c.l.b16 %v1002
        %v1156 = vunpack.c.l.b16 %v1003
        %v1157 = vunpack.c.l.b16 %v1004
        %v1158 = vunpack.c.l.b16 %v1005
        %v1159 = vunpack.c.l.b16 %v1006
        %v1160 = vunpack.c.l.b16 %v1007
        %v1161 = vunpack.c.l.b16 %v1008
        %v1162 = vunpack.c.l.b16 %v1009
        %v1163 = vunpack.c.l.b16 %v1010
        %v1164 = vpack.c.b16 %v1149, %v1148
        %v1165 = vpack.c.b16 %v1151, %v1150
        %v1166 = vpack.c.b16 %v1153, %v1152
        %v1167 = vpack.c.b16 %v1155, %v1154
        %v1168 = vpack.c.b16 %v1157, %v1156
        %v1169 = vpack.c.b16 %v1159, %v1158
        %v1170 = vpack.c.b16 %v1161, %v1160
        %v1171 = vpack.c.b16 %v1163, %v1162
        %1180 = vmatprep.subr.bf16.mxu0 0
        %1181 = vmatpush1.bf16.msra.mxu0 %v1171
        %1182 = vmatprep.subr.bf16.mxu0 0
        %1183 = vmatpush1.bf16.msra.mxu0 %v1170
        %1184 = vmatprep.subr.bf16.mxu0 0
        %1185 = vmatpush1.bf16.msra.mxu0 %v1169
        %1186 = vmatprep.subr.bf16.mxu0 0
        %1187 = vmatpush1.bf16.msra.mxu0 %v1168
        %1188 = vmatprep.subr.bf16.mxu0 0
        %1189 = vmatpush1.bf16.msra.mxu0 %v1167
        %1190 = vmatprep.subr.bf16.mxu0 0
        %1191 = vmatpush1.bf16.msra.mxu0 %v1166
        %1192 = vmatprep.subr.bf16.mxu0 0
        %1193 = vmatpush1.bf16.msra.mxu0 %v1165
        %1194 = vmatprep.subr.bf16.mxu0 0
        %1195 = vmatpush1.bf16.msra.mxu0 %v1164
        %1196 = vmatprep.subr.bf16.mxu0 0
        %1197 = vmatpush2.bf16.msra.mxu0 0
        %1198 = vmatprep.subr.bf16.mxu0 0
        %1199 = vmatpush2.bf16.msra.mxu0 0
        %1200 = vmatprep.subr.bf16.mxu0 0
        %1201 = vmatpush2.bf16.msra.mxu0 0
        %1202 = vmatprep.subr.bf16.mxu0 0
        %1203 = vmatpush2.bf16.msra.mxu0 0
        %1204 = vmatprep.subr.bf16.mxu0 0
        %1205 = vmatpush2.bf16.msra.mxu0 0
        %1206 = vmatprep.subr.bf16.mxu0 0
        %1207 = vmatpush2.bf16.msra.mxu0 0
        %1208 = vmatprep.subr.bf16.mxu0 0
        %1209 = vmatpush2.bf16.msra.mxu0 0
        %1210 = vmatprep.subr.bf16.mxu0 0
        %1211 = vmatpush2.bf16.msra.mxu0 0
        %1212 = vmatprep.mubr.bf16.mxu0 0
        %1213 = vmatmul.mubr.bf16.gmra.mxu0 %v985
        %v1214 = vpop.f32.mrf.mxu0
        %v1215 = vadd.f32 %v1054, %v1214
        %v1216 = vpop.f32.mrf.mxu0
        %v1217 = vpop.f32.mrf.mxu0
        %v1218 = vadd.f32 %v1057, %v1217
        %v1219 = vpop.f32.mrf.mxu0
        %1220 = vmatprep.mubr.bf16.mxu0 0
        %1221 = vmatmul.mubr.bf16.gmra.mxu0 %v986
        %v1222 = vpop.f32.mrf.mxu0
        %v1223 = vadd.f32 %v1062, %v1222
        %v1224 = vpop.f32.mrf.mxu0
        %v1225 = vpop.f32.mrf.mxu0
        %v1226 = vadd.f32 %v1065, %v1225
        %v1227 = vpop.f32.mrf.mxu0
        %1228 = vmatprep.mubr.bf16.mxu0 0
        %1229 = vmatmul.mubr.bf16.gmra.mxu0 %v987
        %v1230 = vpop.f32.mrf.mxu0
        %v1231 = vadd.f32 %v1070, %v1230
        %v1232 = vpop.f32.mrf.mxu0
        %v1233 = vpop.f32.mrf.mxu0
        %v1234 = vadd.f32 %v1073, %v1233
        %v1235 = vpop.f32.mrf.mxu0
        %1236 = vmatprep.mubr.bf16.mxu0 0
        %1237 = vmatmul.mubr.bf16.gmra.mxu0 %v988
        %v1238 = vpop.f32.mrf.mxu0
        %v1239 = vadd.f32 %v1078, %v1238
        %v1240 = vpop.f32.mrf.mxu0
        %v1241 = vpop.f32.mrf.mxu0
        %v1242 = vadd.f32 %v1081, %v1241
        %v1243 = vpop.f32.mrf.mxu0
        %1244 = vmatprep.mubr.bf16.mxu0 0
        %1245 = vmatmul.mubr.bf16.gmra.mxu0 %v989
        %v1246 = vpop.f32.mrf.mxu0
        %v1247 = vadd.f32 %v1086, %v1246
        %v1248 = vpop.f32.mrf.mxu0
        %v1249 = vpop.f32.mrf.mxu0
        %v1250 = vadd.f32 %v1089, %v1249
        %v1251 = vpop.f32.mrf.mxu0
        %1252 = vmatprep.mubr.bf16.mxu0 0
        %1253 = vmatmul.mubr.bf16.gmra.mxu0 %v990
        %v1254 = vpop.f32.mrf.mxu0
        %v1255 = vadd.f32 %v1094, %v1254
        %v1256 = vpop.f32.mrf.mxu0
        %v1257 = vpop.f32.mrf.mxu0
        %v1258 = vadd.f32 %v1097, %v1257
        %v1259 = vpop.f32.mrf.mxu0
        %1260 = vmatprep.mubr.bf16.mxu0 0
        %1261 = vmatmul.mubr.bf16.gmra.mxu0 %v991
        %v1262 = vpop.f32.mrf.mxu0
        %v1263 = vadd.f32 %v1102, %v1262
        %v1264 = vpop.f32.mrf.mxu0
        %v1265 = vpop.f32.mrf.mxu0
        %v1266 = vadd.f32 %v1105, %v1265
        %v1267 = vpop.f32.mrf.mxu0
        %1268 = vmatprep.mubr.bf16.mxu0 0
        %1269 = vmatmul.mubr.bf16.gmra.mxu0 %v992
        %v1270 = vpop.f32.mrf.mxu0
        %v1271 = vadd.f32 %v1110, %v1270
        %v1272 = vpop.f32.mrf.mxu0
        %v1273 = vpop.f32.mrf.mxu0
        %v1274 = vadd.f32 %v1113, %v1273
        %v1275 = vpop.f32.mrf.mxu0
        %1276 = vmatprep.mubr.bf16.mxu0 0
        %1277 = vmatmul.mubr.bf16.gmra.mxu0 %v993
        %v1278 = vpop.f32.mrf.mxu0
        %v1279 = vadd.f32 %v1118, %v1278
        %v1280 = vpop.f32.mrf.mxu0
        %v1281 = vpop.f32.mrf.mxu0
        %v1282 = vadd.f32 %v1121, %v1281
        %v1283 = vpop.f32.mrf.mxu0
        %1284 = vmatprep.mubr.bf16.mxu0 0
        %1285 = vmatmul.mubr.bf16.gmra.mxu0 %v994
        %v1286 = vpop.f32.mrf.mxu0
        %v1287 = vadd.f32 %v1126, %v1286
        %v1288 = vpop.f32.mrf.mxu0
        %v1289 = vpop.f32.mrf.mxu0
        %v1290 = vadd.f32 %v1129, %v1289
        %v1291 = vpop.f32.mrf.mxu0
        %1292 = vdwg.mxu0
        %v1293 = vld [vmem:[%s8] sm:$0xf]
        %v1294 = vld [vmem:[%s9] sm:$0x1]
        %v1296 = vlaneseq
        %v1297 = vshrl.u32 %v1296, 7
        %v1298 = vsub.s32 0, %v1297
        %v1299 = vrot.slane %v1294, %v1298
        %vm1301 = vcmask 64512
        %v1303 = vsel %vm1301, %v582, 0
        %v1306 = vsel %vm1301, %v583, 0
        %v1309 = vsel %vm1301, %v584, 0
        %v1312 = vsel %vm1301, %v585, 0
        %v1315 = vsel %vm1301, %v586, 0
        %v1318 = vsel %vm1301, %v587, 0
        %v1321 = vsel %vm1301, %v588, 0
        %v1324 = vsel %vm1301, %v589, 0
        %v1327 = vsel %vm1301, %v590, 0
        %v1330 = vsel %vm1301, %v591, 0
        %vm1332 = vcmask 1043456
        %v1334 = vsel %vm1332, %v1293, 0
        %1336 = vmatprep.subr.bf16.mxu0 0
        %1337 = vmatpush1.bf16.msra.mxu0 0
        %1338 = vmatprep.subr.bf16.mxu0 0
        %1339 = vmatpush1.bf16.msra.mxu0 0
        %1340 = vmatprep.subr.bf16.mxu0 0
        %1341 = vmatpush1.bf16.msra.mxu0 0
        %1342 = vmatprep.subr.bf16.mxu0 0
        %1343 = vmatpush1.bf16.msra.mxu0 0
        %1344 = vmatprep.subr.bf16.mxu0 0
        %1345 = vmatpush1.bf16.msra.mxu0 0
        %1346 = vmatprep.subr.bf16.mxu0 0
        %1347 = vmatpush1.bf16.msra.mxu0 0
        %1348 = vmatprep.subr.bf16.mxu0 0
        %1349 = vmatpush1.bf16.msra.mxu0 0
        %1350 = vmatprep.subr.bf16.mxu0 0
        %1351 = vmatpush1.bf16.msra.mxu0 %v1334
        %1352 = vmatprep.subr.bf16.mxu0 0
        %1353 = vmatpush2.bf16.msra.mxu0 0
        %1354 = vmatprep.subr.bf16.mxu0 0
        %1355 = vmatpush2.bf16.msra.mxu0 0
        %1356 = vmatprep.subr.bf16.mxu0 0
        %1357 = vmatpush2.bf16.msra.mxu0 0
        %1358 = vmatprep.subr.bf16.mxu0 0
        %1359 = vmatpush2.bf16.msra.mxu0 0
        %1360 = vmatprep.subr.bf16.mxu0 0
        %1361 = vmatpush2.bf16.msra.mxu0 0
        %1362 = vmatprep.subr.bf16.mxu0 0
        %1363 = vmatpush2.bf16.msra.mxu0 0
        %1364 = vmatprep.subr.bf16.mxu0 0
        %1365 = vmatpush2.bf16.msra.mxu0 0
        %1366 = vmatprep.subr.bf16.mxu0 0
        %1367 = vmatpush2.bf16.msra.mxu0 0
        %1368 = vmatprep.mubr.bf16.mxu0 0
        %1369 = vmatmul.mubr.bf16.gmra.mxu0 %v1303
        %v1370 = vpop.f32.mrf.mxu0
        %v1371 = vadd.f32 %v1299, %v1370
        %v1372 = vpop.f32.mrf.mxu0
        %v1373 = vpop.f32.mrf.mxu0
        %v1374 = vadd.f32 %v1299, %v1373
        %v1375 = vpop.f32.mrf.mxu0
        %1376 = vmatprep.mubr.bf16.mxu0 0
        %1377 = vmatmul.mubr.bf16.gmra.mxu0 %v1306
        %v1378 = vpop.f32.mrf.mxu0
        %v1379 = vadd.f32 %v1299, %v1378
        %v1380 = vpop.f32.mrf.mxu0
        %v1381 = vpop.f32.mrf.mxu0
        %v1382 = vadd.f32 %v1299, %v1381
        %v1383 = vpop.f32.mrf.mxu0
        %1384 = vmatprep.mubr.bf16.mxu0 0
        %1385 = vmatmul.mubr.bf16.gmra.mxu0 %v1309
        %v1386 = vpop.f32.mrf.mxu0
        %v1387 = vadd.f32 %v1299, %v1386
        %v1388 = vpop.f32.mrf.mxu0
        %v1389 = vpop.f32.mrf.mxu0
        %v1390 = vadd.f32 %v1299, %v1389
        %v1391 = vpop.f32.mrf.mxu0
        %1392 = vmatprep.mubr.bf16.mxu0 0
        %1393 = vmatmul.mubr.bf16.gmra.mxu0 %v1312
        %v1394 = vpop.f32.mrf.mxu0
        %v1395 = vadd.f32 %v1299, %v1394
        %v1396 = vpop.f32.mrf.mxu0
        %v1397 = vpop.f32.mrf.mxu0
        %v1398 = vadd.f32 %v1299, %v1397
        %v1399 = vpop.f32.mrf.mxu0
        %1400 = vmatprep.mubr.bf16.mxu0 0
        %1401 = vmatmul.mubr.bf16.gmra.mxu0 %v1315
        %v1402 = vpop.f32.mrf.mxu0
        %v1403 = vadd.f32 %v1299, %v1402
        %v1404 = vpop.f32.mrf.mxu0
        %v1405 = vpop.f32.mrf.mxu0
        %v1406 = vadd.f32 %v1299, %v1405
        %v1407 = vpop.f32.mrf.mxu0
        %1408 = vmatprep.mubr.bf16.mxu0 0
        %1409 = vmatmul.mubr.bf16.gmra.mxu0 %v1318
        %v1410 = vpop.f32.mrf.mxu0
        %v1411 = vadd.f32 %v1299, %v1410
        %v1412 = vpop.f32.mrf.mxu0
        %v1413 = vpop.f32.mrf.mxu0
        %v1414 = vadd.f32 %v1299, %v1413
        %v1415 = vpop.f32.mrf.mxu0
        %1416 = vmatprep.mubr.bf16.mxu0 0
        %1417 = vmatmul.mubr.bf16.gmra.mxu0 %v1321
        %v1418 = vpop.f32.mrf.mxu0
        %v1419 = vadd.f32 %v1299, %v1418
        %v1420 = vpop.f32.mrf.mxu0
        %v1421 = vpop.f32.mrf.mxu0
        %v1422 = vadd.f32 %v1299, %v1421
        %v1423 = vpop.f32.mrf.mxu0
        %1424 = vmatprep.mubr.bf16.mxu0 0
        %1425 = vmatmul.mubr.bf16.gmra.mxu0 %v1324
        %v1426 = vpop.f32.mrf.mxu0
        %v1427 = vadd.f32 %v1299, %v1426
        %v1428 = vpop.f32.mrf.mxu0
        %v1429 = vpop.f32.mrf.mxu0
        %v1430 = vadd.f32 %v1299, %v1429
        %v1431 = vpop.f32.mrf.mxu0
        %1432 = vmatprep.mubr.bf16.mxu0 0
        %1433 = vmatmul.mubr.bf16.gmra.mxu0 %v1327
        %v1434 = vpop.f32.mrf.mxu0
        %v1435 = vadd.f32 %v1299, %v1434
        %v1436 = vpop.f32.mrf.mxu0
        %v1437 = vpop.f32.mrf.mxu0
        %v1438 = vadd.f32 %v1299, %v1437
        %v1439 = vpop.f32.mrf.mxu0
        %1440 = vmatprep.mubr.bf16.mxu0 0
        %1441 = vmatmul.mubr.bf16.gmra.mxu0 %v1330
        %v1442 = vpop.f32.mrf.mxu0
        %v1443 = vadd.f32 %v1299, %v1442
        %v1444 = vpop.f32.mrf.mxu0
        %v1445 = vpop.f32.mrf.mxu0
        %v1446 = vadd.f32 %v1299, %v1445
        %v1447 = vpop.f32.mrf.mxu0
        %1448 = vdwg.mxu0
        %v1449 = vmax.f32 %v1371, 0.0
        %v1450 = vmax.f32 %v1374, 0.0
        %v1451 = vmax.f32 %v1379, 0.0
        %v1452 = vmax.f32 %v1382, 0.0
        %v1453 = vmax.f32 %v1387, 0.0
        %v1454 = vmax.f32 %v1390, 0.0
        %v1455 = vmax.f32 %v1395, 0.0
        %v1456 = vmax.f32 %v1398, 0.0
        %v1457 = vmax.f32 %v1403, 0.0
        %v1458 = vmax.f32 %v1406, 0.0
        %v1459 = vmax.f32 %v1411, 0.0
        %v1460 = vmax.f32 %v1414, 0.0
        %v1461 = vmax.f32 %v1419, 0.0
        %v1462 = vmax.f32 %v1422, 0.0
        %v1463 = vmax.f32 %v1427, 0.0
        %v1464 = vmax.f32 %v1430, 0.0
        %v1465 = vmax.f32 %v1435, 0.0
        %v1466 = vmax.f32 %v1438, 0.0
        %v1467 = vmax.f32 %v1443, 0.0
        %v1468 = vmax.f32 %v1446, 0.0
        %v1469 = vpack.c.bf16 %v1450, %v1449
        %v1470 = vpack.c.bf16 %v1452, %v1451
        %v1471 = vpack.c.bf16 %v1454, %v1453
        %v1472 = vpack.c.bf16 %v1456, %v1455
        %v1473 = vpack.c.bf16 %v1458, %v1457
        %v1474 = vpack.c.bf16 %v1460, %v1459
        %v1475 = vpack.c.bf16 %v1462, %v1461
        %v1476 = vpack.c.bf16 %v1464, %v1463
        %v1477 = vpack.c.bf16 %v1466, %v1465
        %v1478 = vpack.c.bf16 %v1468, %v1467
        %v1479 = vld [vmem:[%s10] sm:$0xf]
        %v1480 = vld [vmem:[%s10 + $0x4] sm:$0xf]
        %v1481 = vld [vmem:[%s10 + $0x8] sm:$0xf]
        %v1482 = vld [vmem:[%s10 + $0xc] sm:$0xf]
        %v1483 = vld [vmem:[%s10 + $0x10] sm:$0xf]
        %v1484 = vld [vmem:[%s10 + $0x14] sm:$0xf]
        %v1485 = vld [vmem:[%s10 + $0x18] sm:$0xf]
        %v1486 = vld [vmem:[%s10 + $0x1c] sm:$0xf]
        %v1487 = vld [vmem:[%s10 + $0x20] sm:$0xf]
        %v1488 = vld [vmem:[%s10 + $0x24] sm:$0xf]
        %v1489 = vld [vmem:[%s10 + $0x28] sm:$0xf]
        %v1490 = vld [vmem:[%s10 + $0x2c] sm:$0xf]
        %v1491 = vld [vmem:[%s10 + $0x30] sm:$0xf]
        %v1492 = vld [vmem:[%s10 + $0x34] sm:$0xf]
        %v1493 = vld [vmem:[%s10 + $0x38] sm:$0xf]
        %v1494 = vld [vmem:[%s10 + $0x3c] sm:$0xf]
        %v1495 = vld [vmem:[%s11] sm:$0x1]
        %v1497 = vlaneseq
        %v1498 = vshrl.u32 %v1497, 7
        %v1499 = vsub.s32 0, %v1498
        %v1500 = vrot.slane %v1495, %v1499
        %v1518 = vunpack.c.l.b16 %v1479
        %v1519 = vunpack.c.l.b16 %v1480
        %v1520 = vunpack.c.l.b16 %v1481
        %v1521 = vunpack.c.l.b16 %v1482
        %v1522 = vunpack.c.l.b16 %v1483
        %v1523 = vunpack.c.l.b16 %v1484
        %v1524 = vunpack.c.l.b16 %v1485
        %v1525 = vunpack.c.l.b16 %v1486
        %v1526 = vunpack.c.l.b16 %v1487
        %v1527 = vunpack.c.l.b16 %v1488
        %v1528 = vunpack.c.l.b16 %v1489
        %v1529 = vunpack.c.l.b16 %v1490
        %v1530 = vunpack.c.l.b16 %v1491
        %v1531 = vunpack.c.l.b16 %v1492
        %v1532 = vunpack.c.l.b16 %v1493
        %v1533 = vunpack.c.l.b16 %v1494
        %v1534 = vpack.c.b16 %v1519, %v1518
        %v1535 = vpack.c.b16 %v1521, %v1520
        %v1536 = vpack.c.b16 %v1523, %v1522
        %v1537 = vpack.c.b16 %v1525, %v1524
        %v1538 = vpack.c.b16 %v1527, %v1526
        %v1539 = vpack.c.b16 %v1529, %v1528
        %v1540 = vpack.c.b16 %v1531, %v1530
        %v1541 = vpack.c.b16 %v1533, %v1532
        %1550 = vmatprep.subr.bf16.mxu0 0
        %1551 = vmatpush1.bf16.msra.mxu0 %v1541
        %1552 = vmatprep.subr.bf16.mxu0 0
        %1553 = vmatpush1.bf16.msra.mxu0 %v1540
        %1554 = vmatprep.subr.bf16.mxu0 0
        %1555 = vmatpush1.bf16.msra.mxu0 %v1539
        %1556 = vmatprep.subr.bf16.mxu0 0
        %1557 = vmatpush1.bf16.msra.mxu0 %v1538
        %1558 = vmatprep.subr.bf16.mxu0 0
        %1559 = vmatpush1.bf16.msra.mxu0 %v1537
        %1560 = vmatprep.subr.bf16.mxu0 0
        %1561 = vmatpush1.bf16.msra.mxu0 %v1536
        %1562 = vmatprep.subr.bf16.mxu0 0
        %1563 = vmatpush1.bf16.msra.mxu0 %v1535
        %1564 = vmatprep.subr.bf16.mxu0 0
        %1565 = vmatpush1.bf16.msra.mxu0 %v1534
        %1566 = vmatprep.subr.bf16.mxu0 0
        %1567 = vmatpush2.bf16.msra.mxu0 0
        %1568 = vmatprep.subr.bf16.mxu0 0
        %1569 = vmatpush2.bf16.msra.mxu0 0
        %1570 = vmatprep.subr.bf16.mxu0 0
        %1571 = vmatpush2.bf16.msra.mxu0 0
        %1572 = vmatprep.subr.bf16.mxu0 0
        %1573 = vmatpush2.bf16.msra.mxu0 0
        %1574 = vmatprep.subr.bf16.mxu0 0
        %1575 = vmatpush2.bf16.msra.mxu0 0
        %1576 = vmatprep.subr.bf16.mxu0 0
        %1577 = vmatpush2.bf16.msra.mxu0 0
        %1578 = vmatprep.subr.bf16.mxu0 0
        %1579 = vmatpush2.bf16.msra.mxu0 0
        %1580 = vmatprep.subr.bf16.mxu0 0
        %1581 = vmatpush2.bf16.msra.mxu0 0
        %1582 = vmatprep.mubr.bf16.mxu0 0
        %1583 = vmatmul.mubr.bf16.gmra.mxu0 %v1469
        %v1584 = vpop.f32.mrf.mxu0
        %v1585 = vadd.f32 %v1500, %v1584
        %v1586 = vpop.f32.mrf.mxu0
        %v1587 = vpop.f32.mrf.mxu0
        %v1588 = vadd.f32 %v1500, %v1587
        %v1589 = vpop.f32.mrf.mxu0
        %1590 = vmatprep.mubr.bf16.mxu0 0
        %1591 = vmatmul.mubr.bf16.gmra.mxu0 %v1470
        %v1592 = vpop.f32.mrf.mxu0
        %v1593 = vadd.f32 %v1500, %v1592
        %v1594 = vpop.f32.mrf.mxu0
        %v1595 = vpop.f32.mrf.mxu0
        %v1596 = vadd.f32 %v1500, %v1595
        %v1597 = vpop.f32.mrf.mxu0
        %1598 = vmatprep.mubr.bf16.mxu0 0
        %1599 = vmatmul.mubr.bf16.gmra.mxu0 %v1471
        %v1600 = vpop.f32.mrf.mxu0
        %v1601 = vadd.f32 %v1500, %v1600
        %v1602 = vpop.f32.mrf.mxu0
        %v1603 = vpop.f32.mrf.mxu0
        %v1604 = vadd.f32 %v1500, %v1603
        %v1605 = vpop.f32.mrf.mxu0
        %1606 = vmatprep.mubr.bf16.mxu0 0
        %1607 = vmatmul.mubr.bf16.gmra.mxu0 %v1472
        %v1608 = vpop.f32.mrf.mxu0
        %v1609 = vadd.f32 %v1500, %v1608
        %v1610 = vpop.f32.mrf.mxu0
        %v1611 = vpop.f32.mrf.mxu0
        %v1612 = vadd.f32 %v1500, %v1611
        %v1613 = vpop.f32.mrf.mxu0
        %1614 = vmatprep.mubr.bf16.mxu0 0
        %1615 = vmatmul.mubr.bf16.gmra.mxu0 %v1473
        %v1616 = vpop.f32.mrf.mxu0
        %v1617 = vadd.f32 %v1500, %v1616
        %v1618 = vpop.f32.mrf.mxu0
        %v1619 = vpop.f32.mrf.mxu0
        %v1620 = vadd.f32 %v1500, %v1619
        %v1621 = vpop.f32.mrf.mxu0
        %1622 = vmatprep.mubr.bf16.mxu0 0
        %1623 = vmatmul.mubr.bf16.gmra.mxu0 %v1474
        %v1624 = vpop.f32.mrf.mxu0
        %v1625 = vadd.f32 %v1500, %v1624
        %v1626 = vpop.f32.mrf.mxu0
        %v1627 = vpop.f32.mrf.mxu0
        %v1628 = vadd.f32 %v1500, %v1627
        %v1629 = vpop.f32.mrf.mxu0
        %1630 = vmatprep.mubr.bf16.mxu0 0
        %1631 = vmatmul.mubr.bf16.gmra.mxu0 %v1475
        %v1632 = vpop.f32.mrf.mxu0
        %v1633 = vadd.f32 %v1500, %v1632
        %v1634 = vpop.f32.mrf.mxu0
        %v1635 = vpop.f32.mrf.mxu0
        %v1636 = vadd.f32 %v1500, %v1635
        %v1637 = vpop.f32.mrf.mxu0
        %1638 = vmatprep.mubr.bf16.mxu0 0
        %1639 = vmatmul.mubr.bf16.gmra.mxu0 %v1476
        %v1640 = vpop.f32.mrf.mxu0
        %v1641 = vadd.f32 %v1500, %v1640
        %v1642 = vpop.f32.mrf.mxu0
        %v1643 = vpop.f32.mrf.mxu0
        %v1644 = vadd.f32 %v1500, %v1643
        %v1645 = vpop.f32.mrf.mxu0
        %1646 = vmatprep.mubr.bf16.mxu0 0
        %1647 = vmatmul.mubr.bf16.gmra.mxu0 %v1477
        %v1648 = vpop.f32.mrf.mxu0
        %v1649 = vadd.f32 %v1500, %v1648
        %v1650 = vpop.f32.mrf.mxu0
        %v1651 = vpop.f32.mrf.mxu0
        %v1652 = vadd.f32 %v1500, %v1651
        %v1653 = vpop.f32.mrf.mxu0
        %1654 = vmatprep.mubr.bf16.mxu0 0
        %1655 = vmatmul.mubr.bf16.gmra.mxu0 %v1478
        %v1656 = vpop.f32.mrf.mxu0
        %v1657 = vadd.f32 %v1500, %v1656
        %v1658 = vpop.f32.mrf.mxu0
        %v1659 = vpop.f32.mrf.mxu0
        %v1660 = vadd.f32 %v1500, %v1659
        %v1661 = vpop.f32.mrf.mxu0
        %1662 = vdwg.mxu0
        %v1663 = vmax.f32 %v1585, 0.0
        %v1664 = vmax.f32 %v1588, 0.0
        %v1665 = vmax.f32 %v1593, 0.0
        %v1666 = vmax.f32 %v1596, 0.0
        %v1667 = vmax.f32 %v1601, 0.0
        %v1668 = vmax.f32 %v1604, 0.0
        %v1669 = vmax.f32 %v1609, 0.0
        %v1670 = vmax.f32 %v1612, 0.0
        %v1671 = vmax.f32 %v1617, 0.0
        %v1672 = vmax.f32 %v1620, 0.0
        %v1673 = vmax.f32 %v1625, 0.0
        %v1674 = vmax.f32 %v1628, 0.0
        %v1675 = vmax.f32 %v1633, 0.0
        %v1676 = vmax.f32 %v1636, 0.0
        %v1677 = vmax.f32 %v1641, 0.0
        %v1678 = vmax.f32 %v1644, 0.0
        %v1679 = vmax.f32 %v1649, 0.0
        %v1680 = vmax.f32 %v1652, 0.0
        %v1681 = vmax.f32 %v1657, 0.0
        %v1682 = vmax.f32 %v1660, 0.0
        %v1683 = vpack.c.bf16 %v1664, %v1663
        %v1684 = vpack.c.bf16 %v1666, %v1665
        %v1685 = vpack.c.bf16 %v1668, %v1667
        %v1686 = vpack.c.bf16 %v1670, %v1669
        %v1687 = vpack.c.bf16 %v1672, %v1671
        %v1688 = vpack.c.bf16 %v1674, %v1673
        %v1689 = vpack.c.bf16 %v1676, %v1675
        %v1690 = vpack.c.bf16 %v1678, %v1677
        %v1691 = vpack.c.bf16 %v1680, %v1679
        %v1692 = vpack.c.bf16 %v1682, %v1681
        %v1693 = vld [vmem:[%s12] sm:$0xf]
        %v1694 = vld [vmem:[%s12 + $0x4] sm:$0xf]
        %v1695 = vld [vmem:[%s12 + $0x8] sm:$0xf]
        %v1696 = vld [vmem:[%s12 + $0xc] sm:$0xf]
        %v1697 = vld [vmem:[%s12 + $0x10] sm:$0xf]
        %v1698 = vld [vmem:[%s12 + $0x14] sm:$0xf]
        %v1699 = vld [vmem:[%s12 + $0x18] sm:$0xf]
        %v1700 = vld [vmem:[%s12 + $0x1c] sm:$0xf]
        %v1701 = vld [vmem:[%s12 + $0x20] sm:$0xf]
        %v1702 = vld [vmem:[%s12 + $0x24] sm:$0xf]
        %v1703 = vld [vmem:[%s12 + $0x28] sm:$0xf]
        %v1704 = vld [vmem:[%s12 + $0x2c] sm:$0xf]
        %v1705 = vld [vmem:[%s12 + $0x30] sm:$0xf]
        %v1706 = vld [vmem:[%s12 + $0x34] sm:$0xf]
        %v1707 = vld [vmem:[%s12 + $0x38] sm:$0xf]
        %v1708 = vld [vmem:[%s12 + $0x3c] sm:$0xf]
        %v1725 = vunpack.c.l.b16 %v1693
        %v1726 = vunpack.c.l.b16 %v1694
        %v1727 = vunpack.c.l.b16 %v1695
        %v1728 = vunpack.c.l.b16 %v1696
        %v1729 = vunpack.c.l.b16 %v1697
        %v1730 = vunpack.c.l.b16 %v1698
        %v1731 = vunpack.c.l.b16 %v1699
        %v1732 = vunpack.c.l.b16 %v1700
        %v1733 = vunpack.c.l.b16 %v1701
        %v1734 = vunpack.c.l.b16 %v1702
        %v1735 = vunpack.c.l.b16 %v1703
        %v1736 = vunpack.c.l.b16 %v1704
        %v1737 = vunpack.c.l.b16 %v1705
        %v1738 = vunpack.c.l.b16 %v1706
        %v1739 = vunpack.c.l.b16 %v1707
        %v1740 = vunpack.c.l.b16 %v1708
        %v1741 = vpack.c.b16 %v1726, %v1725
        %v1742 = vpack.c.b16 %v1728, %v1727
        %v1743 = vpack.c.b16 %v1730, %v1729
        %v1744 = vpack.c.b16 %v1732, %v1731
        %v1745 = vpack.c.b16 %v1734, %v1733
        %v1746 = vpack.c.b16 %v1736, %v1735
        %v1747 = vpack.c.b16 %v1738, %v1737
        %v1748 = vpack.c.b16 %v1740, %v1739
        %1757 = vmatprep.subr.bf16.mxu0 0
        %1758 = vmatpush1.bf16.msra.mxu0 %v1748
        %1759 = vmatprep.subr.bf16.mxu0 0
        %1760 = vmatpush1.bf16.msra.mxu0 %v1747
        %1761 = vmatprep.subr.bf16.mxu0 0
        %1762 = vmatpush1.bf16.msra.mxu0 %v1746
        %1763 = vmatprep.subr.bf16.mxu0 0
        %1764 = vmatpush1.bf16.msra.mxu0 %v1745
        %1765 = vmatprep.subr.bf16.mxu0 0
        %1766 = vmatpush1.bf16.msra.mxu0 %v1744
        %1767 = vmatprep.subr.bf16.mxu0 0
        %1768 = vmatpush1.bf16.msra.mxu0 %v1743
        %1769 = vmatprep.subr.bf16.mxu0 0
        %1770 = vmatpush1.bf16.msra.mxu0 %v1742
        %1771 = vmatprep.subr.bf16.mxu0 0
        %1772 = vmatpush1.bf16.msra.mxu0 %v1741
        %1773 = vmatprep.subr.bf16.mxu0 0
        %1774 = vmatpush2.bf16.msra.mxu0 0
        %1775 = vmatprep.subr.bf16.mxu0 0
        %1776 = vmatpush2.bf16.msra.mxu0 0
        %1777 = vmatprep.subr.bf16.mxu0 0
        %1778 = vmatpush2.bf16.msra.mxu0 0
        %1779 = vmatprep.subr.bf16.mxu0 0
        %1780 = vmatpush2.bf16.msra.mxu0 0
        %1781 = vmatprep.subr.bf16.mxu0 0
        %1782 = vmatpush2.bf16.msra.mxu0 0
        %1783 = vmatprep.subr.bf16.mxu0 0
        %1784 = vmatpush2.bf16.msra.mxu0 0
        %1785 = vmatprep.subr.bf16.mxu0 0
        %1786 = vmatpush2.bf16.msra.mxu0 0
        %1787 = vmatprep.subr.bf16.mxu0 0
        %1788 = vmatpush2.bf16.msra.mxu0 0
        %1789 = vmatprep.mubr.bf16.mxu0 0
        %1790 = vmatmul.mubr.bf16.gmra.mxu0 %v1683
        %v1791 = vpop.f32.mrf.mxu0
        %v1792 = vadd.f32 0.0, %v1791
        %v1793 = vpop.f32.mrf.mxu0
        %v1794 = vpop.f32.mrf.mxu0
        %v1795 = vadd.f32 0.0, %v1794
        %v1796 = vpop.f32.mrf.mxu0
        %1797 = vmatprep.mubr.bf16.mxu0 0
        %1798 = vmatmul.mubr.bf16.gmra.mxu0 %v1684
        %v1799 = vpop.f32.mrf.mxu0
        %v1800 = vadd.f32 0.0, %v1799
        %v1801 = vpop.f32.mrf.mxu0
        %v1802 = vpop.f32.mrf.mxu0
        %v1803 = vadd.f32 0.0, %v1802
        %v1804 = vpop.f32.mrf.mxu0
        %1805 = vmatprep.mubr.bf16.mxu0 0
        %1806 = vmatmul.mubr.bf16.gmra.mxu0 %v1685
        %v1807 = vpop.f32.mrf.mxu0
        %v1808 = vadd.f32 0.0, %v1807
        %v1809 = vpop.f32.mrf.mxu0
        %v1810 = vpop.f32.mrf.mxu0
        %v1811 = vadd.f32 0.0, %v1810
        %v1812 = vpop.f32.mrf.mxu0
        %1813 = vmatprep.mubr.bf16.mxu0 0
        %1814 = vmatmul.mubr.bf16.gmra.mxu0 %v1686
        %v1815 = vpop.f32.mrf.mxu0
        %v1816 = vadd.f32 0.0, %v1815
        %v1817 = vpop.f32.mrf.mxu0
        %v1818 = vpop.f32.mrf.mxu0
        %v1819 = vadd.f32 0.0, %v1818
        %v1820 = vpop.f32.mrf.mxu0
        %1821 = vmatprep.mubr.bf16.mxu0 0
        %1822 = vmatmul.mubr.bf16.gmra.mxu0 %v1687
        %v1823 = vpop.f32.mrf.mxu0
        %v1824 = vadd.f32 0.0, %v1823
        %v1825 = vpop.f32.mrf.mxu0
        %v1826 = vpop.f32.mrf.mxu0
        %v1827 = vadd.f32 0.0, %v1826
        %v1828 = vpop.f32.mrf.mxu0
        %1829 = vmatprep.mubr.bf16.mxu0 0
        %1830 = vmatmul.mubr.bf16.gmra.mxu0 %v1688
        %v1831 = vpop.f32.mrf.mxu0
        %v1832 = vadd.f32 0.0, %v1831
        %v1833 = vpop.f32.mrf.mxu0
        %v1834 = vpop.f32.mrf.mxu0
        %v1835 = vadd.f32 0.0, %v1834
        %v1836 = vpop.f32.mrf.mxu0
        %1837 = vmatprep.mubr.bf16.mxu0 0
        %1838 = vmatmul.mubr.bf16.gmra.mxu0 %v1689
        %v1839 = vpop.f32.mrf.mxu0
        %v1840 = vadd.f32 0.0, %v1839
        %v1841 = vpop.f32.mrf.mxu0
        %v1842 = vpop.f32.mrf.mxu0
        %v1843 = vadd.f32 0.0, %v1842
        %v1844 = vpop.f32.mrf.mxu0
        %1845 = vmatprep.mubr.bf16.mxu0 0
        %1846 = vmatmul.mubr.bf16.gmra.mxu0 %v1690
        %v1847 = vpop.f32.mrf.mxu0
        %v1848 = vadd.f32 0.0, %v1847
        %v1849 = vpop.f32.mrf.mxu0
        %v1850 = vpop.f32.mrf.mxu0
        %v1851 = vadd.f32 0.0, %v1850
        %v1852 = vpop.f32.mrf.mxu0
        %1853 = vmatprep.mubr.bf16.mxu0 0
        %1854 = vmatmul.mubr.bf16.gmra.mxu0 %v1691
        %v1855 = vpop.f32.mrf.mxu0
        %v1856 = vadd.f32 0.0, %v1855
        %v1857 = vpop.f32.mrf.mxu0
        %v1858 = vpop.f32.mrf.mxu0
        %v1859 = vadd.f32 0.0, %v1858
        %v1860 = vpop.f32.mrf.mxu0
        %1861 = vmatprep.mubr.bf16.mxu0 0
        %1862 = vmatmul.mubr.bf16.gmra.mxu0 %v1692
        %v1863 = vpop.f32.mrf.mxu0
        %v1864 = vadd.f32 0.0, %v1863
        %v1865 = vpop.f32.mrf.mxu0
        %v1866 = vpop.f32.mrf.mxu0
        %v1867 = vadd.f32 0.0, %v1866
        %v1868 = vpop.f32.mrf.mxu0
        %1869 = vdwg.mxu0
        %v1870 = vadd.f32 %v1215, %v1792
        %v1871 = vadd.f32 %v1218, %v1795
        %v1872 = vadd.f32 %v1223, %v1800
        %v1873 = vadd.f32 %v1226, %v1803
        %v1874 = vadd.f32 %v1231, %v1808
        %v1875 = vadd.f32 %v1234, %v1811
        %v1876 = vadd.f32 %v1239, %v1816
        %v1877 = vadd.f32 %v1242, %v1819
        %v1878 = vadd.f32 %v1247, %v1824
        %v1879 = vadd.f32 %v1250, %v1827
        %v1880 = vadd.f32 %v1255, %v1832
        %v1881 = vadd.f32 %v1258, %v1835
        %v1882 = vadd.f32 %v1263, %v1840
        %v1883 = vadd.f32 %v1266, %v1843
        %v1884 = vadd.f32 %v1271, %v1848
        %v1885 = vadd.f32 %v1274, %v1851
        %v1886 = vadd.f32 %v1279, %v1856
        %v1887 = vadd.f32 %v1282, %v1859
        %v1888 = vadd.f32 %v1287, %v1864
        %v1889 = vadd.f32 %v1290, %v1867
        %v1890 = vld [vmem:[%s13] sm:$0x1]
        %v1892 = vlaneseq
        %v1893 = vshrl.u32 %v1892, 7
        %v1894 = vsub.s32 0, %v1893
        %v1895 = vrot.slane %v1890, %v1894
        %v1897 = vadd.f32 %v1870, %v1895
        %v1898 = vadd.f32 %v1871, %v1895
        %v1899 = vadd.f32 %v1872, %v1895
        %v1900 = vadd.f32 %v1873, %v1895
        %v1901 = vadd.f32 %v1874, %v1895
        %v1902 = vadd.f32 %v1875, %v1895
        %v1903 = vadd.f32 %v1876, %v1895
        %v1904 = vadd.f32 %v1877, %v1895
        %v1905 = vadd.f32 %v1878, %v1895
        %v1906 = vadd.f32 %v1879, %v1895
        %v1907 = vadd.f32 %v1880, %v1895
        %v1908 = vadd.f32 %v1881, %v1895
        %v1909 = vadd.f32 %v1882, %v1895
        %v1910 = vadd.f32 %v1883, %v1895
        %v1911 = vadd.f32 %v1884, %v1895
        %v1912 = vadd.f32 %v1885, %v1895
        %v1913 = vadd.f32 %v1886, %v1895
        %v1914 = vadd.f32 %v1887, %v1895
        %v1915 = vadd.f32 %v1888, %v1895
        %v1916 = vadd.f32 %v1889, %v1895
        %v1917 = vpack.c.bf16 %v1898, %v1897
        %v1918 = vpack.c.bf16 %v1900, %v1899
        %v1919 = vpack.c.bf16 %v1902, %v1901
        %v1920 = vpack.c.bf16 %v1904, %v1903
        %v1921 = vpack.c.bf16 %v1906, %v1905
        %v1922 = vpack.c.bf16 %v1908, %v1907
        %v1923 = vpack.c.bf16 %v1910, %v1909
        %v1924 = vpack.c.bf16 %v1912, %v1911
        %v1925 = vpack.c.bf16 %v1914, %v1913
        %v1926 = vpack.c.bf16 %v1916, %v1915
        %v1937 = vunpack.c.l.b16 %v1917
        %v1938 = vunpack.c.h.b16 %v1917
        %v1939 = vunpack.c.l.b16 %v1918
        %v1940 = vunpack.c.h.b16 %v1918
        %v1941 = vunpack.c.l.b16 %v1919
        %v1942 = vunpack.c.h.b16 %v1919
        %v1943 = vunpack.c.l.b16 %v1920
        %v1944 = vunpack.c.h.b16 %v1920
        %v1945 = vunpack.c.l.b16 %v1921
        %v1946 = vunpack.c.h.b16 %v1921
        %v1947 = vunpack.c.l.b16 %v1922
        %v1948 = vunpack.c.h.b16 %v1922
        %v1949 = vunpack.c.l.b16 %v1923
        %v1950 = vunpack.c.h.b16 %v1923
        %v1951 = vunpack.c.l.b16 %v1924
        %v1952 = vunpack.c.h.b16 %v1924
        %v1953 = vunpack.c.l.b16 %v1925
        %v1954 = vunpack.c.h.b16 %v1925
        %v1955 = vunpack.c.l.b16 %v1926
        %v1956 = vunpack.c.h.b16 %v1926
        %v1957 = vpack.c.b16 %v1937, %v1937
        %v1958 = vpack.c.b16 %v1938, %v1938
        %v1959 = vpack.c.b16 %v1939, %v1939
        %v1960 = vpack.c.b16 %v1940, %v1940
        %v1961 = vpack.c.b16 %v1941, %v1941
        %v1962 = vpack.c.b16 %v1942, %v1942
        %v1963 = vpack.c.b16 %v1943, %v1943
        %v1964 = vpack.c.b16 %v1944, %v1944
        %v1965 = vpack.c.b16 %v1945, %v1945
        %v1966 = vpack.c.b16 %v1946, %v1946
        %v1967 = vpack.c.b16 %v1947, %v1947
        %v1968 = vpack.c.b16 %v1948, %v1948
        %v1969 = vpack.c.b16 %v1949, %v1949
        %v1970 = vpack.c.b16 %v1950, %v1950
        %v1971 = vpack.c.b16 %v1951, %v1951
        %v1972 = vpack.c.b16 %v1952, %v1952
        %v1973 = vpack.c.b16 %v1953, %v1953
        %v1974 = vpack.c.b16 %v1954, %v1954
        %v1975 = vpack.c.b16 %v1955, %v1955
        %v1976 = vpack.c.b16 %v1956, %v1956
        %vm1997 = vcmask 60416
        %1998 = vst.msk [vmem:[%s497] sm:$0xf] %vm1997, %v1957
        %1999 = vst.msk [vmem:[%s497 + $0x4] sm:$0xf] %vm1997, %v1958
        %2000 = vst.msk [vmem:[%s497 + $0x8] sm:$0xf] %vm1997, %v1959
        %2001 = vst.msk [vmem:[%s497 + $0xc] sm:$0xf] %vm1997, %v1960
        %2002 = vst.msk [vmem:[%s497 + $0x10] sm:$0xf] %vm1997, %v1961
        %2003 = vst.msk [vmem:[%s497 + $0x14] sm:$0xf] %vm1997, %v1962
        %2004 = vst.msk [vmem:[%s497 + $0x18] sm:$0xf] %vm1997, %v1963
        %2005 = vst.msk [vmem:[%s497 + $0x1c] sm:$0xf] %vm1997, %v1964
        %2006 = vst.msk [vmem:[%s497 + $0x20] sm:$0xf] %vm1997, %v1965
        %2007 = vst.msk [vmem:[%s497 + $0x24] sm:$0xf] %vm1997, %v1966
        %2008 = vst.msk [vmem:[%s497 + $0x28] sm:$0xf] %vm1997, %v1967
        %2009 = vst.msk [vmem:[%s497 + $0x2c] sm:$0xf] %vm1997, %v1968
        %2010 = vst.msk [vmem:[%s497 + $0x30] sm:$0xf] %vm1997, %v1969
        %2011 = vst.msk [vmem:[%s497 + $0x34] sm:$0xf] %vm1997, %v1970
        %2012 = vst.msk [vmem:[%s497 + $0x38] sm:$0xf] %vm1997, %v1971
        %2013 = vst.msk [vmem:[%s497 + $0x3c] sm:$0xf] %vm1997, %v1972
        %2014 = vst.msk [vmem:[%s497 + $0x40] sm:$0xf] %vm1997, %v1973
        %2015 = vst.msk [vmem:[%s497 + $0x44] sm:$0xf] %vm1997, %v1974
        %2016 = vst.msk [vmem:[%s497 + $0x48] sm:$0xf] %vm1997, %v1975
        %2017 = vst.msk [vmem:[%s497 + $0x4c] sm:$0xf] %vm1997, %v1976
        %s2018 = sand.u32 %s337, 1
        %s2019 = sand.u32 %s337, 1
        %s2020 = smul.addr %s2019, 80
        %s2021 = scalar_lea.vmem [#allocation2], %s2020
        // Predicated region
        $region77: #{lpmlp_forward.1} parent=75 // pred_check
          %p2022 = pneg %p347
        $region78: #{lpmlp_forward.1} parent=75 // pred_check_branch
          %2024 = sbr.rel (%p2022) target = $region80
        $region79: #{lpmlp_forward.1} parent=75 // pred_region
          %s2025 = smul.u32 20, %s25
          %s2026 = ssub.s32 38, %s2025
          %p2027 = scmp.lt.s32.totalorder %s2026, 20
          %s2028 = scalar_select %p2027, %s2026, 20
          %s2029 = smul.u32 64, %s2028
          %p2030 = scmp.ne.s32.totalorder 0, %s2029
          %s2031 = smul.addr %s2025, 4
          %s2032 = scalar_lea.vmem %s14, %s2031
          // Predicated region
          $region81: #{lpmlp_forward.1} parent=79 // pred_check
            %p2033 = pneg %p2030
          $region82: #{lpmlp_forward.1} parent=79 // pred_check_branch
            %2035 = sbr.rel (%p2033) target = $region84
          $region83: #{lpmlp_forward.1} parent=79 // pred_region
            // Predicated region
            $region85: #{lpmlp_forward.1} parent=83 // pred_check
              _
            $region86: #{lpmlp_forward.1} parent=83 // pred_check_branch
              %2037 = sbr.rel target = $region88
            $region87: #{lpmlp_forward.1} parent=83 // pred_region
              // Predicated region
              $region107: #{lpmlp_forward.1} parent=87 // pred_check
                _
              $region108: #{lpmlp_forward.1} parent=87 // pred_check_branch
                %2126 = sbr.rel (0) target = $region110
              $region109: #{lpmlp_forward.1} parent=87 // pred_region
                %s2128 = ssub.s32 16, 1
                %s2129 = sdiv.u32.pop %s2028, 20
                %s2130 = srem.u32.pop %s2028, 20
                // While loop
                $region111: #{lpmlp_forward.1} parent=109 // loop_pre_header
                  _
                $region112: #{lpmlp_forward.1} parent=109 // loop_header
                  %s2132 = sphi 0, %s2134
                  %p2133 = scmp.ge.s32.totalorder %s2132, %s2129
                  %s2137 = sphi 0, %s2182
                  %s2138 = sphi %s2021, %s2185
                  %s2139 = sphi %s2032, %s2186
                $region113: #{lpmlp_forward.1} parent=109 // loop_header_branch
                  %2136 = sbr.rel (%p2133) target = $region117
                $region114: #{lpmlp_forward.1} parent=109 // loop_body
                  %v2140 = vld [vmem:[%s2138] sm:%s2128]
                  %2141 = vst [vmem:[%s2139] sm:%s2128] %v2140
                  %v2142 = vld [vmem:[%s2138 + $0x4] sm:%s2128]
                  %2143 = vst [vmem:[%s2139 + $0x4] sm:%s2128] %v2142
                  %v2144 = vld [vmem:[%s2138 + $0x8] sm:%s2128]
                  %2145 = vst [vmem:[%s2139 + $0x8] sm:%s2128] %v2144
                  %v2146 = vld [vmem:[%s2138 + $0xc] sm:%s2128]
                  %2147 = vst [vmem:[%s2139 + $0xc] sm:%s2128] %v2146
                  %v2148 = vld [vmem:[%s2138 + $0x10] sm:%s2128]
                  %2149 = vst [vmem:[%s2139 + $0x10] sm:%s2128] %v2148
                  %v2150 = vld [vmem:[%s2138 + $0x14] sm:%s2128]
                  %2151 = vst [vmem:[%s2139 + $0x14] sm:%s2128] %v2150
                  %v2152 = vld [vmem:[%s2138 + $0x18] sm:%s2128]
                  %2153 = vst [vmem:[%s2139 + $0x18] sm:%s2128] %v2152
                  %v2154 = vld [vmem:[%s2138 + $0x1c] sm:%s2128]
                  %2155 = vst [vmem:[%s2139 + $0x1c] sm:%s2128] %v2154
                  %v2156 = vld [vmem:[%s2138 + $0x20] sm:%s2128]
                  %2157 = vst [vmem:[%s2139 + $0x20] sm:%s2128] %v2156
                  %v2158 = vld [vmem:[%s2138 + $0x24] sm:%s2128]
                  %2159 = vst [vmem:[%s2139 + $0x24] sm:%s2128] %v2158
                  %v2160 = vld [vmem:[%s2138 + $0x28] sm:%s2128]
                  %2161 = vst [vmem:[%s2139 + $0x28] sm:%s2128] %v2160
                  %v2162 = vld [vmem:[%s2138 + $0x2c] sm:%s2128]
                  %2163 = vst [vmem:[%s2139 + $0x2c] sm:%s2128] %v2162
                  %v2164 = vld [vmem:[%s2138 + $0x30] sm:%s2128]
                  %2165 = vst [vmem:[%s2139 + $0x30] sm:%s2128] %v2164
                  %v2166 = vld [vmem:[%s2138 + $0x34] sm:%s2128]
                  %2167 = vst [vmem:[%s2139 + $0x34] sm:%s2128] %v2166
                  %v2168 = vld [vmem:[%s2138 + $0x38] sm:%s2128]
                  %2169 = vst [vmem:[%s2139 + $0x38] sm:%s2128] %v2168
                  %v2170 = vld [vmem:[%s2138 + $0x3c] sm:%s2128]
                  %2171 = vst [vmem:[%s2139 + $0x3c] sm:%s2128] %v2170
                  %v2172 = vld [vmem:[%s2138 + $0x40] sm:%s2128]
                  %2173 = vst [vmem:[%s2139 + $0x40] sm:%s2128] %v2172
                  %v2174 = vld [vmem:[%s2138 + $0x44] sm:%s2128]
                  %2175 = vst [vmem:[%s2139 + $0x44] sm:%s2128] %v2174
                  %v2176 = vld [vmem:[%s2138 + $0x48] sm:%s2128]
                  %2177 = vst [vmem:[%s2139 + $0x48] sm:%s2128] %v2176
                  %v2178 = vld [vmem:[%s2138 + $0x4c] sm:%s2128]
                  %2179 = vst [vmem:[%s2139 + $0x4c] sm:%s2128] %v2178
                  %s2180 = sadd.s32 1, %s2137
                  %p2181 = scmp.ge.s32.totalorder %s2180, %s2129
                  %s2182 = scalar_select %p2181, 0, %s2180
                  %s2183 = smul.u32 %s2182, 80
                  %s2184 = smul.u32 %s2182, 80
                  %s2185 = scalar_lea.vmem %s2021, %s2183 [#allocation2]
                  %s2186 = scalar_lea.vmem %s2032, %s2184
                $region115: #{lpmlp_forward.1} parent=109 // loop_footer
                  %s2134 = sadd.s32 %s2132, 1
                $region116: #{lpmlp_forward.1} parent=109 // loop_footer_branch
                  %2131 = sbr.rel target = $region112
                $region117: #{lpmlp_forward.1} parent=109 // loop_exit
                  _
                %s2187 = sdiv.u32.pop %s2028, 20
                %s2188 = srem.u32.pop %s2028, 20
                %s2189 = smul.u32 %s2187, 20
                %s2190 = smul.u32 4, %s2189
                %s2191 = scalar_lea.vmem %s2021, %s2190 [#allocation2]
                %s2192 = smul.u32 4, %s2189
                %s2193 = scalar_lea.vmem %s2032, %s2192
                // While loop
                $region118: #{lpmlp_forward.1} parent=109 // loop_pre_header
                  _
                $region119: #{lpmlp_forward.1} parent=109 // loop_header
                  %s2195 = sphi 0, %s2197
                  %p2196 = scmp.ge.s32.totalorder %s2195, %s2188
                  %s2200 = sphi 0, %s2207
                  %s2201 = sphi %s2191, %s2210
                  %s2202 = sphi %s2193, %s2211
                $region120: #{lpmlp_forward.1} parent=109 // loop_header_branch
                  %2199 = sbr.rel (%p2196) target = $region124
                $region121: #{lpmlp_forward.1} parent=109 // loop_body
                  %v2203 = vld [vmem:[%s2201] sm:%s2128]
                  %2204 = vst [vmem:[%s2202] sm:%s2128] %v2203
                  %s2205 = sadd.s32 1, %s2200
                  %p2206 = scmp.ge.s32.totalorder %s2205, %s2188
                  %s2207 = scalar_select %p2206, 0, %s2205
                  %s2208 = smul.u32 %s2207, 4
                  %s2209 = smul.u32 %s2207, 4
                  %s2210 = scalar_lea.vmem %s2191, %s2208 [#allocation2]
                  %s2211 = scalar_lea.vmem %s2193, %s2209
                $region122: #{lpmlp_forward.1} parent=109 // loop_footer
                  %s2197 = sadd.s32 %s2195, 1
                $region123: #{lpmlp_forward.1} parent=109 // loop_footer_branch
                  %2194 = sbr.rel target = $region119
                $region124: #{lpmlp_forward.1} parent=109 // loop_exit
                  _
              $region110: #{lpmlp_forward.1} parent=87 // pred_fallthru
                _
            $region88: #{lpmlp_forward.1} parent=83 // pred_fallthru
              _
            // Predicated region
            $region89: #{lpmlp_forward.1} parent=83 // pred_check
              _
            $region90: #{lpmlp_forward.1} parent=83 // pred_check_branch
              %2039 = sbr.rel (0) target = $region92
            $region91: #{lpmlp_forward.1} parent=83 // pred_region
              %s2041 = ssub.s32 16, 1
              %s2042 = sdiv.u32.pop %s2028, 20
              %s2043 = srem.u32.pop %s2028, 20
              // While loop
              $region93: #{lpmlp_forward.1} parent=91 // loop_pre_header
                _
              $region94: #{lpmlp_forward.1} parent=91 // loop_header
                %s2045 = sphi 0, %s2047
                %p2046 = scmp.ge.s32.totalorder %s2045, %s2042
                %s2050 = sphi 0, %s2095
                %s2051 = sphi %s2021, %s2098
                %s2052 = sphi %s2032, %s2099
              $region95: #{lpmlp_forward.1} parent=91 // loop_header_branch
                %2049 = sbr.rel (%p2046) target = $region99
              $region96: #{lpmlp_forward.1} parent=91 // loop_body
                %v2053 = vld [vmem:[%s2051] sm:%s2041]
                %2054 = vst [vmem:[%s2052] sm:%s2041] %v2053
                %v2055 = vld [vmem:[%s2051 + $0x4] sm:%s2041]
                %2056 = vst [vmem:[%s2052 + $0x4] sm:%s2041] %v2055
                %v2057 = vld [vmem:[%s2051 + $0x8] sm:%s2041]
                %2058 = vst [vmem:[%s2052 + $0x8] sm:%s2041] %v2057
                %v2059 = vld [vmem:[%s2051 + $0xc] sm:%s2041]
                %2060 = vst [vmem:[%s2052 + $0xc] sm:%s2041] %v2059
                %v2061 = vld [vmem:[%s2051 + $0x10] sm:%s2041]
                %2062 = vst [vmem:[%s2052 + $0x10] sm:%s2041] %v2061
                %v2063 = vld [vmem:[%s2051 + $0x14] sm:%s2041]
                %2064 = vst [vmem:[%s2052 + $0x14] sm:%s2041] %v2063
                %v2065 = vld [vmem:[%s2051 + $0x18] sm:%s2041]
                %2066 = vst [vmem:[%s2052 + $0x18] sm:%s2041] %v2065
                %v2067 = vld [vmem:[%s2051 + $0x1c] sm:%s2041]
                %2068 = vst [vmem:[%s2052 + $0x1c] sm:%s2041] %v2067
                %v2069 = vld [vmem:[%s2051 + $0x20] sm:%s2041]
                %2070 = vst [vmem:[%s2052 + $0x20] sm:%s2041] %v2069
                %v2071 = vld [vmem:[%s2051 + $0x24] sm:%s2041]
                %2072 = vst [vmem:[%s2052 + $0x24] sm:%s2041] %v2071
                %v2073 = vld [vmem:[%s2051 + $0x28] sm:%s2041]
                %2074 = vst [vmem:[%s2052 + $0x28] sm:%s2041] %v2073
                %v2075 = vld [vmem:[%s2051 + $0x2c] sm:%s2041]
                %2076 = vst [vmem:[%s2052 + $0x2c] sm:%s2041] %v2075
                %v2077 = vld [vmem:[%s2051 + $0x30] sm:%s2041]
                %2078 = vst [vmem:[%s2052 + $0x30] sm:%s2041] %v2077
                %v2079 = vld [vmem:[%s2051 + $0x34] sm:%s2041]
                %2080 = vst [vmem:[%s2052 + $0x34] sm:%s2041] %v2079
                %v2081 = vld [vmem:[%s2051 + $0x38] sm:%s2041]
                %2082 = vst [vmem:[%s2052 + $0x38] sm:%s2041] %v2081
                %v2083 = vld [vmem:[%s2051 + $0x3c] sm:%s2041]
                %2084 = vst [vmem:[%s2052 + $0x3c] sm:%s2041] %v2083
                %v2085 = vld [vmem:[%s2051 + $0x40] sm:%s2041]
                %2086 = vst [vmem:[%s2052 + $0x40] sm:%s2041] %v2085
                %v2087 = vld [vmem:[%s2051 + $0x44] sm:%s2041]
                %2088 = vst [vmem:[%s2052 + $0x44] sm:%s2041] %v2087
                %v2089 = vld [vmem:[%s2051 + $0x48] sm:%s2041]
                %2090 = vst [vmem:[%s2052 + $0x48] sm:%s2041] %v2089
                %v2091 = vld [vmem:[%s2051 + $0x4c] sm:%s2041]
                %2092 = vst [vmem:[%s2052 + $0x4c] sm:%s2041] %v2091
                %s2093 = sadd.s32 1, %s2050
                %p2094 = scmp.ge.s32.totalorder %s2093, %s2042
                %s2095 = scalar_select %p2094, 0, %s2093
                %s2096 = smul.u32 %s2095, 80
                %s2097 = smul.u32 %s2095, 80
                %s2098 = scalar_lea.vmem %s2021, %s2096 [#allocation2]
                %s2099 = scalar_lea.vmem %s2032, %s2097
              $region97: #{lpmlp_forward.1} parent=91 // loop_footer
                %s2047 = sadd.s32 %s2045, 1
              $region98: #{lpmlp_forward.1} parent=91 // loop_footer_branch
                %2044 = sbr.rel target = $region94
              $region99: #{lpmlp_forward.1} parent=91 // loop_exit
                _
              %s2100 = sdiv.u32.pop %s2028, 20
              %s2101 = srem.u32.pop %s2028, 20
              %s2102 = smul.u32 %s2100, 20
              %s2103 = smul.u32 4, %s2102
              %s2104 = scalar_lea.vmem %s2021, %s2103 [#allocation2]
              %s2105 = smul.u32 4, %s2102
              %s2106 = scalar_lea.vmem %s2032, %s2105
              // While loop
              $region100: #{lpmlp_forward.1} parent=91 // loop_pre_header
                _
              $region101: #{lpmlp_forward.1} parent=91 // loop_header
                %s2108 = sphi 0, %s2110
                %p2109 = scmp.ge.s32.totalorder %s2108, %s2101
                %s2113 = sphi 0, %s2120
                %s2114 = sphi %s2104, %s2123
                %s2115 = sphi %s2106, %s2124
              $region102: #{lpmlp_forward.1} parent=91 // loop_header_branch
                %2112 = sbr.rel (%p2109) target = $region106
              $region103: #{lpmlp_forward.1} parent=91 // loop_body
                %v2116 = vld [vmem:[%s2114] sm:%s2041]
                %2117 = vst [vmem:[%s2115] sm:%s2041] %v2116
                %s2118 = sadd.s32 1, %s2113
                %p2119 = scmp.ge.s32.totalorder %s2118, %s2101
                %s2120 = scalar_select %p2119, 0, %s2118
                %s2121 = smul.u32 %s2120, 4
                %s2122 = smul.u32 %s2120, 4
                %s2123 = scalar_lea.vmem %s2104, %s2121 [#allocation2]
                %s2124 = scalar_lea.vmem %s2106, %s2122
              $region104: #{lpmlp_forward.1} parent=91 // loop_footer
                %s2110 = sadd.s32 %s2108, 1
              $region105: #{lpmlp_forward.1} parent=91 // loop_footer_branch
                %2107 = sbr.rel target = $region101
              $region106: #{lpmlp_forward.1} parent=91 // loop_exit
                _
            $region92: #{lpmlp_forward.1} parent=83 // pred_fallthru
              _
          $region84: #{lpmlp_forward.1} parent=79 // pred_fallthru
            _
          %2212 = vnop
        $region80: #{lpmlp_forward.1} parent=75 // pred_fallthru
          _
      $region76: #{lpmlp_forward.1} parent=5 // pred_fallthru
        _
      %p2213 = scmp.le.s32.totalorder 2, %s20
      // Predicated region
      $region125: #{lpmlp_forward.1} parent=5 // pred_check
        %p2214 = pneg %p2213
      $region126: #{lpmlp_forward.1} parent=5 // pred_check_branch
        %2216 = sbr.rel (%p2214) target = $region128
      $region127: #{lpmlp_forward.1} parent=5 // pred_region
        %s2217 = ssub.s32 %s20, 2
        // Predicated region
        $region129: #{lpmlp_forward.1} parent=127 // pred_check
          %p2218 = pneg %p353
        $region130: #{lpmlp_forward.1} parent=127 // pred_check_branch
          %2220 = sbr.rel (%p2218) target = $region132
        $region131: #{lpmlp_forward.1} parent=127 // pred_region
          %s2221 = sand.u32 %s338, 1
          %s2222 = sand.u32 %s338, 1
          %s2223 = smul.addr %s2222, 80
          %s2224 = scalar_lea.vmem [#allocation2], %s2223
        $region132: #{lpmlp_forward.1} parent=127 // pred_fallthru
          _
      $region128: #{lpmlp_forward.1} parent=5 // pred_fallthru
        _
    $region6: #{lpmlp_forward.1} parent=1 // loop_footer
      %s24 = sadd.s32 1, %s20
    $region7: #{lpmlp_forward.1} parent=1 // loop_footer_branch
      %19 = sbr.rel target = $region3
    $region8: #{lpmlp_forward.1} parent=1 // loop_exit
      _

</llo_original>
